<compile_context>
chip_gen: v7x
topology: tpu7x:2x2x1
jax: 0.10.0
libtpu: 0.0.40
codegen_flags: <defaults>
</compile_context>

<pallas_src>
import functools

import jax
import jax.numpy as jnp
import numpy as np
from jax import lax
from jax.experimental import pallas as pl
from jax.experimental.pallas import tpu as pltpu

_INV_SQRT2 = 0.7071067811865476


def _erf(x):
    # Abramowitz & Stegun 7.1.26 (max abs error ~1.5e-7); only abs/div/exp/where,
    # all with guaranteed Mosaic lowerings (div/exp hit the EUP).
    a1, a2, a3, a4, a5 = (0.254829592, -0.284496736, 1.421413741,
                          -1.453152027, 1.061405429)
    p = 0.3275911
    ax = jnp.abs(x)
    t = 1.0 / (1.0 + p * ax)
    poly = ((((a5 * t + a4) * t + a3) * t + a2) * t + a1) * t
    e = 1.0 - poly * jnp.exp(-(ax * ax))
    return jnp.where(x < 0.0, -e, e)


def _gelu_exact(x):
    # nn.GELU() default (exact erf form).
    return 0.5 * x * (1.0 + _erf(x * _INV_SQRT2))


# ---------------------------------------------------------------------------
# Fused kernel: one batch element, channel-major flattened layout (C, H*W).
# ---------------------------------------------------------------------------
def _convnext_kernel(x_ref, dww_ref, dwb_ref, cmask_ref,
                     w1_ref, b1_ref, w2_ref, b2_ref,
                     o_ref, xpad_ref, *,
                     K, W, HW, OFF0, BASE, eps):
    C = dwb_ref.shape[0]
    L = xpad_ref.shape[1]
    TAIL = L - OFF0 - HW

    # ---- in-kernel spatial zero padding (flat layout, lane-aligned stores) ----
    xpad_ref[:, pl.ds(0, OFF0)] = jnp.zeros((C, OFF0), jnp.float32)
    xpad_ref[:, pl.ds(OFF0 + HW, TAIL)] = jnp.zeros((C, TAIL), jnp.float32)
    xpad_ref[:, pl.ds(OFF0, HW)] = x_ref[0]

    # ---- 7x7 depthwise conv: lane-dense shift-and-MAC stencil on the VPU ------
    # acc is (C, HW) = (32, 256): 8 dense vregs.  For tap (dy, dx) the window is a
    # static lane-offset slice of the padded scratch; rows that stepped out of [0, H)
    # read zeros from the pad, columns that wrapped are killed by the per-dx mask
    # (applied once per dx, after summing over dy).
    acc = jnp.zeros((C, HW), jnp.float32)
    for dx in range(K):
        part = jnp.zeros((C, HW), jnp.float32)
        for dy in range(K):
            tap = dww_ref[:, pl.ds(dy * K + dx, 1)]            # (C, 1)
            win = xpad_ref[:, pl.ds(BASE + dy * W + dx, HW)]   # (C, HW)
            part = part + tap * win
        acc = acc + part * cmask_ref[pl.ds(dx, 1), :]          # (1, HW) column mask
    y = acc + dwb_ref[...]                                      # (C, HW)

    # ---- InstanceNorm2d (no affine), one-pass stats, f32 ----------------------
    inv_hw = 1.0 / HW
    mean = jnp.sum(y, axis=-1, keepdims=True) * inv_hw          # (C, 1)
    ex2 = jnp.sum(y * y, axis=-1, keepdims=True) * inv_hw       # (C, 1)
    var = ex2 - mean * mean                                     # biased, like InstanceNorm2d
    yn = (y - mean) * lax.rsqrt(var + eps)

    # ---- 1x1 conv -> GELU -> 1x1 conv: bf16 MXU operands, f32 accumulation ----
    z = jnp.dot(w1_ref[...], yn.astype(jnp.bfloat16),
                preferred_element_type=jnp.float32) + b1_ref[...]   # (2C, HW)
    z = _gelu_exact(z)
    z = jnp.dot(w2_ref[...], z.astype(jnp.bfloat16),
                preferred_element_type=jnp.float32) + b2_ref[...]   # (C, HW)

    # ---- residual from the pre-dwconv input; lane-dense unmasked store --------
    o_ref[0] = x_ref[0] + z


def _col_masks(K, P, H, W):
    """(K, H*W) f32 masks: mask[dx, p] = 1 iff column (p % W) + dx - P is in [0, W)."""
    w_idx = np.arange(H * W) % W
    m = np.zeros((K, H * W), np.float32)
    for dx in range(K):
        ox = dx - P
        m[dx] = ((w_idx + ox >= 0) & (w_idx + ox < W)).astype(np.float32)
    return m


def convnext_block(x, dw_w, dw_b, pw1_w, pw1_b, pw2_w, pw2_b, *, eps=1e-5):
    """x: (B, C, H, W) f32.
    dw_w: (C, K, K), dw_b: (C,)        -- depthwise conv (torch (C,1,K,K) squeezed)
    pw1_w: (2C, C), pw1_b: (2C,)       -- pwconv1 (torch (2C,C,1,1) squeezed)
    pw2_w: (C, 2C), pw2_b: (C,)        -- pwconv2
    Returns (B, C, H, W) f32.
    """
    B, C, H, W = x.shape
    K = dw_w.shape[-1]
    P = K // 2
    HW = H * W
    Ce = pw1_w.shape[0]

    assert C % 8 == 0 and HW % 128 == 0, "demo kernel assumes 8|C and 128|H*W"

    # Flat-padded scratch geometry: interior starts at a lane-aligned offset OFF0,
    # tap (dy, dx) reads a length-HW window starting at BASE + dy*W + dx.
    pad_flat = P * W + P
    OFF0 = ((pad_flat + 127) // 128) * 128
    BASE = OFF0 - pad_flat
    L = ((OFF0 + HW + pad_flat + 127) // 128) * 128

    # Wrapper does only free reshapes / tiny weight casts -- no transpose, no pad.
    x_flat = x.astype(jnp.float32).reshape(B, C, HW)
    dww = dw_w.astype(jnp.float32).reshape(C, K * K)
    dwb = dw_b.astype(jnp.float32).reshape(C, 1)
    cmask = jnp.asarray(_col_masks(K, P, H, W))
    w1 = pw1_w.astype(jnp.bfloat16)
    b1 = pw1_b.astype(jnp.float32).reshape(Ce, 1)
    w2 = pw2_w.astype(jnp.bfloat16)
    b2 = pw2_b.astype(jnp.float32).reshape(C, 1)

    kernel = functools.partial(_convnext_kernel, K=K, W=W, HW=HW,
                               OFF0=OFF0, BASE=BASE, eps=float(eps))

    out = pl.pallas_call(
        kernel,
        out_shape=jax.ShapeDtypeStruct((B, C, HW), jnp.float32),
        grid=(B,),
        in_specs=[
            pl.BlockSpec((1, C, HW), lambda b: (b, 0, 0)),   # x (per batch element)
            pl.BlockSpec((C, K * K), lambda b: (0, 0)),      # dw weights (grid-invariant)
            pl.BlockSpec((C, 1), lambda b: (0, 0)),          # dw bias
            pl.BlockSpec((K, HW), lambda b: (0, 0)),         # column masks
            pl.BlockSpec((Ce, C), lambda b: (0, 0)),         # pwconv1 weight (bf16)
            pl.BlockSpec((Ce, 1), lambda b: (0, 0)),         # pwconv1 bias
            pl.BlockSpec((C, Ce), lambda b: (0, 0)),         # pwconv2 weight (bf16)
            pl.BlockSpec((C, 1), lambda b: (0, 0)),          # pwconv2 bias
        ],
        out_specs=pl.BlockSpec((1, C, HW), lambda b: (b, 0, 0)),
        scratch_shapes=[pltpu.VMEM((C, L), jnp.float32)],    # flat padded input
        compiler_params=pltpu.CompilerParams(dimension_semantics=("parallel",)),
    )(x_flat, dww, dwb, cmask, w1, b1, w2, b2)

    return out.reshape(B, C, H, W)


# ---------------------------------------------------------------------------
# Pure-JAX reference of the same forward pass (NCHW, like the PyTorch module).
# ---------------------------------------------------------------------------
def _reference(x, dw_w, dw_b, pw1_w, pw1_b, pw2_w, pw2_b, eps=1e-5):
    B, C, H, W = x.shape
    K = dw_w.shape[-1]
    P = K // 2
    y = jax.lax.conv_general_dilated(
        x, dw_w.reshape(C, 1, K, K),
        window_strides=(1, 1), padding=((P, P), (P, P)),
        dimension_numbers=("NCHW", "OIHW", "NCHW"),
        feature_group_count=C)
    y = y + dw_b[None, :, None, None]
    mean = jnp.mean(y, axis=(2, 3), keepdims=True)
    var = jnp.mean(jnp.square(y - mean), axis=(2, 3), keepdims=True)
    yn = (y - mean) * jax.lax.rsqrt(var + eps)
    z = jnp.einsum("oc,bchw->bohw", pw1_w, yn) + pw1_b[None, :, None, None]
    z = jax.nn.gelu(z, approximate=False)   # nn.GELU() default (exact erf)
    z = jnp.einsum("oc,bchw->bohw", pw2_w, z) + pw2_b[None, :, None, None]
    return x + z


if __name__ == "__main__":
    B, C, H, W = 2, 32, 16, 16
    K = 7
    key = jax.random.PRNGKey(0)
    ks = jax.random.split(key, 7)
    x = jax.random.normal(ks[0], (B, C, H, W), jnp.float32)
    dw_w = 0.05 * jax.random.normal(ks[1], (C, K, K), jnp.float32)
    dw_b = 0.05 * jax.random.normal(ks[2], (C,), jnp.float32)
    pw1_w = 0.05 * jax.random.normal(ks[3], (2 * C, C), jnp.float32)
    pw1_b = 0.05 * jax.random.normal(ks[4], (2 * C,), jnp.float32)
    pw2_w = 0.05 * jax.random.normal(ks[5], (C, 2 * C), jnp.float32)
    pw2_b = 0.05 * jax.random.normal(ks[6], (C,), jnp.float32)

    out = jax.jit(convnext_block)(x, dw_w, dw_b, pw1_w, pw1_b, pw2_w, pw2_b)
    out = jax.block_until_ready(out)

    ref = _reference(x, dw_w, dw_b, pw1_w, pw1_b, pw2_w, pw2_b)
    assert out.shape == (B, C, H, W) and out.dtype == jnp.float32
    # Tolerance covers the bf16 MXU operands; GELU itself is erf-exact to ~1.5e-7.
    np.testing.assert_allclose(np.asarray(out), np.asarray(ref), atol=2e-2, rtol=2e-2)

    print("KERNEL_OK")
</pallas_src>

<mosaic_0001>
module attributes {stable_mosaic.version = 11 : i64} {
  func.func @_convnext_kernel(%arg0: i32, %arg1: memref<1x32x256xf32, #tpu.memory_space<vmem>>, %arg2: memref<32x49xf32, #tpu.memory_space<vmem>>, %arg3: memref<32x1xf32, #tpu.memory_space<vmem>>, %arg4: memref<7x256xf32, #tpu.memory_space<vmem>>, %arg5: memref<64x32xbf16, #tpu.memory_space<vmem>>, %arg6: memref<64x1xf32, #tpu.memory_space<vmem>>, %arg7: memref<32x64xbf16, #tpu.memory_space<vmem>>, %arg8: memref<32x1xf32, #tpu.memory_space<vmem>>, %arg9: memref<1x32x256xf32, #tpu.memory_space<vmem>>, %arg10: memref<32x512xf32, #tpu.memory_space<vmem>>) attributes {dimension_semantics = [#tpu.dimension_semantics<parallel>], iteration_bounds = array<i64: 2>, scalar_prefetch = 0 : i64, scratch_operands = 1 : i64, tpu.core_type = #tpu.core_type<tc>, window_params = [{transform_indices = @transform_0, window_bounds = array<i64: 1, 32, 256>}, {pipeline_mode = #tpu.pipeline_mode<synchronous>, transform_indices = @transform_1, window_bounds = array<i64: 32, 49>}, {pipeline_mode = #tpu.pipeline_mode<synchronous>, transform_indices = @transform_2, window_bounds = array<i64: 32, 1>}, {pipeline_mode = #tpu.pipeline_mode<synchronous>, transform_indices = @transform_3, window_bounds = array<i64: 7, 256>}, {pipeline_mode = #tpu.pipeline_mode<synchronous>, transform_indices = @transform_4, window_bounds = array<i64: 64, 32>}, {pipeline_mode = #tpu.pipeline_mode<synchronous>, transform_indices = @transform_5, window_bounds = array<i64: 64, 1>}, {pipeline_mode = #tpu.pipeline_mode<synchronous>, transform_indices = @transform_6, window_bounds = array<i64: 32, 64>}, {pipeline_mode = #tpu.pipeline_mode<synchronous>, transform_indices = @transform_7, window_bounds = array<i64: 32, 1>}, {transform_indices = @transform_8, window_bounds = array<i64: 1, 32, 256>}]} {
    %cst = arith.constant 0.000000e+00 : f32
    %0 = vector.broadcast %cst : f32 to vector<32x128xf32>
    %c0 = arith.constant 0 : index
    %c0_0 = arith.constant 0 : index
    %1 = vector.load %arg10[%c0, %c0_0] : memref<32x512xf32, #tpu.memory_space<vmem>>, vector<32x128xf32>
    tpu.vector_store %arg10[%c0, %c0_0], %0 {strides = array<i32>} : memref<32x512xf32, #tpu.memory_space<vmem>>, vector<32x128xf32>,
    %cst_1 = arith.constant 0.000000e+00 : f32
    %2 = vector.broadcast %cst_1 : f32 to vector<32x128xf32>
    %c0_2 = arith.constant 0 : index
    %c384 = arith.constant 384 : index
    %3 = vector.load %arg10[%c0_2, %c384] : memref<32x512xf32, #tpu.memory_space<vmem>>, vector<32x128xf32>
    tpu.vector_store %arg10[%c0_2, %c384], %2 {strides = array<i32>} : memref<32x512xf32, #tpu.memory_space<vmem>>, vector<32x128xf32>,
    %c0_3 = arith.constant 0 : index
    %c0_4 = arith.constant 0 : index
    %c0_5 = arith.constant 0 : index
    %4 = vector.load %arg1[%c0_3, %c0_4, %c0_5] : memref<1x32x256xf32, #tpu.memory_space<vmem>>, vector<1x32x256xf32>
    %5 = vector.shape_cast %4 : vector<1x32x256xf32> to vector<32x256xf32>
    %c0_6 = arith.constant 0 : index
    %c128 = arith.constant 128 : index
    %6 = vector.load %arg10[%c0_6, %c128] : memref<32x512xf32, #tpu.memory_space<vmem>>, vector<32x256xf32>
    tpu.vector_store %arg10[%c0_6, %c128], %5 {strides = array<i32>} : memref<32x512xf32, #tpu.memory_space<vmem>>, vector<32x256xf32>,
    %cst_7 = arith.constant 0.000000e+00 : f32
    %7 = vector.broadcast %cst_7 : f32 to vector<32x256xf32>
    %cst_8 = arith.constant 0.000000e+00 : f32
    %8 = vector.broadcast %cst_8 : f32 to vector<32x256xf32>
    %c0_9 = arith.constant 0 : index
    %c0_10 = arith.constant 0 : index
    %9 = vector.load %arg2[%c0_9, %c0_10] : memref<32x49xf32, #tpu.memory_space<vmem>>, vector<32x1xf32>
    %c0_11 = arith.constant 0 : index
    %c77 = arith.constant 77 : index
    %10 = vector.load %arg10[%c0_11, %c77] : memref<32x512xf32, #tpu.memory_space<vmem>>, vector<32x256xf32>
    %11 = vector.broadcast %9 : vector<32x1xf32> to vector<32x256xf32>
    %12 = arith.mulf %11, %10 : vector<32x256xf32>
    %13 = arith.addf %8, %12 : vector<32x256xf32>
    %c0_12 = arith.constant 0 : index
    %c7 = arith.constant 7 : index
    %14 = vector.load %arg2[%c0_12, %c7] : memref<32x49xf32, #tpu.memory_space<vmem>>, vector<32x1xf32>
    %c0_13 = arith.constant 0 : index
    %c93 = arith.constant 93 : index
    %15 = vector.load %arg10[%c0_13, %c93] : memref<32x512xf32, #tpu.memory_space<vmem>>, vector<32x256xf32>
    %16 = vector.broadcast %14 : vector<32x1xf32> to vector<32x256xf32>
    %17 = arith.mulf %16, %15 : vector<32x256xf32>
    %18 = arith.addf %13, %17 : vector<32x256xf32>
    %c0_14 = arith.constant 0 : index
    %c14 = arith.constant 14 : index
    %19 = vector.load %arg2[%c0_14, %c14] : memref<32x49xf32, #tpu.memory_space<vmem>>, vector<32x1xf32>
    %c0_15 = arith.constant 0 : index
    %c109 = arith.constant 109 : index
    %20 = vector.load %arg10[%c0_15, %c109] : memref<32x512xf32, #tpu.memory_space<vmem>>, vector<32x256xf32>
    %21 = vector.broadcast %19 : vector<32x1xf32> to vector<32x256xf32>
    %22 = arith.mulf %21, %20 : vector<32x256xf32>
    %23 = arith.addf %18, %22 : vector<32x256xf32>
    %c0_16 = arith.constant 0 : index
    %c21 = arith.constant 21 : index
    %24 = vector.load %arg2[%c0_16, %c21] : memref<32x49xf32, #tpu.memory_space<vmem>>, vector<32x1xf32>
    %c0_17 = arith.constant 0 : index
    %c125 = arith.constant 125 : index
    %25 = vector.load %arg10[%c0_17, %c125] : memref<32x512xf32, #tpu.memory_space<vmem>>, vector<32x256xf32>
    %26 = vector.broadcast %24 : vector<32x1xf32> to vector<32x256xf32>
    %27 = arith.mulf %26, %25 : vector<32x256xf32>
    %28 = arith.addf %23, %27 : vector<32x256xf32>
    %c0_18 = arith.constant 0 : index
    %c28 = arith.constant 28 : index
    %29 = vector.load %arg2[%c0_18, %c28] : memref<32x49xf32, #tpu.memory_space<vmem>>, vector<32x1xf32>
    %c0_19 = arith.constant 0 : index
    %c141 = arith.constant 141 : index
    %30 = vector.load %arg10[%c0_19, %c141] : memref<32x512xf32, #tpu.memory_space<vmem>>, vector<32x256xf32>
    %31 = vector.broadcast %29 : vector<32x1xf32> to vector<32x256xf32>
    %32 = arith.mulf %31, %30 : vector<32x256xf32>
    %33 = arith.addf %28, %32 : vector<32x256xf32>
    %c0_20 = arith.constant 0 : index
    %c35 = arith.constant 35 : index
    %34 = vector.load %arg2[%c0_20, %c35] : memref<32x49xf32, #tpu.memory_space<vmem>>, vector<32x1xf32>
    %c0_21 = arith.constant 0 : index
    %c157 = arith.constant 157 : index
    %35 = vector.load %arg10[%c0_21, %c157] : memref<32x512xf32, #tpu.memory_space<vmem>>, vector<32x256xf32>
    %36 = vector.broadcast %34 : vector<32x1xf32> to vector<32x256xf32>
    %37 = arith.mulf %36, %35 : vector<32x256xf32>
    %38 = arith.addf %33, %37 : vector<32x256xf32>
    %c0_22 = arith.constant 0 : index
    %c42 = arith.constant 42 : index
    %39 = vector.load %arg2[%c0_22, %c42] : memref<32x49xf32, #tpu.memory_space<vmem>>, vector<32x1xf32>
    %c0_23 = arith.constant 0 : index
    %c173 = arith.constant 173 : index
    %40 = vector.load %arg10[%c0_23, %c173] : memref<32x512xf32, #tpu.memory_space<vmem>>, vector<32x256xf32>
    %41 = vector.broadcast %39 : vector<32x1xf32> to vector<32x256xf32>
    %42 = arith.mulf %41, %40 : vector<32x256xf32>
    %43 = arith.addf %38, %42 : vector<32x256xf32>
    %c0_24 = arith.constant 0 : index
    %c0_25 = arith.constant 0 : index
    %44 = vector.load %arg4[%c0_24, %c0_25] : memref<7x256xf32, #tpu.memory_space<vmem>>, vector<1x256xf32>
    %45 = vector.broadcast %44 : vector<1x256xf32> to vector<32x256xf32>
    %46 = arith.mulf %43, %45 : vector<32x256xf32>
    %47 = arith.addf %7, %46 : vector<32x256xf32>
    %cst_26 = arith.constant 0.000000e+00 : f32
    %48 = vector.broadcast %cst_26 : f32 to vector<32x256xf32>
    %c0_27 = arith.constant 0 : index
    %c1 = arith.constant 1 : index
    %49 = vector.load %arg2[%c0_27, %c1] : memref<32x49xf32, #tpu.memory_space<vmem>>, vector<32x1xf32>
    %c0_28 = arith.constant 0 : index
    %c78 = arith.constant 78 : index
    %50 = vector.load %arg10[%c0_28, %c78] : memref<32x512xf32, #tpu.memory_space<vmem>>, vector<32x256xf32>
    %51 = vector.broadcast %49 : vector<32x1xf32> to vector<32x256xf32>
    %52 = arith.mulf %51, %50 : vector<32x256xf32>
    %53 = arith.addf %48, %52 : vector<32x256xf32>
    %c0_29 = arith.constant 0 : index
    %c8 = arith.constant 8 : index
    %54 = vector.load %arg2[%c0_29, %c8] : memref<32x49xf32, #tpu.memory_space<vmem>>, vector<32x1xf32>
    %c0_30 = arith.constant 0 : index
    %c94 = arith.constant 94 : index
    %55 = vector.load %arg10[%c0_30, %c94] : memref<32x512xf32, #tpu.memory_space<vmem>>, vector<32x256xf32>
    %56 = vector.broadcast %54 : vector<32x1xf32> to vector<32x256xf32>
    %57 = arith.mulf %56, %55 : vector<32x256xf32>
    %58 = arith.addf %53, %57 : vector<32x256xf32>
    %c0_31 = arith.constant 0 : index
    %c15 = arith.constant 15 : index
    %59 = vector.load %arg2[%c0_31, %c15] : memref<32x49xf32, #tpu.memory_space<vmem>>, vector<32x1xf32>
    %c0_32 = arith.constant 0 : index
    %c110 = arith.constant 110 : index
    %60 = vector.load %arg10[%c0_32, %c110] : memref<32x512xf32, #tpu.memory_space<vmem>>, vector<32x256xf32>
    %61 = vector.broadcast %59 : vector<32x1xf32> to vector<32x256xf32>
    %62 = arith.mulf %61, %60 : vector<32x256xf32>
    %63 = arith.addf %58, %62 : vector<32x256xf32>
    %c0_33 = arith.constant 0 : index
    %c22 = arith.constant 22 : index
    %64 = vector.load %arg2[%c0_33, %c22] : memref<32x49xf32, #tpu.memory_space<vmem>>, vector<32x1xf32>
    %c0_34 = arith.constant 0 : index
    %c126 = arith.constant 126 : index
    %65 = vector.load %arg10[%c0_34, %c126] : memref<32x512xf32, #tpu.memory_space<vmem>>, vector<32x256xf32>
    %66 = vector.broadcast %64 : vector<32x1xf32> to vector<32x256xf32>
    %67 = arith.mulf %66, %65 : vector<32x256xf32>
    %68 = arith.addf %63, %67 : vector<32x256xf32>
    %c0_35 = arith.constant 0 : index
    %c29 = arith.constant 29 : index
    %69 = vector.load %arg2[%c0_35, %c29] : memref<32x49xf32, #tpu.memory_space<vmem>>, vector<32x1xf32>
    %c0_36 = arith.constant 0 : index
    %c142 = arith.constant 142 : index
    %70 = vector.load %arg10[%c0_36, %c142] : memref<32x512xf32, #tpu.memory_space<vmem>>, vector<32x256xf32>
    %71 = vector.broadcast %69 : vector<32x1xf32> to vector<32x256xf32>
    %72 = arith.mulf %71, %70 : vector<32x256xf32>
    %73 = arith.addf %68, %72 : vector<32x256xf32>
    %c0_37 = arith.constant 0 : index
    %c36 = arith.constant 36 : index
    %74 = vector.load %arg2[%c0_37, %c36] : memref<32x49xf32, #tpu.memory_space<vmem>>, vector<32x1xf32>
    %c0_38 = arith.constant 0 : index
    %c158 = arith.constant 158 : index
    %75 = vector.load %arg10[%c0_38, %c158] : memref<32x512xf32, #tpu.memory_space<vmem>>, vector<32x256xf32>
    %76 = vector.broadcast %74 : vector<32x1xf32> to vector<32x256xf32>
    %77 = arith.mulf %76, %75 : vector<32x256xf32>
    %78 = arith.addf %73, %77 : vector<32x256xf32>
    %c0_39 = arith.constant 0 : index
    %c43 = arith.constant 43 : index
    %79 = vector.load %arg2[%c0_39, %c43] : memref<32x49xf32, #tpu.memory_space<vmem>>, vector<32x1xf32>
    %c0_40 = arith.constant 0 : index
    %c174 = arith.constant 174 : index
    %80 = vector.load %arg10[%c0_40, %c174] : memref<32x512xf32, #tpu.memory_space<vmem>>, vector<32x256xf32>
    %81 = vector.broadcast %79 : vector<32x1xf32> to vector<32x256xf32>
    %82 = arith.mulf %81, %80 : vector<32x256xf32>
    %83 = arith.addf %78, %82 : vector<32x256xf32>
    %c1_41 = arith.constant 1 : index
    %c0_42 = arith.constant 0 : index
    %84 = vector.load %arg4[%c1_41, %c0_42] : memref<7x256xf32, #tpu.memory_space<vmem>>, vector<1x256xf32>
    %85 = vector.broadcast %84 : vector<1x256xf32> to vector<32x256xf32>
    %86 = arith.mulf %83, %85 : vector<32x256xf32>
    %87 = arith.addf %47, %86 : vector<32x256xf32>
    %cst_43 = arith.constant 0.000000e+00 : f32
    %88 = vector.broadcast %cst_43 : f32 to vector<32x256xf32>
    %c0_44 = arith.constant 0 : index
    %c2 = arith.constant 2 : index
    %89 = vector.load %arg2[%c0_44, %c2] : memref<32x49xf32, #tpu.memory_space<vmem>>, vector<32x1xf32>
    %c0_45 = arith.constant 0 : index
    %c79 = arith.constant 79 : index
    %90 = vector.load %arg10[%c0_45, %c79] : memref<32x512xf32, #tpu.memory_space<vmem>>, vector<32x256xf32>
    %91 = vector.broadcast %89 : vector<32x1xf32> to vector<32x256xf32>
    %92 = arith.mulf %91, %90 : vector<32x256xf32>
    %93 = arith.addf %88, %92 : vector<32x256xf32>
    %c0_46 = arith.constant 0 : index
    %c9 = arith.constant 9 : index
    %94 = vector.load %arg2[%c0_46, %c9] : memref<32x49xf32, #tpu.memory_space<vmem>>, vector<32x1xf32>
    %c0_47 = arith.constant 0 : index
    %c95 = arith.constant 95 : index
    %95 = vector.load %arg10[%c0_47, %c95] : memref<32x512xf32, #tpu.memory_space<vmem>>, vector<32x256xf32>
    %96 = vector.broadcast %94 : vector<32x1xf32> to vector<32x256xf32>
    %97 = arith.mulf %96, %95 : vector<32x256xf32>
    %98 = arith.addf %93, %97 : vector<32x256xf32>
    %c0_48 = arith.constant 0 : index
    %c16 = arith.constant 16 : index
    %99 = vector.load %arg2[%c0_48, %c16] : memref<32x49xf32, #tpu.memory_space<vmem>>, vector<32x1xf32>
    %c0_49 = arith.constant 0 : index
    %c111 = arith.constant 111 : index
    %100 = vector.load %arg10[%c0_49, %c111] : memref<32x512xf32, #tpu.memory_space<vmem>>, vector<32x256xf32>
    %101 = vector.broadcast %99 : vector<32x1xf32> to vector<32x256xf32>
    %102 = arith.mulf %101, %100 : vector<32x256xf32>
    %103 = arith.addf %98, %102 : vector<32x256xf32>
    %c0_50 = arith.constant 0 : index
    %c23 = arith.constant 23 : index
    %104 = vector.load %arg2[%c0_50, %c23] : memref<32x49xf32, #tpu.memory_space<vmem>>, vector<32x1xf32>
    %c0_51 = arith.constant 0 : index
    %c127 = arith.constant 127 : index
    %105 = vector.load %arg10[%c0_51, %c127] : memref<32x512xf32, #tpu.memory_space<vmem>>, vector<32x256xf32>
    %106 = vector.broadcast %104 : vector<32x1xf32> to vector<32x256xf32>
    %107 = arith.mulf %106, %105 : vector<32x256xf32>
    %108 = arith.addf %103, %107 : vector<32x256xf32>
    %c0_52 = arith.constant 0 : index
    %c30 = arith.constant 30 : index
    %109 = vector.load %arg2[%c0_52, %c30] : memref<32x49xf32, #tpu.memory_space<vmem>>, vector<32x1xf32>
    %c0_53 = arith.constant 0 : index
    %c143 = arith.constant 143 : index
    %110 = vector.load %arg10[%c0_53, %c143] : memref<32x512xf32, #tpu.memory_space<vmem>>, vector<32x256xf32>
    %111 = vector.broadcast %109 : vector<32x1xf32> to vector<32x256xf32>
    %112 = arith.mulf %111, %110 : vector<32x256xf32>
    %113 = arith.addf %108, %112 : vector<32x256xf32>
    %c0_54 = arith.constant 0 : index
    %c37 = arith.constant 37 : index
    %114 = vector.load %arg2[%c0_54, %c37] : memref<32x49xf32, #tpu.memory_space<vmem>>, vector<32x1xf32>
    %c0_55 = arith.constant 0 : index
    %c159 = arith.constant 159 : index
    %115 = vector.load %arg10[%c0_55, %c159] : memref<32x512xf32, #tpu.memory_space<vmem>>, vector<32x256xf32>
    %116 = vector.broadcast %114 : vector<32x1xf32> to vector<32x256xf32>
    %117 = arith.mulf %116, %115 : vector<32x256xf32>
    %118 = arith.addf %113, %117 : vector<32x256xf32>
    %c0_56 = arith.constant 0 : index
    %c44 = arith.constant 44 : index
    %119 = vector.load %arg2[%c0_56, %c44] : memref<32x49xf32, #tpu.memory_space<vmem>>, vector<32x1xf32>
    %c0_57 = arith.constant 0 : index
    %c175 = arith.constant 175 : index
    %120 = vector.load %arg10[%c0_57, %c175] : memref<32x512xf32, #tpu.memory_space<vmem>>, vector<32x256xf32>
    %121 = vector.broadcast %119 : vector<32x1xf32> to vector<32x256xf32>
    %122 = arith.mulf %121, %120 : vector<32x256xf32>
    %123 = arith.addf %118, %122 : vector<32x256xf32>
    %c2_58 = arith.constant 2 : index
    %c0_59 = arith.constant 0 : index
    %124 = vector.load %arg4[%c2_58, %c0_59] : memref<7x256xf32, #tpu.memory_space<vmem>>, vector<1x256xf32>
    %125 = vector.broadcast %124 : vector<1x256xf32> to vector<32x256xf32>
    %126 = arith.mulf %123, %125 : vector<32x256xf32>
    %127 = arith.addf %87, %126 : vector<32x256xf32>
    %cst_60 = arith.constant 0.000000e+00 : f32
    %128 = vector.broadcast %cst_60 : f32 to vector<32x256xf32>
    %c0_61 = arith.constant 0 : index
    %c3 = arith.constant 3 : index
    %129 = vector.load %arg2[%c0_61, %c3] : memref<32x49xf32, #tpu.memory_space<vmem>>, vector<32x1xf32>
    %c0_62 = arith.constant 0 : index
    %c80 = arith.constant 80 : index
    %130 = vector.load %arg10[%c0_62, %c80] : memref<32x512xf32, #tpu.memory_space<vmem>>, vector<32x256xf32>
    %131 = vector.broadcast %129 : vector<32x1xf32> to vector<32x256xf32>
    %132 = arith.mulf %131, %130 : vector<32x256xf32>
    %133 = arith.addf %128, %132 : vector<32x256xf32>
    %c0_63 = arith.constant 0 : index
    %c10 = arith.constant 10 : index
    %134 = vector.load %arg2[%c0_63, %c10] : memref<32x49xf32, #tpu.memory_space<vmem>>, vector<32x1xf32>
    %c0_64 = arith.constant 0 : index
    %c96 = arith.constant 96 : index
    %135 = vector.load %arg10[%c0_64, %c96] : memref<32x512xf32, #tpu.memory_space<vmem>>, vector<32x256xf32>
    %136 = vector.broadcast %134 : vector<32x1xf32> to vector<32x256xf32>
    %137 = arith.mulf %136, %135 : vector<32x256xf32>
    %138 = arith.addf %133, %137 : vector<32x256xf32>
    %c0_65 = arith.constant 0 : index
    %c17 = arith.constant 17 : index
    %139 = vector.load %arg2[%c0_65, %c17] : memref<32x49xf32, #tpu.memory_space<vmem>>, vector<32x1xf32>
    %c0_66 = arith.constant 0 : index
    %c112 = arith.constant 112 : index
    %140 = vector.load %arg10[%c0_66, %c112] : memref<32x512xf32, #tpu.memory_space<vmem>>, vector<32x256xf32>
    %141 = vector.broadcast %139 : vector<32x1xf32> to vector<32x256xf32>
    %142 = arith.mulf %141, %140 : vector<32x256xf32>
    %143 = arith.addf %138, %142 : vector<32x256xf32>
    %c0_67 = arith.constant 0 : index
    %c24 = arith.constant 24 : index
    %144 = vector.load %arg2[%c0_67, %c24] : memref<32x49xf32, #tpu.memory_space<vmem>>, vector<32x1xf32>
    %c0_68 = arith.constant 0 : index
    %c128_69 = arith.constant 128 : index
    %145 = vector.load %arg10[%c0_68, %c128_69] : memref<32x512xf32, #tpu.memory_space<vmem>>, vector<32x256xf32>
    %146 = vector.broadcast %144 : vector<32x1xf32> to vector<32x256xf32>
    %147 = arith.mulf %146, %145 : vector<32x256xf32>
    %148 = arith.addf %143, %147 : vector<32x256xf32>
    %c0_70 = arith.constant 0 : index
    %c31 = arith.constant 31 : index
    %149 = vector.load %arg2[%c0_70, %c31] : memref<32x49xf32, #tpu.memory_space<vmem>>, vector<32x1xf32>
    %c0_71 = arith.constant 0 : index
    %c144 = arith.constant 144 : index
    %150 = vector.load %arg10[%c0_71, %c144] : memref<32x512xf32, #tpu.memory_space<vmem>>, vector<32x256xf32>
    %151 = vector.broadcast %149 : vector<32x1xf32> to vector<32x256xf32>
    %152 = arith.mulf %151, %150 : vector<32x256xf32>
    %153 = arith.addf %148, %152 : vector<32x256xf32>
    %c0_72 = arith.constant 0 : index
    %c38 = arith.constant 38 : index
    %154 = vector.load %arg2[%c0_72, %c38] : memref<32x49xf32, #tpu.memory_space<vmem>>, vector<32x1xf32>
    %c0_73 = arith.constant 0 : index
    %c160 = arith.constant 160 : index
    %155 = vector.load %arg10[%c0_73, %c160] : memref<32x512xf32, #tpu.memory_space<vmem>>, vector<32x256xf32>
    %156 = vector.broadcast %154 : vector<32x1xf32> to vector<32x256xf32>
    %157 = arith.mulf %156, %155 : vector<32x256xf32>
    %158 = arith.addf %153, %157 : vector<32x256xf32>
    %c0_74 = arith.constant 0 : index
    %c45 = arith.constant 45 : index
    %159 = vector.load %arg2[%c0_74, %c45] : memref<32x49xf32, #tpu.memory_space<vmem>>, vector<32x1xf32>
    %c0_75 = arith.constant 0 : index
    %c176 = arith.constant 176 : index
    %160 = vector.load %arg10[%c0_75, %c176] : memref<32x512xf32, #tpu.memory_space<vmem>>, vector<32x256xf32>
    %161 = vector.broadcast %159 : vector<32x1xf32> to vector<32x256xf32>
    %162 = arith.mulf %161, %160 : vector<32x256xf32>
    %163 = arith.addf %158, %162 : vector<32x256xf32>
    %c3_76 = arith.constant 3 : index
    %c0_77 = arith.constant 0 : index
    %164 = vector.load %arg4[%c3_76, %c0_77] : memref<7x256xf32, #tpu.memory_space<vmem>>, vector<1x256xf32>
    %165 = vector.broadcast %164 : vector<1x256xf32> to vector<32x256xf32>
    %166 = arith.mulf %163, %165 : vector<32x256xf32>
    %167 = arith.addf %127, %166 : vector<32x256xf32>
    %cst_78 = arith.constant 0.000000e+00 : f32
    %168 = vector.broadcast %cst_78 : f32 to vector<32x256xf32>
    %c0_79 = arith.constant 0 : index
    %c4 = arith.constant 4 : index
    %169 = vector.load %arg2[%c0_79, %c4] : memref<32x49xf32, #tpu.memory_space<vmem>>, vector<32x1xf32>
    %c0_80 = arith.constant 0 : index
    %c81 = arith.constant 81 : index
    %170 = vector.load %arg10[%c0_80, %c81] : memref<32x512xf32, #tpu.memory_space<vmem>>, vector<32x256xf32>
    %171 = vector.broadcast %169 : vector<32x1xf32> to vector<32x256xf32>
    %172 = arith.mulf %171, %170 : vector<32x256xf32>
    %173 = arith.addf %168, %172 : vector<32x256xf32>
    %c0_81 = arith.constant 0 : index
    %c11 = arith.constant 11 : index
    %174 = vector.load %arg2[%c0_81, %c11] : memref<32x49xf32, #tpu.memory_space<vmem>>, vector<32x1xf32>
    %c0_82 = arith.constant 0 : index
    %c97 = arith.constant 97 : index
    %175 = vector.load %arg10[%c0_82, %c97] : memref<32x512xf32, #tpu.memory_space<vmem>>, vector<32x256xf32>
    %176 = vector.broadcast %174 : vector<32x1xf32> to vector<32x256xf32>
    %177 = arith.mulf %176, %175 : vector<32x256xf32>
    %178 = arith.addf %173, %177 : vector<32x256xf32>
    %c0_83 = arith.constant 0 : index
    %c18 = arith.constant 18 : index
    %179 = vector.load %arg2[%c0_83, %c18] : memref<32x49xf32, #tpu.memory_space<vmem>>, vector<32x1xf32>
    %c0_84 = arith.constant 0 : index
    %c113 = arith.constant 113 : index
    %180 = vector.load %arg10[%c0_84, %c113] : memref<32x512xf32, #tpu.memory_space<vmem>>, vector<32x256xf32>
    %181 = vector.broadcast %179 : vector<32x1xf32> to vector<32x256xf32>
    %182 = arith.mulf %181, %180 : vector<32x256xf32>
    %183 = arith.addf %178, %182 : vector<32x256xf32>
    %c0_85 = arith.constant 0 : index
    %c25 = arith.constant 25 : index
    %184 = vector.load %arg2[%c0_85, %c25] : memref<32x49xf32, #tpu.memory_space<vmem>>, vector<32x1xf32>
    %c0_86 = arith.constant 0 : index
    %c129 = arith.constant 129 : index
    %185 = vector.load %arg10[%c0_86, %c129] : memref<32x512xf32, #tpu.memory_space<vmem>>, vector<32x256xf32>
    %186 = vector.broadcast %184 : vector<32x1xf32> to vector<32x256xf32>
    %187 = arith.mulf %186, %185 : vector<32x256xf32>
    %188 = arith.addf %183, %187 : vector<32x256xf32>
    %c0_87 = arith.constant 0 : index
    %c32 = arith.constant 32 : index
    %189 = vector.load %arg2[%c0_87, %c32] : memref<32x49xf32, #tpu.memory_space<vmem>>, vector<32x1xf32>
    %c0_88 = arith.constant 0 : index
    %c145 = arith.constant 145 : index
    %190 = vector.load %arg10[%c0_88, %c145] : memref<32x512xf32, #tpu.memory_space<vmem>>, vector<32x256xf32>
    %191 = vector.broadcast %189 : vector<32x1xf32> to vector<32x256xf32>
    %192 = arith.mulf %191, %190 : vector<32x256xf32>
    %193 = arith.addf %188, %192 : vector<32x256xf32>
    %c0_89 = arith.constant 0 : index
    %c39 = arith.constant 39 : index
    %194 = vector.load %arg2[%c0_89, %c39] : memref<32x49xf32, #tpu.memory_space<vmem>>, vector<32x1xf32>
    %c0_90 = arith.constant 0 : index
    %c161 = arith.constant 161 : index
    %195 = vector.load %arg10[%c0_90, %c161] : memref<32x512xf32, #tpu.memory_space<vmem>>, vector<32x256xf32>
    %196 = vector.broadcast %194 : vector<32x1xf32> to vector<32x256xf32>
    %197 = arith.mulf %196, %195 : vector<32x256xf32>
    %198 = arith.addf %193, %197 : vector<32x256xf32>
    %c0_91 = arith.constant 0 : index
    %c46 = arith.constant 46 : index
    %199 = vector.load %arg2[%c0_91, %c46] : memref<32x49xf32, #tpu.memory_space<vmem>>, vector<32x1xf32>
    %c0_92 = arith.constant 0 : index
    %c177 = arith.constant 177 : index
    %200 = vector.load %arg10[%c0_92, %c177] : memref<32x512xf32, #tpu.memory_space<vmem>>, vector<32x256xf32>
    %201 = vector.broadcast %199 : vector<32x1xf32> to vector<32x256xf32>
    %202 = arith.mulf %201, %200 : vector<32x256xf32>
    %203 = arith.addf %198, %202 : vector<32x256xf32>
    %c4_93 = arith.constant 4 : index
    %c0_94 = arith.constant 0 : index
    %204 = vector.load %arg4[%c4_93, %c0_94] : memref<7x256xf32, #tpu.memory_space<vmem>>, vector<1x256xf32>
    %205 = vector.broadcast %204 : vector<1x256xf32> to vector<32x256xf32>
    %206 = arith.mulf %203, %205 : vector<32x256xf32>
    %207 = arith.addf %167, %206 : vector<32x256xf32>
    %cst_95 = arith.constant 0.000000e+00 : f32
    %208 = vector.broadcast %cst_95 : f32 to vector<32x256xf32>
    %c0_96 = arith.constant 0 : index
    %c5 = arith.constant 5 : index
    %209 = vector.load %arg2[%c0_96, %c5] : memref<32x49xf32, #tpu.memory_space<vmem>>, vector<32x1xf32>
    %c0_97 = arith.constant 0 : index
    %c82 = arith.constant 82 : index
    %210 = vector.load %arg10[%c0_97, %c82] : memref<32x512xf32, #tpu.memory_space<vmem>>, vector<32x256xf32>
    %211 = vector.broadcast %209 : vector<32x1xf32> to vector<32x256xf32>
    %212 = arith.mulf %211, %210 : vector<32x256xf32>
    %213 = arith.addf %208, %212 : vector<32x256xf32>
    %c0_98 = arith.constant 0 : index
    %c12 = arith.constant 12 : index
    %214 = vector.load %arg2[%c0_98, %c12] : memref<32x49xf32, #tpu.memory_space<vmem>>, vector<32x1xf32>
    %c0_99 = arith.constant 0 : index
    %c98 = arith.constant 98 : index
    %215 = vector.load %arg10[%c0_99, %c98] : memref<32x512xf32, #tpu.memory_space<vmem>>, vector<32x256xf32>
    %216 = vector.broadcast %214 : vector<32x1xf32> to vector<32x256xf32>
    %217 = arith.mulf %216, %215 : vector<32x256xf32>
    %218 = arith.addf %213, %217 : vector<32x256xf32>
    %c0_100 = arith.constant 0 : index
    %c19 = arith.constant 19 : index
    %219 = vector.load %arg2[%c0_100, %c19] : memref<32x49xf32, #tpu.memory_space<vmem>>, vector<32x1xf32>
    %c0_101 = arith.constant 0 : index
    %c114 = arith.constant 114 : index
    %220 = vector.load %arg10[%c0_101, %c114] : memref<32x512xf32, #tpu.memory_space<vmem>>, vector<32x256xf32>
    %221 = vector.broadcast %219 : vector<32x1xf32> to vector<32x256xf32>
    %222 = arith.mulf %221, %220 : vector<32x256xf32>
    %223 = arith.addf %218, %222 : vector<32x256xf32>
    %c0_102 = arith.constant 0 : index
    %c26 = arith.constant 26 : index
    %224 = vector.load %arg2[%c0_102, %c26] : memref<32x49xf32, #tpu.memory_space<vmem>>, vector<32x1xf32>
    %c0_103 = arith.constant 0 : index
    %c130 = arith.constant 130 : index
    %225 = vector.load %arg10[%c0_103, %c130] : memref<32x512xf32, #tpu.memory_space<vmem>>, vector<32x256xf32>
    %226 = vector.broadcast %224 : vector<32x1xf32> to vector<32x256xf32>
    %227 = arith.mulf %226, %225 : vector<32x256xf32>
    %228 = arith.addf %223, %227 : vector<32x256xf32>
    %c0_104 = arith.constant 0 : index
    %c33 = arith.constant 33 : index
    %229 = vector.load %arg2[%c0_104, %c33] : memref<32x49xf32, #tpu.memory_space<vmem>>, vector<32x1xf32>
    %c0_105 = arith.constant 0 : index
    %c146 = arith.constant 146 : index
    %230 = vector.load %arg10[%c0_105, %c146] : memref<32x512xf32, #tpu.memory_space<vmem>>, vector<32x256xf32>
    %231 = vector.broadcast %229 : vector<32x1xf32> to vector<32x256xf32>
    %232 = arith.mulf %231, %230 : vector<32x256xf32>
    %233 = arith.addf %228, %232 : vector<32x256xf32>
    %c0_106 = arith.constant 0 : index
    %c40 = arith.constant 40 : index
    %234 = vector.load %arg2[%c0_106, %c40] : memref<32x49xf32, #tpu.memory_space<vmem>>, vector<32x1xf32>
    %c0_107 = arith.constant 0 : index
    %c162 = arith.constant 162 : index
    %235 = vector.load %arg10[%c0_107, %c162] : memref<32x512xf32, #tpu.memory_space<vmem>>, vector<32x256xf32>
    %236 = vector.broadcast %234 : vector<32x1xf32> to vector<32x256xf32>
    %237 = arith.mulf %236, %235 : vector<32x256xf32>
    %238 = arith.addf %233, %237 : vector<32x256xf32>
    %c0_108 = arith.constant 0 : index
    %c47 = arith.constant 47 : index
    %239 = vector.load %arg2[%c0_108, %c47] : memref<32x49xf32, #tpu.memory_space<vmem>>, vector<32x1xf32>
    %c0_109 = arith.constant 0 : index
    %c178 = arith.constant 178 : index
    %240 = vector.load %arg10[%c0_109, %c178] : memref<32x512xf32, #tpu.memory_space<vmem>>, vector<32x256xf32>
    %241 = vector.broadcast %239 : vector<32x1xf32> to vector<32x256xf32>
    %242 = arith.mulf %241, %240 : vector<32x256xf32>
    %243 = arith.addf %238, %242 : vector<32x256xf32>
    %c5_110 = arith.constant 5 : index
    %c0_111 = arith.constant 0 : index
    %244 = vector.load %arg4[%c5_110, %c0_111] : memref<7x256xf32, #tpu.memory_space<vmem>>, vector<1x256xf32>
    %245 = vector.broadcast %244 : vector<1x256xf32> to vector<32x256xf32>
    %246 = arith.mulf %243, %245 : vector<32x256xf32>
    %247 = arith.addf %207, %246 : vector<32x256xf32>
    %cst_112 = arith.constant 0.000000e+00 : f32
    %248 = vector.broadcast %cst_112 : f32 to vector<32x256xf32>
    %c0_113 = arith.constant 0 : index
    %c6 = arith.constant 6 : index
    %249 = vector.load %arg2[%c0_113, %c6] : memref<32x49xf32, #tpu.memory_space<vmem>>, vector<32x1xf32>
    %c0_114 = arith.constant 0 : index
    %c83 = arith.constant 83 : index
    %250 = vector.load %arg10[%c0_114, %c83] : memref<32x512xf32, #tpu.memory_space<vmem>>, vector<32x256xf32>
    %251 = vector.broadcast %249 : vector<32x1xf32> to vector<32x256xf32>
    %252 = arith.mulf %251, %250 : vector<32x256xf32>
    %253 = arith.addf %248, %252 : vector<32x256xf32>
    %c0_115 = arith.constant 0 : index
    %c13 = arith.constant 13 : index
    %254 = vector.load %arg2[%c0_115, %c13] : memref<32x49xf32, #tpu.memory_space<vmem>>, vector<32x1xf32>
    %c0_116 = arith.constant 0 : index
    %c99 = arith.constant 99 : index
    %255 = vector.load %arg10[%c0_116, %c99] : memref<32x512xf32, #tpu.memory_space<vmem>>, vector<32x256xf32>
    %256 = vector.broadcast %254 : vector<32x1xf32> to vector<32x256xf32>
    %257 = arith.mulf %256, %255 : vector<32x256xf32>
    %258 = arith.addf %253, %257 : vector<32x256xf32>
    %c0_117 = arith.constant 0 : index
    %c20 = arith.constant 20 : index
    %259 = vector.load %arg2[%c0_117, %c20] : memref<32x49xf32, #tpu.memory_space<vmem>>, vector<32x1xf32>
    %c0_118 = arith.constant 0 : index
    %c115 = arith.constant 115 : index
    %260 = vector.load %arg10[%c0_118, %c115] : memref<32x512xf32, #tpu.memory_space<vmem>>, vector<32x256xf32>
    %261 = vector.broadcast %259 : vector<32x1xf32> to vector<32x256xf32>
    %262 = arith.mulf %261, %260 : vector<32x256xf32>
    %263 = arith.addf %258, %262 : vector<32x256xf32>
    %c0_119 = arith.constant 0 : index
    %c27 = arith.constant 27 : index
    %264 = vector.load %arg2[%c0_119, %c27] : memref<32x49xf32, #tpu.memory_space<vmem>>, vector<32x1xf32>
    %c0_120 = arith.constant 0 : index
    %c131 = arith.constant 131 : index
    %265 = vector.load %arg10[%c0_120, %c131] : memref<32x512xf32, #tpu.memory_space<vmem>>, vector<32x256xf32>
    %266 = vector.broadcast %264 : vector<32x1xf32> to vector<32x256xf32>
    %267 = arith.mulf %266, %265 : vector<32x256xf32>
    %268 = arith.addf %263, %267 : vector<32x256xf32>
    %c0_121 = arith.constant 0 : index
    %c34 = arith.constant 34 : index
    %269 = vector.load %arg2[%c0_121, %c34] : memref<32x49xf32, #tpu.memory_space<vmem>>, vector<32x1xf32>
    %c0_122 = arith.constant 0 : index
    %c147 = arith.constant 147 : index
    %270 = vector.load %arg10[%c0_122, %c147] : memref<32x512xf32, #tpu.memory_space<vmem>>, vector<32x256xf32>
    %271 = vector.broadcast %269 : vector<32x1xf32> to vector<32x256xf32>
    %272 = arith.mulf %271, %270 : vector<32x256xf32>
    %273 = arith.addf %268, %272 : vector<32x256xf32>
    %c0_123 = arith.constant 0 : index
    %c41 = arith.constant 41 : index
    %274 = vector.load %arg2[%c0_123, %c41] : memref<32x49xf32, #tpu.memory_space<vmem>>, vector<32x1xf32>
    %c0_124 = arith.constant 0 : index
    %c163 = arith.constant 163 : index
    %275 = vector.load %arg10[%c0_124, %c163] : memref<32x512xf32, #tpu.memory_space<vmem>>, vector<32x256xf32>
    %276 = vector.broadcast %274 : vector<32x1xf32> to vector<32x256xf32>
    %277 = arith.mulf %276, %275 : vector<32x256xf32>
    %278 = arith.addf %273, %277 : vector<32x256xf32>
    %c0_125 = arith.constant 0 : index
    %c48 = arith.constant 48 : index
    %279 = vector.load %arg2[%c0_125, %c48] : memref<32x49xf32, #tpu.memory_space<vmem>>, vector<32x1xf32>
    %c0_126 = arith.constant 0 : index
    %c179 = arith.constant 179 : index
    %280 = vector.load %arg10[%c0_126, %c179] : memref<32x512xf32, #tpu.memory_space<vmem>>, vector<32x256xf32>
    %281 = vector.broadcast %279 : vector<32x1xf32> to vector<32x256xf32>
    %282 = arith.mulf %281, %280 : vector<32x256xf32>
    %283 = arith.addf %278, %282 : vector<32x256xf32>
    %c6_127 = arith.constant 6 : index
    %c0_128 = arith.constant 0 : index
    %284 = vector.load %arg4[%c6_127, %c0_128] : memref<7x256xf32, #tpu.memory_space<vmem>>, vector<1x256xf32>
    %285 = vector.broadcast %284 : vector<1x256xf32> to vector<32x256xf32>
    %286 = arith.mulf %283, %285 : vector<32x256xf32>
    %287 = arith.addf %247, %286 : vector<32x256xf32>
    %c0_129 = arith.constant 0 : index
    %c0_130 = arith.constant 0 : index
    %288 = vector.load %arg3[%c0_129, %c0_130] : memref<32x1xf32, #tpu.memory_space<vmem>>, vector<32x1xf32>
    %289 = vector.broadcast %288 : vector<32x1xf32> to vector<32x256xf32>
    %290 = arith.addf %287, %289 : vector<32x256xf32>
    %cst_131 = arith.constant dense<0.000000e+00> : vector<32xf32>
    %291 = vector.multi_reduction <add>, %290, %cst_131 [1] : vector<32x256xf32> to vector<32xf32>
    %292 = vector.shape_cast %291 : vector<32xf32> to vector<32x1xf32>
    %cst_132 = arith.constant 3.906250e-03 : f32
    %293 = vector.broadcast %cst_132 : f32 to vector<32x1xf32>
    %294 = arith.mulf %292, %293 : vector<32x1xf32>
    %295 = arith.mulf %290, %290 : vector<32x256xf32>
    %cst_133 = arith.constant dense<0.000000e+00> : vector<32xf32>
    %296 = vector.multi_reduction <add>, %295, %cst_133 [1] : vector<32x256xf32> to vector<32xf32>
    %297 = vector.shape_cast %296 : vector<32xf32> to vector<32x1xf32>
    %cst_134 = arith.constant 3.906250e-03 : f32
    %298 = vector.broadcast %cst_134 : f32 to vector<32x1xf32>
    %299 = arith.mulf %297, %298 : vector<32x1xf32>
    %300 = arith.mulf %294, %294 : vector<32x1xf32>
    %301 = arith.subf %299, %300 : vector<32x1xf32>
    %302 = vector.broadcast %294 : vector<32x1xf32> to vector<32x256xf32>
    %303 = arith.subf %290, %302 : vector<32x256xf32>
    %cst_135 = arith.constant 9.99999974E-6 : f32
    %304 = vector.broadcast %cst_135 : f32 to vector<32x1xf32>
    %305 = arith.addf %301, %304 : vector<32x1xf32>
    %306 = math.rsqrt %305 : vector<32x1xf32>
    %307 = vector.broadcast %306 : vector<32x1xf32> to vector<32x256xf32>
    %308 = arith.mulf %303, %307 : vector<32x256xf32>
    %c0_136 = arith.constant 0 : index
    %c0_137 = arith.constant 0 : index
    %309 = vector.load %arg5[%c0_136, %c0_137] : memref<64x32xbf16, #tpu.memory_space<vmem>>, vector<64x32xbf16>
    %310 = arith.truncf %308 : vector<32x256xf32> to vector<32x256xbf16>
    %cst_138 = arith.constant dense<0.000000e+00> : vector<64x256xf32>
    %311 = tpu.matmul %309, %310, %cst_138 {dimension_numbers = #tpu.dot_dimension_numbers<[1], [0], [0], [1], [0, 0, 1, 1], [], []>} : vector<64x32xbf16>, vector<32x256xbf16>, vector<64x256xf32> -> vector<64x256xf32>
    %c0_139 = arith.constant 0 : index
    %c0_140 = arith.constant 0 : index
    %312 = vector.load %arg6[%c0_139, %c0_140] : memref<64x1xf32, #tpu.memory_space<vmem>>, vector<64x1xf32>
    %313 = vector.broadcast %312 : vector<64x1xf32> to vector<64x256xf32>
    %314 = arith.addf %311, %313 : vector<64x256xf32>
    %cst_141 = arith.constant 5.000000e-01 : f32
    %315 = vector.broadcast %cst_141 : f32 to vector<64x256xf32>
    %316 = arith.mulf %315, %314 : vector<64x256xf32>
    %cst_142 = arith.constant 0.707106769 : f32
    %317 = vector.broadcast %cst_142 : f32 to vector<64x256xf32>
    %318 = arith.mulf %314, %317 : vector<64x256xf32>
    %319 = math.absf %318 : vector<64x256xf32>
    %cst_143 = arith.constant 0.327591091 : f32
    %320 = vector.broadcast %cst_143 : f32 to vector<64x256xf32>
    %321 = arith.mulf %320, %319 : vector<64x256xf32>
    %cst_144 = arith.constant 1.000000e+00 : f32
    %322 = vector.broadcast %cst_144 : f32 to vector<64x256xf32>
    %323 = arith.addf %322, %321 : vector<64x256xf32>
    %cst_145 = arith.constant 1.000000e+00 : f32
    %324 = vector.broadcast %cst_145 : f32 to vector<64x256xf32>
    %325 = arith.divf %324, %323 : vector<64x256xf32>
    %cst_146 = arith.constant 1.06140542 : f32
    %326 = vector.broadcast %cst_146 : f32 to vector<64x256xf32>
    %327 = arith.mulf %326, %325 : vector<64x256xf32>
    %cst_147 = arith.constant -1.45315206 : f32
    %328 = vector.broadcast %cst_147 : f32 to vector<64x256xf32>
    %329 = arith.addf %327, %328 : vector<64x256xf32>
    %330 = arith.mulf %329, %325 : vector<64x256xf32>
    %cst_148 = arith.constant 1.42141378 : f32
    %331 = vector.broadcast %cst_148 : f32 to vector<64x256xf32>
    %332 = arith.addf %330, %331 : vector<64x256xf32>
    %333 = arith.mulf %332, %325 : vector<64x256xf32>
    %cst_149 = arith.constant -0.284496725 : f32
    %334 = vector.broadcast %cst_149 : f32 to vector<64x256xf32>
    %335 = arith.addf %333, %334 : vector<64x256xf32>
    %336 = arith.mulf %335, %325 : vector<64x256xf32>
    %cst_150 = arith.constant 0.254829586 : f32
    %337 = vector.broadcast %cst_150 : f32 to vector<64x256xf32>
    %338 = arith.addf %336, %337 : vector<64x256xf32>
    %339 = arith.mulf %338, %325 : vector<64x256xf32>
    %340 = arith.mulf %319, %319 : vector<64x256xf32>
    %cst_151 = arith.constant 0.000000e+00 : f32
    %341 = vector.broadcast %cst_151 : f32 to vector<64x256xf32>
    %342 = arith.subf %341, %340 : vector<64x256xf32>
    %343 = math.exp %342 : vector<64x256xf32>
    %344 = arith.mulf %339, %343 : vector<64x256xf32>
    %cst_152 = arith.constant 1.000000e+00 : f32
    %345 = vector.broadcast %cst_152 : f32 to vector<64x256xf32>
    %346 = arith.subf %345, %344 : vector<64x256xf32>
    %cst_153 = arith.constant 0.000000e+00 : f32
    %347 = vector.broadcast %cst_153 : f32 to vector<64x256xf32>
    %348 = arith.cmpf olt, %318, %347 : vector<64x256xf32>
    %cst_154 = arith.constant 0.000000e+00 : f32
    %349 = vector.broadcast %cst_154 : f32 to vector<64x256xf32>
    %350 = arith.subf %349, %346 : vector<64x256xf32>
    %351 = arith.select %348, %350, %346 : vector<64x256xi1>, vector<64x256xf32>
    %cst_155 = arith.constant 1.000000e+00 : f32
    %352 = vector.broadcast %cst_155 : f32 to vector<64x256xf32>
    %353 = arith.addf %352, %351 : vector<64x256xf32>
    %354 = arith.mulf %316, %353 : vector<64x256xf32>
    %c0_156 = arith.constant 0 : index
    %c0_157 = arith.constant 0 : index
    %355 = vector.load %arg7[%c0_156, %c0_157] : memref<32x64xbf16, #tpu.memory_space<vmem>>, vector<32x64xbf16>
    %356 = arith.truncf %354 : vector<64x256xf32> to vector<64x256xbf16>
    %cst_158 = arith.constant dense<0.000000e+00> : vector<32x256xf32>
    %357 = tpu.matmul %355, %356, %cst_158 {dimension_numbers = #tpu.dot_dimension_numbers<[1], [0], [0], [1], [0, 0, 1, 1], [], []>} : vector<32x64xbf16>, vector<64x256xbf16>, vector<32x256xf32> -> vector<32x256xf32>
    %c0_159 = arith.constant 0 : index
    %c0_160 = arith.constant 0 : index
    %358 = vector.load %arg8[%c0_159, %c0_160] : memref<32x1xf32, #tpu.memory_space<vmem>>, vector<32x1xf32>
    %359 = vector.broadcast %358 : vector<32x1xf32> to vector<32x256xf32>
    %360 = arith.addf %357, %359 : vector<32x256xf32>
    %c0_161 = arith.constant 0 : index
    %c0_162 = arith.constant 0 : index
    %c0_163 = arith.constant 0 : index
    %361 = vector.load %arg1[%c0_161, %c0_162, %c0_163] : memref<1x32x256xf32, #tpu.memory_space<vmem>>, vector<1x32x256xf32>
    %362 = vector.shape_cast %361 : vector<1x32x256xf32> to vector<32x256xf32>
    %363 = arith.addf %362, %360 : vector<32x256xf32>
    %c0_164 = arith.constant 0 : index
    %c0_165 = arith.constant 0 : index
    %c0_166 = arith.constant 0 : index
    %364 = vector.load %arg9[%c0_164, %c0_165, %c0_166] : memref<1x32x256xf32, #tpu.memory_space<vmem>>, vector<1x32x256xf32>
    %365 = vector.shape_cast %364 : vector<1x32x256xf32> to vector<32x256xf32>
    %366 = vector.shape_cast %363 : vector<32x256xf32> to vector<1x32x256xf32>
    tpu.vector_store %arg9[%c0_164, %c0_165, %c0_166], %366 {strides = array<i32>} : memref<1x32x256xf32, #tpu.memory_space<vmem>>, vector<1x32x256xf32>,
    return
  }
  func.func @transform_0(%arg0: i32) -> (i32, i32, i32) {
    %c0_i32 = arith.constant 0 : i32
    %c0_i32_0 = arith.constant 0 : i32
    %c0_i32_1 = arith.constant 0 : i32
    return %arg0, %c0_i32, %c0_i32_0 : i32, i32, i32
  }
  func.func @transform_1(%arg0: i32) -> (i32, i32) {
    %c0_i32 = arith.constant 0 : i32
    %c0_i32_0 = arith.constant 0 : i32
    %c0_i32_1 = arith.constant 0 : i32
    return %c0_i32, %c0_i32_0 : i32, i32
  }
  func.func @transform_2(%arg0: i32) -> (i32, i32) {
    %c0_i32 = arith.constant 0 : i32
    %c0_i32_0 = arith.constant 0 : i32
    %c0_i32_1 = arith.constant 0 : i32
    return %c0_i32, %c0_i32_0 : i32, i32
  }
  func.func @transform_3(%arg0: i32) -> (i32, i32) {
    %c0_i32 = arith.constant 0 : i32
    %c0_i32_0 = arith.constant 0 : i32
    %c0_i32_1 = arith.constant 0 : i32
    return %c0_i32, %c0_i32_0 : i32, i32
  }
  func.func @transform_4(%arg0: i32) -> (i32, i32) {
    %c0_i32 = arith.constant 0 : i32
    %c0_i32_0 = arith.constant 0 : i32
    %c0_i32_1 = arith.constant 0 : i32
    return %c0_i32, %c0_i32_0 : i32, i32
  }
  func.func @transform_5(%arg0: i32) -> (i32, i32) {
    %c0_i32 = arith.constant 0 : i32
    %c0_i32_0 = arith.constant 0 : i32
    %c0_i32_1 = arith.constant 0 : i32
    return %c0_i32, %c0_i32_0 : i32, i32
  }
  func.func @transform_6(%arg0: i32) -> (i32, i32) {
    %c0_i32 = arith.constant 0 : i32
    %c0_i32_0 = arith.constant 0 : i32
    %c0_i32_1 = arith.constant 0 : i32
    return %c0_i32, %c0_i32_0 : i32, i32
  }
  func.func @transform_7(%arg0: i32) -> (i32, i32) {
    %c0_i32 = arith.constant 0 : i32
    %c0_i32_0 = arith.constant 0 : i32
    %c0_i32_1 = arith.constant 0 : i32
    return %c0_i32, %c0_i32_0 : i32, i32
  }
  func.func @transform_8(%arg0: i32) -> (i32, i32, i32) {
    %c0_i32 = arith.constant 0 : i32
    %c0_i32_0 = arith.constant 0 : i32
    %c0_i32_1 = arith.constant 0 : i32
    return %arg0, %c0_i32, %c0_i32_0 : i32, i32, i32
  }
}

</mosaic_0001>

<llo_original>
// kernel: convnext_block.1
$region0: #{convnext_block.1}
  #allocation0 [shape = 'u32[]', space=smem, size = 0x4, offset = 0x4, fixed_abs, tag = 'smem constant byte address 0x4 - core index']
  #allocation1 [shape = 'u32[144,128]{1,0:T(1,128)}', space=vmem, size = 0x12000, scoped, tag = 'internal scratch']
  #allocation2 [shape = 'f32[32,512]{1,0:T(8,128)}', space=vmem, size = 0x10000, scoped, tag = 'scratch operand']
  %s0 = inlined_call_operand.vmem [shape: f32[2,32,256], index: 0, kind: input, shape index: {}]
  %s1 = inlined_call_operand.vmem [shape: f32[32,49], index: 1, kind: input, shape index: {}]
  %s2 = inlined_call_operand.vmem [shape: f32[32,1], index: 2, kind: input, shape index: {}]
  %s3 = inlined_call_operand.vmem [shape: f32[7,256], index: 3, kind: input, shape index: {}]
  %s4 = inlined_call_operand.vmem [shape: bf16[64,32], index: 4, kind: input, shape index: {}]
  %s5 = inlined_call_operand.vmem [shape: f32[64,1], index: 5, kind: input, shape index: {}]
  %s6 = inlined_call_operand.vmem [shape: bf16[32,64], index: 6, kind: input, shape index: {}]
  %s7 = inlined_call_operand.vmem [shape: f32[32,1], index: 7, kind: input, shape index: {}]
  %s8 = inlined_call_operand.vmem [shape: f32[2,32,256], index: 8, kind: output, shape index: {}]
  %s9 = sld [smem:[#allocation0]]
  $region65: #{convnext_block.1} parent=0
    _
  %s11 = ssub.s32 1, %s9
  %s12 = scalar_select 0, %s11, %s9
  loop: start=0, step=1, limit=4
  $region2: #{convnext_block.1} parent=0 // loop_pre_header
    _
  $region3: #{convnext_block.1} parent=0 // loop_header
    %s14 = sphi 0, %s18
    %p15 = scmp.ge.s32.totalorder %s14, 4
    %s24 = sphi 0, %s26
    %s27 = sphi 0, %s24
    %s28 = sphi 0, %s27
    %s44 = sphi 0, %s28
    %s48 = sphi 0, %s48
    %s50 = sphi 0, %s48
    %s51 = sphi 0, %s50
    %s65 = sphi 0, %s51
    %s69 = sphi 0, %s69
    %s71 = sphi 0, %s69
    %s72 = sphi 0, %s71
    %s86 = sphi 0, %s72
    %s90 = sphi 0, %s90
    %s92 = sphi 0, %s90
    %s93 = sphi 0, %s92
    %s107 = sphi 0, %s93
    %s111 = sphi 0, %s111
    %s113 = sphi 0, %s111
    %s114 = sphi 0, %s113
    %s128 = sphi 0, %s114
    %s132 = sphi 0, %s132
    %s134 = sphi 0, %s132
    %s135 = sphi 0, %s134
    %s149 = sphi 0, %s135
    %s153 = sphi 0, %s153
    %s155 = sphi 0, %s153
    %s156 = sphi 0, %s155
    %s170 = sphi 0, %s156
    %s174 = sphi 0, %s174
    %s176 = sphi 0, %s174
    %s177 = sphi 0, %s176
    %s191 = sphi 0, %s177
    %s197 = sphi 0, %s199
    %s200 = sphi 0, %s197
    %s201 = sphi 0, %s200
    %s217 = sphi 0, %s201
  $region4: #{convnext_block.1} parent=0 // loop_header_branch
    %17 = sbr.rel (%p15) target = $region8
  $region5: #{convnext_block.1} parent=0 // loop_body
    %s19 = ssub.s32 %s14, 1
    %s20 = ssub.s32 %s14, 2
    %s21 = sadd.s32 %s14, 1
    %s22 = ssub.s32 %s14, %s21
    %p23 = scmp.eq.s32.totalorder %s22, 0
    %s25 = sadd.s32 %s24, 1
    %s26 = scalar_select %p23, %s24, %s25
    %p29 = pneg %p23
    %p30 = scmp.eq.s32.totalorder %s14, 1
    %p31 = por %p29, %p30
    %p32 = scmp.ne.s32.totalorder %s24, %s27
    %p33 = scmp.eq.s32.totalorder %s14, 0
    %p34 = por %p32, %p33
    %p35 = scmp.ne.s32.totalorder %s24, %s27
    %p36 = scmp.eq.s32.totalorder %s19, 1
    %p37 = por %p35, %p36
    %p38 = scmp.ne.s32.totalorder %s27, %s28
    %p39 = scmp.eq.s32.totalorder %s19, 0
    %p40 = por %p38, %p39
    %p41 = scmp.ne.s32.totalorder %s27, %s28
    %p42 = scmp.eq.s32.totalorder %s20, 1
    %p43 = por %p41, %p42
    %p45 = scmp.ne.s32.totalorder %s28, %s44
    %p46 = scmp.eq.s32.totalorder %s20, 0
    %p47 = por %p45, %p46
    %s49 = sadd.s32 %s48, 1
    %p52 = scmp.eq.s32.totalorder %s14, 1
    %p53 = scmp.ne.s32.totalorder %s48, %s50
    %p54 = scmp.eq.s32.totalorder %s14, 0
    %p55 = por %p53, %p54
    %p56 = scmp.ne.s32.totalorder %s48, %s50
    %p57 = scmp.eq.s32.totalorder %s19, 1
    %p58 = por %p56, %p57
    %p59 = scmp.ne.s32.totalorder %s50, %s51
    %p60 = scmp.eq.s32.totalorder %s19, 0
    %p61 = por %p59, %p60
    %p62 = scmp.ne.s32.totalorder %s50, %s51
    %p63 = scmp.eq.s32.totalorder %s20, 1
    %p64 = por %p62, %p63
    %p66 = scmp.ne.s32.totalorder %s51, %s65
    %p67 = scmp.eq.s32.totalorder %s20, 0
    %p68 = por %p66, %p67
    %s70 = sadd.s32 %s69, 1
    %p73 = scmp.eq.s32.totalorder %s14, 1
    %p74 = scmp.ne.s32.totalorder %s69, %s71
    %p75 = scmp.eq.s32.totalorder %s14, 0
    %p76 = por %p74, %p75
    %p77 = scmp.ne.s32.totalorder %s69, %s71
    %p78 = scmp.eq.s32.totalorder %s19, 1
    %p79 = por %p77, %p78
    %p80 = scmp.ne.s32.totalorder %s71, %s72
    %p81 = scmp.eq.s32.totalorder %s19, 0
    %p82 = por %p80, %p81
    %p83 = scmp.ne.s32.totalorder %s71, %s72
    %p84 = scmp.eq.s32.totalorder %s20, 1
    %p85 = por %p83, %p84
    %p87 = scmp.ne.s32.totalorder %s72, %s86
    %p88 = scmp.eq.s32.totalorder %s20, 0
    %p89 = por %p87, %p88
    %s91 = sadd.s32 %s90, 1
    %p94 = scmp.eq.s32.totalorder %s14, 1
    %p95 = scmp.ne.s32.totalorder %s90, %s92
    %p96 = scmp.eq.s32.totalorder %s14, 0
    %p97 = por %p95, %p96
    %p98 = scmp.ne.s32.totalorder %s90, %s92
    %p99 = scmp.eq.s32.totalorder %s19, 1
    %p100 = por %p98, %p99
    %p101 = scmp.ne.s32.totalorder %s92, %s93
    %p102 = scmp.eq.s32.totalorder %s19, 0
    %p103 = por %p101, %p102
    %p104 = scmp.ne.s32.totalorder %s92, %s93
    %p105 = scmp.eq.s32.totalorder %s20, 1
    %p106 = por %p104, %p105
    %p108 = scmp.ne.s32.totalorder %s93, %s107
    %p109 = scmp.eq.s32.totalorder %s20, 0
    %p110 = por %p108, %p109
    %s112 = sadd.s32 %s111, 1
    %p115 = scmp.eq.s32.totalorder %s14, 1
    %p116 = scmp.ne.s32.totalorder %s111, %s113
    %p117 = scmp.eq.s32.totalorder %s14, 0
    %p118 = por %p116, %p117
    %p119 = scmp.ne.s32.totalorder %s111, %s113
    %p120 = scmp.eq.s32.totalorder %s19, 1
    %p121 = por %p119, %p120
    %p122 = scmp.ne.s32.totalorder %s113, %s114
    %p123 = scmp.eq.s32.totalorder %s19, 0
    %p124 = por %p122, %p123
    %p125 = scmp.ne.s32.totalorder %s113, %s114
    %p126 = scmp.eq.s32.totalorder %s20, 1
    %p127 = por %p125, %p126
    %p129 = scmp.ne.s32.totalorder %s114, %s128
    %p130 = scmp.eq.s32.totalorder %s20, 0
    %p131 = por %p129, %p130
    %s133 = sadd.s32 %s132, 1
    %p136 = scmp.eq.s32.totalorder %s14, 1
    %p137 = scmp.ne.s32.totalorder %s132, %s134
    %p138 = scmp.eq.s32.totalorder %s14, 0
    %p139 = por %p137, %p138
    %p140 = scmp.ne.s32.totalorder %s132, %s134
    %p141 = scmp.eq.s32.totalorder %s19, 1
    %p142 = por %p140, %p141
    %p143 = scmp.ne.s32.totalorder %s134, %s135
    %p144 = scmp.eq.s32.totalorder %s19, 0
    %p145 = por %p143, %p144
    %p146 = scmp.ne.s32.totalorder %s134, %s135
    %p147 = scmp.eq.s32.totalorder %s20, 1
    %p148 = por %p146, %p147
    %p150 = scmp.ne.s32.totalorder %s135, %s149
    %p151 = scmp.eq.s32.totalorder %s20, 0
    %p152 = por %p150, %p151
    %s154 = sadd.s32 %s153, 1
    %p157 = scmp.eq.s32.totalorder %s14, 1
    %p158 = scmp.ne.s32.totalorder %s153, %s155
    %p159 = scmp.eq.s32.totalorder %s14, 0
    %p160 = por %p158, %p159
    %p161 = scmp.ne.s32.totalorder %s153, %s155
    %p162 = scmp.eq.s32.totalorder %s19, 1
    %p163 = por %p161, %p162
    %p164 = scmp.ne.s32.totalorder %s155, %s156
    %p165 = scmp.eq.s32.totalorder %s19, 0
    %p166 = por %p164, %p165
    %p167 = scmp.ne.s32.totalorder %s155, %s156
    %p168 = scmp.eq.s32.totalorder %s20, 1
    %p169 = por %p167, %p168
    %p171 = scmp.ne.s32.totalorder %s156, %s170
    %p172 = scmp.eq.s32.totalorder %s20, 0
    %p173 = por %p171, %p172
    %s175 = sadd.s32 %s174, 1
    %p178 = scmp.eq.s32.totalorder %s14, 1
    %p179 = scmp.ne.s32.totalorder %s174, %s176
    %p180 = scmp.eq.s32.totalorder %s14, 0
    %p181 = por %p179, %p180
    %p182 = scmp.ne.s32.totalorder %s174, %s176
    %p183 = scmp.eq.s32.totalorder %s19, 1
    %p184 = por %p182, %p183
    %p185 = scmp.ne.s32.totalorder %s176, %s177
    %p186 = scmp.eq.s32.totalorder %s19, 0
    %p187 = por %p185, %p186
    %p188 = scmp.ne.s32.totalorder %s176, %s177
    %p189 = scmp.eq.s32.totalorder %s20, 1
    %p190 = por %p188, %p189
    %p192 = scmp.ne.s32.totalorder %s177, %s191
    %p193 = scmp.eq.s32.totalorder %s20, 0
    %p194 = por %p192, %p193
    %s195 = ssub.s32 %s14, %s21
    %p196 = scmp.eq.s32.totalorder %s195, 0
    %s198 = sadd.s32 %s197, 1
    %s199 = scalar_select %p196, %s197, %s198
    %p202 = pneg %p196
    %p203 = scmp.eq.s32.totalorder %s14, 1
    %p204 = por %p202, %p203
    %p205 = scmp.ne.s32.totalorder %s197, %s200
    %p206 = scmp.eq.s32.totalorder %s14, 0
    %p207 = por %p205, %p206
    %p208 = scmp.ne.s32.totalorder %s197, %s200
    %p209 = scmp.eq.s32.totalorder %s19, 1
    %p210 = por %p208, %p209
    %p211 = scmp.ne.s32.totalorder %s200, %s201
    %p212 = scmp.eq.s32.totalorder %s19, 0
    %p213 = por %p211, %p212
    %p214 = scmp.ne.s32.totalorder %s200, %s201
    %p215 = scmp.eq.s32.totalorder %s20, 1
    %p216 = por %p214, %p215
    %p218 = scmp.ne.s32.totalorder %s201, %s217
    %p219 = scmp.eq.s32.totalorder %s20, 0
    %p220 = por %p218, %p219
    %p221 = scmp.le.s32.totalorder 1, %s14
    %p222 = scmp.lt.s32.totalorder %s14, 3
    %p223 = pnand %p221, %p222
    %p224 = pneg %p223
    // Predicated region
    $region9: #{convnext_block.1} parent=5 // pred_check
      _
    $region10: #{convnext_block.1} parent=5 // pred_check_branch
      %226 = sbr.rel (%p223) target = $region12
    $region11: #{convnext_block.1} parent=5 // pred_region
      %s227 = ssub.s32 %s14, 1
      // Predicated region
      $region13: #{convnext_block.1} parent=11 // pred_check
        %p228 = pneg %p61
      $region14: #{convnext_block.1} parent=11 // pred_check_branch
        %230 = sbr.rel (%p228) target = $region16
      $region15: #{convnext_block.1} parent=11 // pred_region
        _
      $region16: #{convnext_block.1} parent=11 // pred_fallthru
        _
      // Predicated region
      $region17: #{convnext_block.1} parent=11 // pred_check
        %p231 = pneg %p82
      $region18: #{convnext_block.1} parent=11 // pred_check_branch
        %233 = sbr.rel (%p231) target = $region20
      $region19: #{convnext_block.1} parent=11 // pred_region
        _
      $region20: #{convnext_block.1} parent=11 // pred_fallthru
        _
      // Predicated region
      $region21: #{convnext_block.1} parent=11 // pred_check
        %p234 = pneg %p103
      $region22: #{convnext_block.1} parent=11 // pred_check_branch
        %236 = sbr.rel (%p234) target = $region24
      $region23: #{convnext_block.1} parent=11 // pred_region
        _
      $region24: #{convnext_block.1} parent=11 // pred_fallthru
        _
      // Predicated region
      $region25: #{convnext_block.1} parent=11 // pred_check
        %p237 = pneg %p124
      $region26: #{convnext_block.1} parent=11 // pred_check_branch
        %239 = sbr.rel (%p237) target = $region28
      $region27: #{convnext_block.1} parent=11 // pred_region
        _
      $region28: #{convnext_block.1} parent=11 // pred_fallthru
        _
      // Predicated region
      $region29: #{convnext_block.1} parent=11 // pred_check
        %p240 = pneg %p145
      $region30: #{convnext_block.1} parent=11 // pred_check_branch
        %242 = sbr.rel (%p240) target = $region32
      $region31: #{convnext_block.1} parent=11 // pred_region
        _
      $region32: #{convnext_block.1} parent=11 // pred_fallthru
        _
      // Predicated region
      $region33: #{convnext_block.1} parent=11 // pred_check
        %p243 = pneg %p166
      $region34: #{convnext_block.1} parent=11 // pred_check_branch
        %245 = sbr.rel (%p243) target = $region36
      $region35: #{convnext_block.1} parent=11 // pred_region
        _
      $region36: #{convnext_block.1} parent=11 // pred_fallthru
        _
      // Predicated region
      $region37: #{convnext_block.1} parent=11 // pred_check
        %p246 = pneg %p187
      $region38: #{convnext_block.1} parent=11 // pred_check_branch
        %248 = sbr.rel (%p246) target = $region40
      $region39: #{convnext_block.1} parent=11 // pred_region
        _
      $region40: #{convnext_block.1} parent=11 // pred_fallthru
        _
    $region12: #{convnext_block.1} parent=5 // pred_fallthru
      _
    %p249 = scmp.lt.s32.totalorder %s14, 2
    // Predicated region
    $region41: #{convnext_block.1} parent=5 // pred_check
      %p250 = pneg %p249
    $region42: #{convnext_block.1} parent=5 // pred_check_branch
      %252 = sbr.rel (%p250) target = $region44
    $region43: #{convnext_block.1} parent=5 // pred_region
      // Predicated region
      $region45: #{convnext_block.1} parent=43 // pred_check
        %p253 = pneg %p34
      $region46: #{convnext_block.1} parent=43 // pred_check_branch
        %255 = sbr.rel (%p253) target = $region48
      $region47: #{convnext_block.1} parent=43 // pred_region
        %p256 = scmp.lt.s32.totalorder %s14, 1
        %s257 = scalar_select %p256, %s14, 1
        %s258 = smul.addr %s257, 8
        %s259 = smul.addr %s258, 8
        %s260 = scalar_lea.vmem %s0, %s259
      $region48: #{convnext_block.1} parent=43 // pred_fallthru
        _
    $region44: #{convnext_block.1} parent=5 // pred_fallthru
      _
    %p261 = scmp.le.s32.totalorder 1, %s14
    %p262 = scmp.lt.s32.totalorder %s14, 3
    %p263 = pnand %p261, %p262
    %p264 = pneg %p263
    // Predicated region
    $region49: #{convnext_block.1} parent=5 // pred_check
      _
    $region50: #{convnext_block.1} parent=5 // pred_check_branch
      %266 = sbr.rel (%p263) target = $region52
    $region51: #{convnext_block.1} parent=5 // pred_region
      %s267 = ssub.s32 %s14, 1
      %p268 = scmp.lt.s32.totalorder %s19, 1
      %s269 = scalar_select %p268, %s19, 1
      %s270 = smul.addr %s269, 8
      %s271 = smul.addr %s270, 8
      %s272 = scalar_lea.vmem %s0, %s271
      %p273 = pneg %p40
      %p274 = pneg %p37
      %p275 = pneg %p61
      %p276 = pneg %p58
      %p277 = pneg %p82
      %p278 = pneg %p79
      %p279 = pneg %p103
      %p280 = pneg %p100
      %p281 = pneg %p124
      %p282 = pneg %p121
      %p283 = pneg %p145
      %p284 = pneg %p142
      %p285 = pneg %p166
      %p286 = pneg %p163
      %p287 = pneg %p187
      %p288 = pneg %p184
      %p289 = pneg %p213
      %p290 = pneg %p210
      %p291 = scmp.lt.s32.totalorder %s19, 1
      %s292 = scalar_select %p291, %s19, 1
      %s293 = smul.addr %s292, 8
      %s294 = smul.addr %s293, 8
      %s295 = scalar_lea.vmem %s8, %s294
      %p296 = scmp.lt.s32.totalorder %s19, 1
      %s297 = scalar_select %p296, %s19, 1
      %s298 = smul.addr %s297, 8
      %s299 = smul.addr %s298, 8
      %s300 = scalar_lea.vmem %s0, %s299
      %p301 = scmp.lt.s32.totalorder %s19, 1
      %s302 = scalar_select %p301, %s19, 1
      %s303 = smul.addr %s302, 8
      %s304 = smul.addr %s303, 8
      %s305 = scalar_lea.vmem %s8, %s304
      %307 = vst [vmem:[#allocation2] sm:$0xff] 0.0
      %308 = vst [vmem:[#allocation2 + $0x20] sm:$0xff] 0.0
      %309 = vst [vmem:[#allocation2 + $0x40] sm:$0xff] 0.0
      %310 = vst [vmem:[#allocation2 + $0x60] sm:$0xff] 0.0
      %311 = vst [vmem:[#allocation2 + $0x18] sm:$0xff] 0.0
      %312 = vst [vmem:[#allocation2 + $0x38] sm:$0xff] 0.0
      %313 = vst [vmem:[#allocation2 + $0x58] sm:$0xff] 0.0
      %314 = vst [vmem:[#allocation2 + $0x78] sm:$0xff] 0.0
      %v315 = vld [vmem:[%s300] sm:$0xff]
      %v316 = vld [vmem:[%s300 + $0x8] sm:$0xff]
      %v317 = vld [vmem:[%s300 + $0x10] sm:$0xff]
      %v318 = vld [vmem:[%s300 + $0x18] sm:$0xff]
      %v319 = vld [vmem:[%s300 + $0x20] sm:$0xff]
      %v320 = vld [vmem:[%s300 + $0x28] sm:$0xff]
      %v321 = vld [vmem:[%s300 + $0x30] sm:$0xff]
      %v322 = vld [vmem:[%s300 + $0x38] sm:$0xff]
      %323 = vst [vmem:[#allocation2 + $0x8] sm:$0xff] %v315
      %324 = vst [vmem:[#allocation2 + $0x10] sm:$0xff] %v316
      %325 = vst [vmem:[#allocation2 + $0x28] sm:$0xff] %v317
      %326 = vst [vmem:[#allocation2 + $0x30] sm:$0xff] %v318
      %327 = vst [vmem:[#allocation2 + $0x48] sm:$0xff] %v319
      %328 = vst [vmem:[#allocation2 + $0x50] sm:$0xff] %v320
      %329 = vst [vmem:[#allocation2 + $0x68] sm:$0xff] %v321
      %330 = vst [vmem:[#allocation2 + $0x70] sm:$0xff] %v322
      %v331 = vld [vmem:[%s1] sm:$0xff]
      %v332 = vld [vmem:[%s1 + $0x8] sm:$0xff]
      %v333 = vld [vmem:[%s1 + $0x10] sm:$0xff]
      %v334 = vld [vmem:[%s1 + $0x18] sm:$0xff]
      %v335 = vld [vmem:[#allocation2] sm:$0xff]
      %v336 = vld [vmem:[#allocation2 + $0x8] sm:$0xff]
      %v337 = vld [vmem:[#allocation2 + $0x10] sm:$0xff]
      %v338 = vld [vmem:[#allocation2 + $0x20] sm:$0xff]
      %v339 = vld [vmem:[#allocation2 + $0x28] sm:$0xff]
      %v340 = vld [vmem:[#allocation2 + $0x30] sm:$0xff]
      %v341 = vld [vmem:[#allocation2 + $0x40] sm:$0xff]
      %v342 = vld [vmem:[#allocation2 + $0x48] sm:$0xff]
      %v343 = vld [vmem:[#allocation2 + $0x50] sm:$0xff]
      %v344 = vld [vmem:[#allocation2 + $0x60] sm:$0xff]
      %v345 = vld [vmem:[#allocation2 + $0x68] sm:$0xff]
      %v346 = vld [vmem:[#allocation2 + $0x70] sm:$0xff]
      %348 = vset.pattern.permute.xlu0 0
      %349 = vperm.xlu0 %348, %v331
      %v350 = vpop.permute.xlu0 %349
      %353 = vset.pattern.permute.xlu0 0
      %354 = vperm.xlu0 %353, %v332
      %v355 = vpop.permute.xlu0 %354
      %358 = vset.pattern.permute.xlu0 0
      %359 = vperm.xlu0 %358, %v333
      %v360 = vpop.permute.xlu0 %359
      %363 = vset.pattern.permute.xlu0 0
      %364 = vperm.xlu0 %363, %v334
      %v365 = vpop.permute.xlu0 %364
      %v367 = vmul.f32 %v350, %v335
      %v368 = vmul.f32 %v350, %v336
      %v369 = vmul.f32 %v350, %v337
      %v370 = vmul.f32 %v355, %v338
      %v371 = vmul.f32 %v355, %v339
      %v372 = vmul.f32 %v355, %v340
      %v373 = vmul.f32 %v360, %v341
      %v374 = vmul.f32 %v360, %v342
      %v375 = vmul.f32 %v360, %v343
      %v376 = vmul.f32 %v365, %v344
      %v377 = vmul.f32 %v365, %v345
      %v378 = vmul.f32 %v365, %v346
      %v379 = vadd.f32 %v367, 0.0
      %v380 = vadd.f32 %v368, 0.0
      %v381 = vadd.f32 %v369, 0.0
      %v382 = vadd.f32 %v370, 0.0
      %v383 = vadd.f32 %v371, 0.0
      %v384 = vadd.f32 %v372, 0.0
      %v385 = vadd.f32 %v373, 0.0
      %v386 = vadd.f32 %v374, 0.0
      %v387 = vadd.f32 %v375, 0.0
      %v388 = vadd.f32 %v376, 0.0
      %v389 = vadd.f32 %v377, 0.0
      %v390 = vadd.f32 %v378, 0.0
      %391 = vset.pattern.permute.xlu0 7
      %392 = vperm.xlu0 %391, %v331
      %v393 = vpop.permute.xlu0 %392
      %395 = vset.pattern.permute.xlu0 7
      %396 = vperm.xlu0 %395, %v332
      %v397 = vpop.permute.xlu0 %396
      %399 = vset.pattern.permute.xlu0 7
      %400 = vperm.xlu0 %399, %v333
      %v401 = vpop.permute.xlu0 %400
      %403 = vset.pattern.permute.xlu0 7
      %404 = vperm.xlu0 %403, %v334
      %v405 = vpop.permute.xlu0 %404
      %v407 = vmul.f32 %v393, %v335
      %v408 = vmul.f32 %v393, %v336
      %v409 = vmul.f32 %v393, %v337
      %v410 = vmul.f32 %v397, %v338
      %v411 = vmul.f32 %v397, %v339
      %v412 = vmul.f32 %v397, %v340
      %v413 = vmul.f32 %v401, %v341
      %v414 = vmul.f32 %v401, %v342
      %v415 = vmul.f32 %v401, %v343
      %v416 = vmul.f32 %v405, %v344
      %v417 = vmul.f32 %v405, %v345
      %v418 = vmul.f32 %v405, %v346
      %431 = vrot.lane.b32.xlu0 %v407, 112
      %v432 = vpop.permute.xlu0 %431
      %433 = vrot.lane.b32.xlu0 %v408, 112
      %v434 = vpop.permute.xlu0 %433
      %435 = vrot.lane.b32.xlu0 %v409, 112
      %v436 = vpop.permute.xlu0 %435
      %437 = vrot.lane.b32.xlu0 %v410, 112
      %v438 = vpop.permute.xlu0 %437
      %439 = vrot.lane.b32.xlu0 %v411, 112
      %v440 = vpop.permute.xlu0 %439
      %441 = vrot.lane.b32.xlu0 %v412, 112
      %v442 = vpop.permute.xlu0 %441
      %443 = vrot.lane.b32.xlu0 %v413, 112
      %v444 = vpop.permute.xlu0 %443
      %445 = vrot.lane.b32.xlu0 %v414, 112
      %v446 = vpop.permute.xlu0 %445
      %447 = vrot.lane.b32.xlu0 %v415, 112
      %v448 = vpop.permute.xlu0 %447
      %449 = vrot.lane.b32.xlu0 %v416, 112
      %v450 = vpop.permute.xlu0 %449
      %451 = vrot.lane.b32.xlu0 %v417, 112
      %v452 = vpop.permute.xlu0 %451
      %453 = vrot.lane.b32.xlu0 %v418, 112
      %v454 = vpop.permute.xlu0 %453
      %vm455 = vcmask 916480
      %v456 = vsel %vm455, %v432, %v434
      %v457 = vsel %vm455, %v434, %v436
      %v458 = vsel %vm455, %v438, %v440
      %v459 = vsel %vm455, %v440, %v442
      %v460 = vsel %vm455, %v444, %v446
      %v461 = vsel %vm455, %v446, %v448
      %v462 = vsel %vm455, %v450, %v452
      %v463 = vsel %vm455, %v452, %v454
      %v476 = vadd.f32 %v379, %v456
      %v477 = vadd.f32 %v380, %v457
      %v478 = vadd.f32 %v381, %v436
      %v479 = vadd.f32 %v382, %v458
      %v480 = vadd.f32 %v383, %v459
      %v481 = vadd.f32 %v384, %v442
      %v482 = vadd.f32 %v385, %v460
      %v483 = vadd.f32 %v386, %v461
      %v484 = vadd.f32 %v387, %v448
      %v485 = vadd.f32 %v388, %v462
      %v486 = vadd.f32 %v389, %v463
      %v487 = vadd.f32 %v390, %v454
      %488 = vset.pattern.permute.xlu0 14
      %489 = vperm.xlu0 %488, %v331
      %v490 = vpop.permute.xlu0 %489
      %492 = vset.pattern.permute.xlu0 14
      %493 = vperm.xlu0 %492, %v332
      %v494 = vpop.permute.xlu0 %493
      %496 = vset.pattern.permute.xlu0 14
      %497 = vperm.xlu0 %496, %v333
      %v498 = vpop.permute.xlu0 %497
      %500 = vset.pattern.permute.xlu0 14
      %501 = vperm.xlu0 %500, %v334
      %v502 = vpop.permute.xlu0 %501
      %v504 = vmul.f32 %v490, %v335
      %v505 = vmul.f32 %v490, %v336
      %v506 = vmul.f32 %v490, %v337
      %v507 = vmul.f32 %v494, %v338
      %v508 = vmul.f32 %v494, %v339
      %v509 = vmul.f32 %v494, %v340
      %v510 = vmul.f32 %v498, %v341
      %v511 = vmul.f32 %v498, %v342
      %v512 = vmul.f32 %v498, %v343
      %v513 = vmul.f32 %v502, %v344
      %v514 = vmul.f32 %v502, %v345
      %v515 = vmul.f32 %v502, %v346
      %528 = vrot.lane.b32.xlu0 %v504, 96
      %v529 = vpop.permute.xlu0 %528
      %530 = vrot.lane.b32.xlu0 %v505, 96
      %v531 = vpop.permute.xlu0 %530
      %532 = vrot.lane.b32.xlu0 %v506, 96
      %v533 = vpop.permute.xlu0 %532
      %534 = vrot.lane.b32.xlu0 %v507, 96
      %v535 = vpop.permute.xlu0 %534
      %536 = vrot.lane.b32.xlu0 %v508, 96
      %v537 = vpop.permute.xlu0 %536
      %538 = vrot.lane.b32.xlu0 %v509, 96
      %v539 = vpop.permute.xlu0 %538
      %540 = vrot.lane.b32.xlu0 %v510, 96
      %v541 = vpop.permute.xlu0 %540
      %542 = vrot.lane.b32.xlu0 %v511, 96
      %v543 = vpop.permute.xlu0 %542
      %544 = vrot.lane.b32.xlu0 %v512, 96
      %v545 = vpop.permute.xlu0 %544
      %546 = vrot.lane.b32.xlu0 %v513, 96
      %v547 = vpop.permute.xlu0 %546
      %548 = vrot.lane.b32.xlu0 %v514, 96
      %v549 = vpop.permute.xlu0 %548
      %550 = vrot.lane.b32.xlu0 %v515, 96
      %v551 = vpop.permute.xlu0 %550
      %vm552 = vcmask 785408
      %v553 = vsel %vm552, %v529, %v531
      %v554 = vsel %vm552, %v531, %v533
      %v555 = vsel %vm552, %v535, %v537
      %v556 = vsel %vm552, %v537, %v539
      %v557 = vsel %vm552, %v541, %v543
      %v558 = vsel %vm552, %v543, %v545
      %v559 = vsel %vm552, %v547, %v549
      %v560 = vsel %vm552, %v549, %v551
      %v573 = vadd.f32 %v476, %v553
      %v574 = vadd.f32 %v477, %v554
      %v575 = vadd.f32 %v478, %v533
      %v576 = vadd.f32 %v479, %v555
      %v577 = vadd.f32 %v480, %v556
      %v578 = vadd.f32 %v481, %v539
      %v579 = vadd.f32 %v482, %v557
      %v580 = vadd.f32 %v483, %v558
      %v581 = vadd.f32 %v484, %v545
      %v582 = vadd.f32 %v485, %v559
      %v583 = vadd.f32 %v486, %v560
      %v584 = vadd.f32 %v487, %v551
      %585 = vset.pattern.permute.xlu0 21
      %586 = vperm.xlu0 %585, %v331
      %v587 = vpop.permute.xlu0 %586
      %589 = vset.pattern.permute.xlu0 21
      %590 = vperm.xlu0 %589, %v332
      %v591 = vpop.permute.xlu0 %590
      %593 = vset.pattern.permute.xlu0 21
      %594 = vperm.xlu0 %593, %v333
      %v595 = vpop.permute.xlu0 %594
      %597 = vset.pattern.permute.xlu0 21
      %598 = vperm.xlu0 %597, %v334
      %v599 = vpop.permute.xlu0 %598
      %v601 = vmul.f32 %v587, %v335
      %v602 = vmul.f32 %v587, %v336
      %v603 = vmul.f32 %v587, %v337
      %v604 = vmul.f32 %v591, %v338
      %v605 = vmul.f32 %v591, %v339
      %v606 = vmul.f32 %v591, %v340
      %v607 = vmul.f32 %v595, %v341
      %v608 = vmul.f32 %v595, %v342
      %v609 = vmul.f32 %v595, %v343
      %v610 = vmul.f32 %v599, %v344
      %v611 = vmul.f32 %v599, %v345
      %v612 = vmul.f32 %v599, %v346
      %625 = vrot.lane.b32.xlu0 %v601, 80
      %v626 = vpop.permute.xlu0 %625
      %627 = vrot.lane.b32.xlu0 %v602, 80
      %v628 = vpop.permute.xlu0 %627
      %629 = vrot.lane.b32.xlu0 %v603, 80
      %v630 = vpop.permute.xlu0 %629
      %631 = vrot.lane.b32.xlu0 %v604, 80
      %v632 = vpop.permute.xlu0 %631
      %633 = vrot.lane.b32.xlu0 %v605, 80
      %v634 = vpop.permute.xlu0 %633
      %635 = vrot.lane.b32.xlu0 %v606, 80
      %v636 = vpop.permute.xlu0 %635
      %637 = vrot.lane.b32.xlu0 %v607, 80
      %v638 = vpop.permute.xlu0 %637
      %639 = vrot.lane.b32.xlu0 %v608, 80
      %v640 = vpop.permute.xlu0 %639
      %641 = vrot.lane.b32.xlu0 %v609, 80
      %v642 = vpop.permute.xlu0 %641
      %643 = vrot.lane.b32.xlu0 %v610, 80
      %v644 = vpop.permute.xlu0 %643
      %645 = vrot.lane.b32.xlu0 %v611, 80
      %v646 = vpop.permute.xlu0 %645
      %647 = vrot.lane.b32.xlu0 %v612, 80
      %v648 = vpop.permute.xlu0 %647
      %vm649 = vcmask 654336
      %v650 = vsel %vm649, %v626, %v628
      %v651 = vsel %vm649, %v628, %v630
      %v652 = vsel %vm649, %v632, %v634
      %v653 = vsel %vm649, %v634, %v636
      %v654 = vsel %vm649, %v638, %v640
      %v655 = vsel %vm649, %v640, %v642
      %v656 = vsel %vm649, %v644, %v646
      %v657 = vsel %vm649, %v646, %v648
      %v670 = vadd.f32 %v573, %v650
      %v671 = vadd.f32 %v574, %v651
      %v672 = vadd.f32 %v575, %v630
      %v673 = vadd.f32 %v576, %v652
      %v674 = vadd.f32 %v577, %v653
      %v675 = vadd.f32 %v578, %v636
      %v676 = vadd.f32 %v579, %v654
      %v677 = vadd.f32 %v580, %v655
      %v678 = vadd.f32 %v581, %v642
      %v679 = vadd.f32 %v582, %v656
      %v680 = vadd.f32 %v583, %v657
      %v681 = vadd.f32 %v584, %v648
      %v682 = vld [vmem:[#allocation2 + $0x8] sm:$0xff]
      %v683 = vld [vmem:[#allocation2 + $0x10] sm:$0xff]
      %v684 = vld [vmem:[#allocation2 + $0x18] sm:$0xff]
      %v685 = vld [vmem:[#allocation2 + $0x28] sm:$0xff]
      %v686 = vld [vmem:[#allocation2 + $0x30] sm:$0xff]
      %v687 = vld [vmem:[#allocation2 + $0x38] sm:$0xff]
      %v688 = vld [vmem:[#allocation2 + $0x48] sm:$0xff]
      %v689 = vld [vmem:[#allocation2 + $0x50] sm:$0xff]
      %v690 = vld [vmem:[#allocation2 + $0x58] sm:$0xff]
      %v691 = vld [vmem:[#allocation2 + $0x68] sm:$0xff]
      %v692 = vld [vmem:[#allocation2 + $0x70] sm:$0xff]
      %v693 = vld [vmem:[#allocation2 + $0x78] sm:$0xff]
      %694 = vset.pattern.permute.xlu0 28
      %695 = vperm.xlu0 %694, %v331
      %v696 = vpop.permute.xlu0 %695
      %698 = vset.pattern.permute.xlu0 28
      %699 = vperm.xlu0 %698, %v332
      %v700 = vpop.permute.xlu0 %699
      %702 = vset.pattern.permute.xlu0 28
      %703 = vperm.xlu0 %702, %v333
      %v704 = vpop.permute.xlu0 %703
      %706 = vset.pattern.permute.xlu0 28
      %707 = vperm.xlu0 %706, %v334
      %v708 = vpop.permute.xlu0 %707
      %v710 = vmul.f32 %v696, %v682
      %v711 = vmul.f32 %v696, %v683
      %v712 = vmul.f32 %v696, %v684
      %v713 = vmul.f32 %v700, %v685
      %v714 = vmul.f32 %v700, %v686
      %v715 = vmul.f32 %v700, %v687
      %v716 = vmul.f32 %v704, %v688
      %v717 = vmul.f32 %v704, %v689
      %v718 = vmul.f32 %v704, %v690
      %v719 = vmul.f32 %v708, %v691
      %v720 = vmul.f32 %v708, %v692
      %v721 = vmul.f32 %v708, %v693
      %734 = vrot.lane.b32.xlu0 %v710, 64
      %v735 = vpop.permute.xlu0 %734
      %736 = vrot.lane.b32.xlu0 %v711, 64
      %v737 = vpop.permute.xlu0 %736
      %738 = vrot.lane.b32.xlu0 %v712, 64
      %v739 = vpop.permute.xlu0 %738
      %740 = vrot.lane.b32.xlu0 %v713, 64
      %v741 = vpop.permute.xlu0 %740
      %742 = vrot.lane.b32.xlu0 %v714, 64
      %v743 = vpop.permute.xlu0 %742
      %744 = vrot.lane.b32.xlu0 %v715, 64
      %v745 = vpop.permute.xlu0 %744
      %746 = vrot.lane.b32.xlu0 %v716, 64
      %v747 = vpop.permute.xlu0 %746
      %748 = vrot.lane.b32.xlu0 %v717, 64
      %v749 = vpop.permute.xlu0 %748
      %750 = vrot.lane.b32.xlu0 %v718, 64
      %v751 = vpop.permute.xlu0 %750
      %752 = vrot.lane.b32.xlu0 %v719, 64
      %v753 = vpop.permute.xlu0 %752
      %754 = vrot.lane.b32.xlu0 %v720, 64
      %v755 = vpop.permute.xlu0 %754
      %756 = vrot.lane.b32.xlu0 %v721, 64
      %v757 = vpop.permute.xlu0 %756
      %vm758 = vcmask 523264
      %v759 = vsel %vm758, %v735, %v737
      %v760 = vsel %vm758, %v737, %v739
      %v761 = vsel %vm758, %v741, %v743
      %v762 = vsel %vm758, %v743, %v745
      %v763 = vsel %vm758, %v747, %v749
      %v764 = vsel %vm758, %v749, %v751
      %v765 = vsel %vm758, %v753, %v755
      %v766 = vsel %vm758, %v755, %v757
      %v779 = vadd.f32 %v670, %v735
      %v780 = vadd.f32 %v671, %v759
      %v781 = vadd.f32 %v672, %v760
      %v782 = vadd.f32 %v673, %v741
      %v783 = vadd.f32 %v674, %v761
      %v784 = vadd.f32 %v675, %v762
      %v785 = vadd.f32 %v676, %v747
      %v786 = vadd.f32 %v677, %v763
      %v787 = vadd.f32 %v678, %v764
      %v788 = vadd.f32 %v679, %v753
      %v789 = vadd.f32 %v680, %v765
      %v790 = vadd.f32 %v681, %v766
      %791 = vset.pattern.permute.xlu0 35
      %792 = vperm.xlu0 %791, %v331
      %v793 = vpop.permute.xlu0 %792
      %795 = vset.pattern.permute.xlu0 35
      %796 = vperm.xlu0 %795, %v332
      %v797 = vpop.permute.xlu0 %796
      %799 = vset.pattern.permute.xlu0 35
      %800 = vperm.xlu0 %799, %v333
      %v801 = vpop.permute.xlu0 %800
      %803 = vset.pattern.permute.xlu0 35
      %804 = vperm.xlu0 %803, %v334
      %v805 = vpop.permute.xlu0 %804
      %v807 = vmul.f32 %v793, %v682
      %v808 = vmul.f32 %v793, %v683
      %v809 = vmul.f32 %v793, %v684
      %v810 = vmul.f32 %v797, %v685
      %v811 = vmul.f32 %v797, %v686
      %v812 = vmul.f32 %v797, %v687
      %v813 = vmul.f32 %v801, %v688
      %v814 = vmul.f32 %v801, %v689
      %v815 = vmul.f32 %v801, %v690
      %v816 = vmul.f32 %v805, %v691
      %v817 = vmul.f32 %v805, %v692
      %v818 = vmul.f32 %v805, %v693
      %831 = vrot.lane.b32.xlu0 %v807, 48
      %v832 = vpop.permute.xlu0 %831
      %833 = vrot.lane.b32.xlu0 %v808, 48
      %v834 = vpop.permute.xlu0 %833
      %835 = vrot.lane.b32.xlu0 %v809, 48
      %v836 = vpop.permute.xlu0 %835
      %837 = vrot.lane.b32.xlu0 %v810, 48
      %v838 = vpop.permute.xlu0 %837
      %839 = vrot.lane.b32.xlu0 %v811, 48
      %v840 = vpop.permute.xlu0 %839
      %841 = vrot.lane.b32.xlu0 %v812, 48
      %v842 = vpop.permute.xlu0 %841
      %843 = vrot.lane.b32.xlu0 %v813, 48
      %v844 = vpop.permute.xlu0 %843
      %845 = vrot.lane.b32.xlu0 %v814, 48
      %v846 = vpop.permute.xlu0 %845
      %847 = vrot.lane.b32.xlu0 %v815, 48
      %v848 = vpop.permute.xlu0 %847
      %849 = vrot.lane.b32.xlu0 %v816, 48
      %v850 = vpop.permute.xlu0 %849
      %851 = vrot.lane.b32.xlu0 %v817, 48
      %v852 = vpop.permute.xlu0 %851
      %853 = vrot.lane.b32.xlu0 %v818, 48
      %v854 = vpop.permute.xlu0 %853
      %vm855 = vcmask 392192
      %v856 = vsel %vm855, %v832, %v834
      %v857 = vsel %vm855, %v834, %v836
      %v858 = vsel %vm855, %v838, %v840
      %v859 = vsel %vm855, %v840, %v842
      %v860 = vsel %vm855, %v844, %v846
      %v861 = vsel %vm855, %v846, %v848
      %v862 = vsel %vm855, %v850, %v852
      %v863 = vsel %vm855, %v852, %v854
      %v876 = vadd.f32 %v779, %v832
      %v877 = vadd.f32 %v780, %v856
      %v878 = vadd.f32 %v781, %v857
      %v879 = vadd.f32 %v782, %v838
      %v880 = vadd.f32 %v783, %v858
      %v881 = vadd.f32 %v784, %v859
      %v882 = vadd.f32 %v785, %v844
      %v883 = vadd.f32 %v786, %v860
      %v884 = vadd.f32 %v787, %v861
      %v885 = vadd.f32 %v788, %v850
      %v886 = vadd.f32 %v789, %v862
      %v887 = vadd.f32 %v790, %v863
      %888 = vset.pattern.permute.xlu0 42
      %889 = vperm.xlu0 %888, %v331
      %v890 = vpop.permute.xlu0 %889
      %892 = vset.pattern.permute.xlu0 42
      %893 = vperm.xlu0 %892, %v332
      %v894 = vpop.permute.xlu0 %893
      %896 = vset.pattern.permute.xlu0 42
      %897 = vperm.xlu0 %896, %v333
      %v898 = vpop.permute.xlu0 %897
      %900 = vset.pattern.permute.xlu0 42
      %901 = vperm.xlu0 %900, %v334
      %v902 = vpop.permute.xlu0 %901
      %v904 = vmul.f32 %v890, %v682
      %v905 = vmul.f32 %v890, %v683
      %v906 = vmul.f32 %v890, %v684
      %v907 = vmul.f32 %v894, %v685
      %v908 = vmul.f32 %v894, %v686
      %v909 = vmul.f32 %v894, %v687
      %v910 = vmul.f32 %v898, %v688
      %v911 = vmul.f32 %v898, %v689
      %v912 = vmul.f32 %v898, %v690
      %v913 = vmul.f32 %v902, %v691
      %v914 = vmul.f32 %v902, %v692
      %v915 = vmul.f32 %v902, %v693
      %928 = vrot.lane.b32.xlu0 %v904, 32
      %v929 = vpop.permute.xlu0 %928
      %930 = vrot.lane.b32.xlu0 %v905, 32
      %v931 = vpop.permute.xlu0 %930
      %932 = vrot.lane.b32.xlu0 %v906, 32
      %v933 = vpop.permute.xlu0 %932
      %934 = vrot.lane.b32.xlu0 %v907, 32
      %v935 = vpop.permute.xlu0 %934
      %936 = vrot.lane.b32.xlu0 %v908, 32
      %v937 = vpop.permute.xlu0 %936
      %938 = vrot.lane.b32.xlu0 %v909, 32
      %v939 = vpop.permute.xlu0 %938
      %940 = vrot.lane.b32.xlu0 %v910, 32
      %v941 = vpop.permute.xlu0 %940
      %942 = vrot.lane.b32.xlu0 %v911, 32
      %v943 = vpop.permute.xlu0 %942
      %944 = vrot.lane.b32.xlu0 %v912, 32
      %v945 = vpop.permute.xlu0 %944
      %946 = vrot.lane.b32.xlu0 %v913, 32
      %v947 = vpop.permute.xlu0 %946
      %948 = vrot.lane.b32.xlu0 %v914, 32
      %v949 = vpop.permute.xlu0 %948
      %950 = vrot.lane.b32.xlu0 %v915, 32
      %v951 = vpop.permute.xlu0 %950
      %vm952 = vcmask 261120
      %v953 = vsel %vm952, %v929, %v931
      %v954 = vsel %vm952, %v931, %v933
      %v955 = vsel %vm952, %v935, %v937
      %v956 = vsel %vm952, %v937, %v939
      %v957 = vsel %vm952, %v941, %v943
      %v958 = vsel %vm952, %v943, %v945
      %v959 = vsel %vm952, %v947, %v949
      %v960 = vsel %vm952, %v949, %v951
      %v973 = vadd.f32 %v876, %v929
      %v974 = vadd.f32 %v877, %v953
      %v975 = vadd.f32 %v878, %v954
      %v976 = vadd.f32 %v879, %v935
      %v977 = vadd.f32 %v880, %v955
      %v978 = vadd.f32 %v881, %v956
      %v979 = vadd.f32 %v882, %v941
      %v980 = vadd.f32 %v883, %v957
      %v981 = vadd.f32 %v884, %v958
      %v982 = vadd.f32 %v885, %v947
      %v983 = vadd.f32 %v886, %v959
      %v984 = vadd.f32 %v887, %v960
      %v985 = vld [vmem:[%s3] ss:$8 sm:$0x3]
      %v987 = vlaneseq
      %v988 = vshrl.u32 %v987, 7
      %v989 = vsub.s32 0, %v988
      %v990 = vrot.slane %v985, %v989
      %v991 = vlaneseq
      %v992 = vshrl.u32 %v991, 7
      %v993 = vsub.s32 1, %v992
      %v994 = vrot.slane %v985, %v993
      %995 = vrot.lane.b32.xlu0 %v990, 77
      %v996 = vpop.permute.xlu0 %995
      %997 = vrot.lane.b32.xlu0 %v994, 77
      %v998 = vpop.permute.xlu0 %997
      %vm999 = vcmask 629760
      %v1000 = vsel %vm999, %v996, %v998
      %v1004 = vmul.f32 %v973, %v996
      %v1005 = vmul.f32 %v974, %v1000
      %v1006 = vmul.f32 %v975, %v998
      %v1007 = vmul.f32 %v976, %v996
      %v1008 = vmul.f32 %v977, %v1000
      %v1009 = vmul.f32 %v978, %v998
      %v1010 = vmul.f32 %v979, %v996
      %v1011 = vmul.f32 %v980, %v1000
      %v1012 = vmul.f32 %v981, %v998
      %v1013 = vmul.f32 %v982, %v996
      %v1014 = vmul.f32 %v983, %v1000
      %v1015 = vmul.f32 %v984, %v998
      %v1016 = vadd.f32 %v1004, 0.0
      %v1017 = vadd.f32 %v1005, 0.0
      %v1018 = vadd.f32 %v1006, 0.0
      %v1019 = vadd.f32 %v1007, 0.0
      %v1020 = vadd.f32 %v1008, 0.0
      %v1021 = vadd.f32 %v1009, 0.0
      %v1022 = vadd.f32 %v1010, 0.0
      %v1023 = vadd.f32 %v1011, 0.0
      %v1024 = vadd.f32 %v1012, 0.0
      %v1025 = vadd.f32 %v1013, 0.0
      %v1026 = vadd.f32 %v1014, 0.0
      %v1027 = vadd.f32 %v1015, 0.0
      %1028 = vset.pattern.permute.xlu0 1
      %1029 = vperm.xlu0 %1028, %v331
      %v1030 = vpop.permute.xlu0 %1029
      %1032 = vset.pattern.permute.xlu0 1
      %1033 = vperm.xlu0 %1032, %v332
      %v1034 = vpop.permute.xlu0 %1033
      %1036 = vset.pattern.permute.xlu0 1
      %1037 = vperm.xlu0 %1036, %v333
      %v1038 = vpop.permute.xlu0 %1037
      %1040 = vset.pattern.permute.xlu0 1
      %1041 = vperm.xlu0 %1040, %v334
      %v1042 = vpop.permute.xlu0 %1041
      %v1044 = vmul.f32 %v1030, %v335
      %v1045 = vmul.f32 %v1030, %v336
      %v1046 = vmul.f32 %v1030, %v337
      %v1047 = vmul.f32 %v1034, %v338
      %v1048 = vmul.f32 %v1034, %v339
      %v1049 = vmul.f32 %v1034, %v340
      %v1050 = vmul.f32 %v1038, %v341
      %v1051 = vmul.f32 %v1038, %v342
      %v1052 = vmul.f32 %v1038, %v343
      %v1053 = vmul.f32 %v1042, %v344
      %v1054 = vmul.f32 %v1042, %v345
      %v1055 = vmul.f32 %v1042, %v346
      %v1056 = vadd.f32 %v1044, 0.0
      %v1057 = vadd.f32 %v1045, 0.0
      %v1058 = vadd.f32 %v1046, 0.0
      %v1059 = vadd.f32 %v1047, 0.0
      %v1060 = vadd.f32 %v1048, 0.0
      %v1061 = vadd.f32 %v1049, 0.0
      %v1062 = vadd.f32 %v1050, 0.0
      %v1063 = vadd.f32 %v1051, 0.0
      %v1064 = vadd.f32 %v1052, 0.0
      %v1065 = vadd.f32 %v1053, 0.0
      %v1066 = vadd.f32 %v1054, 0.0
      %v1067 = vadd.f32 %v1055, 0.0
      %1068 = vset.pattern.permute.xlu0 8
      %1069 = vperm.xlu0 %1068, %v331
      %v1070 = vpop.permute.xlu0 %1069
      %1072 = vset.pattern.permute.xlu0 8
      %1073 = vperm.xlu0 %1072, %v332
      %v1074 = vpop.permute.xlu0 %1073
      %1076 = vset.pattern.permute.xlu0 8
      %1077 = vperm.xlu0 %1076, %v333
      %v1078 = vpop.permute.xlu0 %1077
      %1080 = vset.pattern.permute.xlu0 8
      %1081 = vperm.xlu0 %1080, %v334
      %v1082 = vpop.permute.xlu0 %1081
      %v1084 = vmul.f32 %v1070, %v335
      %v1085 = vmul.f32 %v1070, %v336
      %v1086 = vmul.f32 %v1070, %v337
      %v1087 = vmul.f32 %v1074, %v338
      %v1088 = vmul.f32 %v1074, %v339
      %v1089 = vmul.f32 %v1074, %v340
      %v1090 = vmul.f32 %v1078, %v341
      %v1091 = vmul.f32 %v1078, %v342
      %v1092 = vmul.f32 %v1078, %v343
      %v1093 = vmul.f32 %v1082, %v344
      %v1094 = vmul.f32 %v1082, %v345
      %v1095 = vmul.f32 %v1082, %v346
      %1108 = vrot.lane.b32.xlu0 %v1084, 112
      %v1109 = vpop.permute.xlu0 %1108
      %1110 = vrot.lane.b32.xlu0 %v1085, 112
      %v1111 = vpop.permute.xlu0 %1110
      %1112 = vrot.lane.b32.xlu0 %v1086, 112
      %v1113 = vpop.permute.xlu0 %1112
      %1114 = vrot.lane.b32.xlu0 %v1087, 112
      %v1115 = vpop.permute.xlu0 %1114
      %1116 = vrot.lane.b32.xlu0 %v1088, 112
      %v1117 = vpop.permute.xlu0 %1116
      %1118 = vrot.lane.b32.xlu0 %v1089, 112
      %v1119 = vpop.permute.xlu0 %1118
      %1120 = vrot.lane.b32.xlu0 %v1090, 112
      %v1121 = vpop.permute.xlu0 %1120
      %1122 = vrot.lane.b32.xlu0 %v1091, 112
      %v1123 = vpop.permute.xlu0 %1122
      %1124 = vrot.lane.b32.xlu0 %v1092, 112
      %v1125 = vpop.permute.xlu0 %1124
      %1126 = vrot.lane.b32.xlu0 %v1093, 112
      %v1127 = vpop.permute.xlu0 %1126
      %1128 = vrot.lane.b32.xlu0 %v1094, 112
      %v1129 = vpop.permute.xlu0 %1128
      %1130 = vrot.lane.b32.xlu0 %v1095, 112
      %v1131 = vpop.permute.xlu0 %1130
      %v1132 = vsel %vm455, %v1109, %v1111
      %v1133 = vsel %vm455, %v1111, %v1113
      %v1134 = vsel %vm455, %v1115, %v1117
      %v1135 = vsel %vm455, %v1117, %v1119
      %v1136 = vsel %vm455, %v1121, %v1123
      %v1137 = vsel %vm455, %v1123, %v1125
      %v1138 = vsel %vm455, %v1127, %v1129
      %v1139 = vsel %vm455, %v1129, %v1131
      %v1152 = vadd.f32 %v1056, %v1132
      %v1153 = vadd.f32 %v1057, %v1133
      %v1154 = vadd.f32 %v1058, %v1113
      %v1155 = vadd.f32 %v1059, %v1134
      %v1156 = vadd.f32 %v1060, %v1135
      %v1157 = vadd.f32 %v1061, %v1119
      %v1158 = vadd.f32 %v1062, %v1136
      %v1159 = vadd.f32 %v1063, %v1137
      %v1160 = vadd.f32 %v1064, %v1125
      %v1161 = vadd.f32 %v1065, %v1138
      %v1162 = vadd.f32 %v1066, %v1139
      %v1163 = vadd.f32 %v1067, %v1131
      %1164 = vset.pattern.permute.xlu0 15
      %1165 = vperm.xlu0 %1164, %v331
      %v1166 = vpop.permute.xlu0 %1165
      %1168 = vset.pattern.permute.xlu0 15
      %1169 = vperm.xlu0 %1168, %v332
      %v1170 = vpop.permute.xlu0 %1169
      %1172 = vset.pattern.permute.xlu0 15
      %1173 = vperm.xlu0 %1172, %v333
      %v1174 = vpop.permute.xlu0 %1173
      %1176 = vset.pattern.permute.xlu0 15
      %1177 = vperm.xlu0 %1176, %v334
      %v1178 = vpop.permute.xlu0 %1177
      %v1180 = vmul.f32 %v1166, %v335
      %v1181 = vmul.f32 %v1166, %v336
      %v1182 = vmul.f32 %v1166, %v337
      %v1183 = vmul.f32 %v1170, %v338
      %v1184 = vmul.f32 %v1170, %v339
      %v1185 = vmul.f32 %v1170, %v340
      %v1186 = vmul.f32 %v1174, %v341
      %v1187 = vmul.f32 %v1174, %v342
      %v1188 = vmul.f32 %v1174, %v343
      %v1189 = vmul.f32 %v1178, %v344
      %v1190 = vmul.f32 %v1178, %v345
      %v1191 = vmul.f32 %v1178, %v346
      %1204 = vrot.lane.b32.xlu0 %v1180, 96
      %v1205 = vpop.permute.xlu0 %1204
      %1206 = vrot.lane.b32.xlu0 %v1181, 96
      %v1207 = vpop.permute.xlu0 %1206
      %1208 = vrot.lane.b32.xlu0 %v1182, 96
      %v1209 = vpop.permute.xlu0 %1208
      %1210 = vrot.lane.b32.xlu0 %v1183, 96
      %v1211 = vpop.permute.xlu0 %1210
      %1212 = vrot.lane.b32.xlu0 %v1184, 96
      %v1213 = vpop.permute.xlu0 %1212
      %1214 = vrot.lane.b32.xlu0 %v1185, 96
      %v1215 = vpop.permute.xlu0 %1214
      %1216 = vrot.lane.b32.xlu0 %v1186, 96
      %v1217 = vpop.permute.xlu0 %1216
      %1218 = vrot.lane.b32.xlu0 %v1187, 96
      %v1219 = vpop.permute.xlu0 %1218
      %1220 = vrot.lane.b32.xlu0 %v1188, 96
      %v1221 = vpop.permute.xlu0 %1220
      %1222 = vrot.lane.b32.xlu0 %v1189, 96
      %v1223 = vpop.permute.xlu0 %1222
      %1224 = vrot.lane.b32.xlu0 %v1190, 96
      %v1225 = vpop.permute.xlu0 %1224
      %1226 = vrot.lane.b32.xlu0 %v1191, 96
      %v1227 = vpop.permute.xlu0 %1226
      %v1228 = vsel %vm552, %v1205, %v1207
      %v1229 = vsel %vm552, %v1207, %v1209
      %v1230 = vsel %vm552, %v1211, %v1213
      %v1231 = vsel %vm552, %v1213, %v1215
      %v1232 = vsel %vm552, %v1217, %v1219
      %v1233 = vsel %vm552, %v1219, %v1221
      %v1234 = vsel %vm552, %v1223, %v1225
      %v1235 = vsel %vm552, %v1225, %v1227
      %v1248 = vadd.f32 %v1152, %v1228
      %v1249 = vadd.f32 %v1153, %v1229
      %v1250 = vadd.f32 %v1154, %v1209
      %v1251 = vadd.f32 %v1155, %v1230
      %v1252 = vadd.f32 %v1156, %v1231
      %v1253 = vadd.f32 %v1157, %v1215
      %v1254 = vadd.f32 %v1158, %v1232
      %v1255 = vadd.f32 %v1159, %v1233
      %v1256 = vadd.f32 %v1160, %v1221
      %v1257 = vadd.f32 %v1161, %v1234
      %v1258 = vadd.f32 %v1162, %v1235
      %v1259 = vadd.f32 %v1163, %v1227
      %1260 = vset.pattern.permute.xlu0 22
      %1261 = vperm.xlu0 %1260, %v331
      %v1262 = vpop.permute.xlu0 %1261
      %1264 = vset.pattern.permute.xlu0 22
      %1265 = vperm.xlu0 %1264, %v332
      %v1266 = vpop.permute.xlu0 %1265
      %1268 = vset.pattern.permute.xlu0 22
      %1269 = vperm.xlu0 %1268, %v333
      %v1270 = vpop.permute.xlu0 %1269
      %1272 = vset.pattern.permute.xlu0 22
      %1273 = vperm.xlu0 %1272, %v334
      %v1274 = vpop.permute.xlu0 %1273
      %v1276 = vmul.f32 %v1262, %v335
      %v1277 = vmul.f32 %v1262, %v336
      %v1278 = vmul.f32 %v1262, %v337
      %v1279 = vmul.f32 %v1266, %v338
      %v1280 = vmul.f32 %v1266, %v339
      %v1281 = vmul.f32 %v1266, %v340
      %v1282 = vmul.f32 %v1270, %v341
      %v1283 = vmul.f32 %v1270, %v342
      %v1284 = vmul.f32 %v1270, %v343
      %v1285 = vmul.f32 %v1274, %v344
      %v1286 = vmul.f32 %v1274, %v345
      %v1287 = vmul.f32 %v1274, %v346
      %1300 = vrot.lane.b32.xlu0 %v1276, 80
      %v1301 = vpop.permute.xlu0 %1300
      %1302 = vrot.lane.b32.xlu0 %v1277, 80
      %v1303 = vpop.permute.xlu0 %1302
      %1304 = vrot.lane.b32.xlu0 %v1278, 80
      %v1305 = vpop.permute.xlu0 %1304
      %1306 = vrot.lane.b32.xlu0 %v1279, 80
      %v1307 = vpop.permute.xlu0 %1306
      %1308 = vrot.lane.b32.xlu0 %v1280, 80
      %v1309 = vpop.permute.xlu0 %1308
      %1310 = vrot.lane.b32.xlu0 %v1281, 80
      %v1311 = vpop.permute.xlu0 %1310
      %1312 = vrot.lane.b32.xlu0 %v1282, 80
      %v1313 = vpop.permute.xlu0 %1312
      %1314 = vrot.lane.b32.xlu0 %v1283, 80
      %v1315 = vpop.permute.xlu0 %1314
      %1316 = vrot.lane.b32.xlu0 %v1284, 80
      %v1317 = vpop.permute.xlu0 %1316
      %1318 = vrot.lane.b32.xlu0 %v1285, 80
      %v1319 = vpop.permute.xlu0 %1318
      %1320 = vrot.lane.b32.xlu0 %v1286, 80
      %v1321 = vpop.permute.xlu0 %1320
      %1322 = vrot.lane.b32.xlu0 %v1287, 80
      %v1323 = vpop.permute.xlu0 %1322
      %v1324 = vsel %vm649, %v1301, %v1303
      %v1325 = vsel %vm649, %v1303, %v1305
      %v1326 = vsel %vm649, %v1307, %v1309
      %v1327 = vsel %vm649, %v1309, %v1311
      %v1328 = vsel %vm649, %v1313, %v1315
      %v1329 = vsel %vm649, %v1315, %v1317
      %v1330 = vsel %vm649, %v1319, %v1321
      %v1331 = vsel %vm649, %v1321, %v1323
      %v1344 = vadd.f32 %v1248, %v1324
      %v1345 = vadd.f32 %v1249, %v1325
      %v1346 = vadd.f32 %v1250, %v1305
      %v1347 = vadd.f32 %v1251, %v1326
      %v1348 = vadd.f32 %v1252, %v1327
      %v1349 = vadd.f32 %v1253, %v1311
      %v1350 = vadd.f32 %v1254, %v1328
      %v1351 = vadd.f32 %v1255, %v1329
      %v1352 = vadd.f32 %v1256, %v1317
      %v1353 = vadd.f32 %v1257, %v1330
      %v1354 = vadd.f32 %v1258, %v1331
      %v1355 = vadd.f32 %v1259, %v1323
      %1356 = vset.pattern.permute.xlu0 29
      %1357 = vperm.xlu0 %1356, %v331
      %v1358 = vpop.permute.xlu0 %1357
      %1360 = vset.pattern.permute.xlu0 29
      %1361 = vperm.xlu0 %1360, %v332
      %v1362 = vpop.permute.xlu0 %1361
      %1364 = vset.pattern.permute.xlu0 29
      %1365 = vperm.xlu0 %1364, %v333
      %v1366 = vpop.permute.xlu0 %1365
      %1368 = vset.pattern.permute.xlu0 29
      %1369 = vperm.xlu0 %1368, %v334
      %v1370 = vpop.permute.xlu0 %1369
      %v1372 = vmul.f32 %v1358, %v682
      %v1373 = vmul.f32 %v1358, %v683
      %v1374 = vmul.f32 %v1358, %v684
      %v1375 = vmul.f32 %v1362, %v685
      %v1376 = vmul.f32 %v1362, %v686
      %v1377 = vmul.f32 %v1362, %v687
      %v1378 = vmul.f32 %v1366, %v688
      %v1379 = vmul.f32 %v1366, %v689
      %v1380 = vmul.f32 %v1366, %v690
      %v1381 = vmul.f32 %v1370, %v691
      %v1382 = vmul.f32 %v1370, %v692
      %v1383 = vmul.f32 %v1370, %v693
      %1396 = vrot.lane.b32.xlu0 %v1372, 64
      %v1397 = vpop.permute.xlu0 %1396
      %1398 = vrot.lane.b32.xlu0 %v1373, 64
      %v1399 = vpop.permute.xlu0 %1398
      %1400 = vrot.lane.b32.xlu0 %v1374, 64
      %v1401 = vpop.permute.xlu0 %1400
      %1402 = vrot.lane.b32.xlu0 %v1375, 64
      %v1403 = vpop.permute.xlu0 %1402
      %1404 = vrot.lane.b32.xlu0 %v1376, 64
      %v1405 = vpop.permute.xlu0 %1404
      %1406 = vrot.lane.b32.xlu0 %v1377, 64
      %v1407 = vpop.permute.xlu0 %1406
      %1408 = vrot.lane.b32.xlu0 %v1378, 64
      %v1409 = vpop.permute.xlu0 %1408
      %1410 = vrot.lane.b32.xlu0 %v1379, 64
      %v1411 = vpop.permute.xlu0 %1410
      %1412 = vrot.lane.b32.xlu0 %v1380, 64
      %v1413 = vpop.permute.xlu0 %1412
      %1414 = vrot.lane.b32.xlu0 %v1381, 64
      %v1415 = vpop.permute.xlu0 %1414
      %1416 = vrot.lane.b32.xlu0 %v1382, 64
      %v1417 = vpop.permute.xlu0 %1416
      %1418 = vrot.lane.b32.xlu0 %v1383, 64
      %v1419 = vpop.permute.xlu0 %1418
      %v1420 = vsel %vm758, %v1397, %v1399
      %v1421 = vsel %vm758, %v1399, %v1401
      %v1422 = vsel %vm758, %v1403, %v1405
      %v1423 = vsel %vm758, %v1405, %v1407
      %v1424 = vsel %vm758, %v1409, %v1411
      %v1425 = vsel %vm758, %v1411, %v1413
      %v1426 = vsel %vm758, %v1415, %v1417
      %v1427 = vsel %vm758, %v1417, %v1419
      %v1440 = vadd.f32 %v1344, %v1397
      %v1441 = vadd.f32 %v1345, %v1420
      %v1442 = vadd.f32 %v1346, %v1421
      %v1443 = vadd.f32 %v1347, %v1403
      %v1444 = vadd.f32 %v1348, %v1422
      %v1445 = vadd.f32 %v1349, %v1423
      %v1446 = vadd.f32 %v1350, %v1409
      %v1447 = vadd.f32 %v1351, %v1424
      %v1448 = vadd.f32 %v1352, %v1425
      %v1449 = vadd.f32 %v1353, %v1415
      %v1450 = vadd.f32 %v1354, %v1426
      %v1451 = vadd.f32 %v1355, %v1427
      %1452 = vset.pattern.permute.xlu0 36
      %1453 = vperm.xlu0 %1452, %v331
      %v1454 = vpop.permute.xlu0 %1453
      %1456 = vset.pattern.permute.xlu0 36
      %1457 = vperm.xlu0 %1456, %v332
      %v1458 = vpop.permute.xlu0 %1457
      %1460 = vset.pattern.permute.xlu0 36
      %1461 = vperm.xlu0 %1460, %v333
      %v1462 = vpop.permute.xlu0 %1461
      %1464 = vset.pattern.permute.xlu0 36
      %1465 = vperm.xlu0 %1464, %v334
      %v1466 = vpop.permute.xlu0 %1465
      %v1468 = vmul.f32 %v1454, %v682
      %v1469 = vmul.f32 %v1454, %v683
      %v1470 = vmul.f32 %v1454, %v684
      %v1471 = vmul.f32 %v1458, %v685
      %v1472 = vmul.f32 %v1458, %v686
      %v1473 = vmul.f32 %v1458, %v687
      %v1474 = vmul.f32 %v1462, %v688
      %v1475 = vmul.f32 %v1462, %v689
      %v1476 = vmul.f32 %v1462, %v690
      %v1477 = vmul.f32 %v1466, %v691
      %v1478 = vmul.f32 %v1466, %v692
      %v1479 = vmul.f32 %v1466, %v693
      %1492 = vrot.lane.b32.xlu0 %v1468, 48
      %v1493 = vpop.permute.xlu0 %1492
      %1494 = vrot.lane.b32.xlu0 %v1469, 48
      %v1495 = vpop.permute.xlu0 %1494
      %1496 = vrot.lane.b32.xlu0 %v1470, 48
      %v1497 = vpop.permute.xlu0 %1496
      %1498 = vrot.lane.b32.xlu0 %v1471, 48
      %v1499 = vpop.permute.xlu0 %1498
      %1500 = vrot.lane.b32.xlu0 %v1472, 48
      %v1501 = vpop.permute.xlu0 %1500
      %1502 = vrot.lane.b32.xlu0 %v1473, 48
      %v1503 = vpop.permute.xlu0 %1502
      %1504 = vrot.lane.b32.xlu0 %v1474, 48
      %v1505 = vpop.permute.xlu0 %1504
      %1506 = vrot.lane.b32.xlu0 %v1475, 48
      %v1507 = vpop.permute.xlu0 %1506
      %1508 = vrot.lane.b32.xlu0 %v1476, 48
      %v1509 = vpop.permute.xlu0 %1508
      %1510 = vrot.lane.b32.xlu0 %v1477, 48
      %v1511 = vpop.permute.xlu0 %1510
      %1512 = vrot.lane.b32.xlu0 %v1478, 48
      %v1513 = vpop.permute.xlu0 %1512
      %1514 = vrot.lane.b32.xlu0 %v1479, 48
      %v1515 = vpop.permute.xlu0 %1514
      %v1516 = vsel %vm855, %v1493, %v1495
      %v1517 = vsel %vm855, %v1495, %v1497
      %v1518 = vsel %vm855, %v1499, %v1501
      %v1519 = vsel %vm855, %v1501, %v1503
      %v1520 = vsel %vm855, %v1505, %v1507
      %v1521 = vsel %vm855, %v1507, %v1509
      %v1522 = vsel %vm855, %v1511, %v1513
      %v1523 = vsel %vm855, %v1513, %v1515
      %v1536 = vadd.f32 %v1440, %v1493
      %v1537 = vadd.f32 %v1441, %v1516
      %v1538 = vadd.f32 %v1442, %v1517
      %v1539 = vadd.f32 %v1443, %v1499
      %v1540 = vadd.f32 %v1444, %v1518
      %v1541 = vadd.f32 %v1445, %v1519
      %v1542 = vadd.f32 %v1446, %v1505
      %v1543 = vadd.f32 %v1447, %v1520
      %v1544 = vadd.f32 %v1448, %v1521
      %v1545 = vadd.f32 %v1449, %v1511
      %v1546 = vadd.f32 %v1450, %v1522
      %v1547 = vadd.f32 %v1451, %v1523
      %1548 = vset.pattern.permute.xlu0 43
      %1549 = vperm.xlu0 %1548, %v331
      %v1550 = vpop.permute.xlu0 %1549
      %1552 = vset.pattern.permute.xlu0 43
      %1553 = vperm.xlu0 %1552, %v332
      %v1554 = vpop.permute.xlu0 %1553
      %1556 = vset.pattern.permute.xlu0 43
      %1557 = vperm.xlu0 %1556, %v333
      %v1558 = vpop.permute.xlu0 %1557
      %1560 = vset.pattern.permute.xlu0 43
      %1561 = vperm.xlu0 %1560, %v334
      %v1562 = vpop.permute.xlu0 %1561
      %v1564 = vmul.f32 %v1550, %v682
      %v1565 = vmul.f32 %v1550, %v683
      %v1566 = vmul.f32 %v1550, %v684
      %v1567 = vmul.f32 %v1554, %v685
      %v1568 = vmul.f32 %v1554, %v686
      %v1569 = vmul.f32 %v1554, %v687
      %v1570 = vmul.f32 %v1558, %v688
      %v1571 = vmul.f32 %v1558, %v689
      %v1572 = vmul.f32 %v1558, %v690
      %v1573 = vmul.f32 %v1562, %v691
      %v1574 = vmul.f32 %v1562, %v692
      %v1575 = vmul.f32 %v1562, %v693
      %1588 = vrot.lane.b32.xlu0 %v1564, 32
      %v1589 = vpop.permute.xlu0 %1588
      %1590 = vrot.lane.b32.xlu0 %v1565, 32
      %v1591 = vpop.permute.xlu0 %1590
      %1592 = vrot.lane.b32.xlu0 %v1566, 32
      %v1593 = vpop.permute.xlu0 %1592
      %1594 = vrot.lane.b32.xlu0 %v1567, 32
      %v1595 = vpop.permute.xlu0 %1594
      %1596 = vrot.lane.b32.xlu0 %v1568, 32
      %v1597 = vpop.permute.xlu0 %1596
      %1598 = vrot.lane.b32.xlu0 %v1569, 32
      %v1599 = vpop.permute.xlu0 %1598
      %1600 = vrot.lane.b32.xlu0 %v1570, 32
      %v1601 = vpop.permute.xlu0 %1600
      %1602 = vrot.lane.b32.xlu0 %v1571, 32
      %v1603 = vpop.permute.xlu0 %1602
      %1604 = vrot.lane.b32.xlu0 %v1572, 32
      %v1605 = vpop.permute.xlu0 %1604
      %1606 = vrot.lane.b32.xlu0 %v1573, 32
      %v1607 = vpop.permute.xlu0 %1606
      %1608 = vrot.lane.b32.xlu0 %v1574, 32
      %v1609 = vpop.permute.xlu0 %1608
      %1610 = vrot.lane.b32.xlu0 %v1575, 32
      %v1611 = vpop.permute.xlu0 %1610
      %v1612 = vsel %vm952, %v1589, %v1591
      %v1613 = vsel %vm952, %v1591, %v1593
      %v1614 = vsel %vm952, %v1595, %v1597
      %v1615 = vsel %vm952, %v1597, %v1599
      %v1616 = vsel %vm952, %v1601, %v1603
      %v1617 = vsel %vm952, %v1603, %v1605
      %v1618 = vsel %vm952, %v1607, %v1609
      %v1619 = vsel %vm952, %v1609, %v1611
      %v1632 = vadd.f32 %v1536, %v1589
      %v1633 = vadd.f32 %v1537, %v1612
      %v1634 = vadd.f32 %v1538, %v1613
      %v1635 = vadd.f32 %v1539, %v1595
      %v1636 = vadd.f32 %v1540, %v1614
      %v1637 = vadd.f32 %v1541, %v1615
      %v1638 = vadd.f32 %v1542, %v1601
      %v1639 = vadd.f32 %v1543, %v1616
      %v1640 = vadd.f32 %v1544, %v1617
      %v1641 = vadd.f32 %v1545, %v1607
      %v1642 = vadd.f32 %v1546, %v1618
      %v1643 = vadd.f32 %v1547, %v1619
      %s1644 = scalar_lea.vmem %s3, 1
      %v1645 = vld [vmem:[%s1644] ss:$8 sm:$0x3]
      %v1647 = vlaneseq
      %v1648 = vshrl.u32 %v1647, 7
      %v1649 = vsub.s32 0, %v1648
      %v1650 = vrot.slane %v1645, %v1649
      %v1651 = vlaneseq
      %v1652 = vshrl.u32 %v1651, 7
      %v1653 = vsub.s32 1, %v1652
      %v1654 = vrot.slane %v1645, %v1653
      %1655 = vrot.lane.b32.xlu0 %v1650, 78
      %v1656 = vpop.permute.xlu0 %1655
      %1657 = vrot.lane.b32.xlu0 %v1654, 78
      %v1658 = vpop.permute.xlu0 %1657
      %vm1659 = vcmask 637952
      %v1660 = vsel %vm1659, %v1656, %v1658
      %v1664 = vmul.f32 %v1632, %v1656
      %v1665 = vmul.f32 %v1633, %v1660
      %v1666 = vmul.f32 %v1634, %v1658
      %v1667 = vmul.f32 %v1635, %v1656
      %v1668 = vmul.f32 %v1636, %v1660
      %v1669 = vmul.f32 %v1637, %v1658
      %v1670 = vmul.f32 %v1638, %v1656
      %v1671 = vmul.f32 %v1639, %v1660
      %v1672 = vmul.f32 %v1640, %v1658
      %v1673 = vmul.f32 %v1641, %v1656
      %v1674 = vmul.f32 %v1642, %v1660
      %v1675 = vmul.f32 %v1643, %v1658
      %1688 = vrot.lane.b32.xlu0 %v1664, 127
      %v1689 = vpop.permute.xlu0 %1688
      %1690 = vrot.lane.b32.xlu0 %v1665, 127
      %v1691 = vpop.permute.xlu0 %1690
      %1692 = vrot.lane.b32.xlu0 %v1666, 127
      %v1693 = vpop.permute.xlu0 %1692
      %1694 = vrot.lane.b32.xlu0 %v1667, 127
      %v1695 = vpop.permute.xlu0 %1694
      %1696 = vrot.lane.b32.xlu0 %v1668, 127
      %v1697 = vpop.permute.xlu0 %1696
      %1698 = vrot.lane.b32.xlu0 %v1669, 127
      %v1699 = vpop.permute.xlu0 %1698
      %1700 = vrot.lane.b32.xlu0 %v1670, 127
      %v1701 = vpop.permute.xlu0 %1700
      %1702 = vrot.lane.b32.xlu0 %v1671, 127
      %v1703 = vpop.permute.xlu0 %1702
      %1704 = vrot.lane.b32.xlu0 %v1672, 127
      %v1705 = vpop.permute.xlu0 %1704
      %1706 = vrot.lane.b32.xlu0 %v1673, 127
      %v1707 = vpop.permute.xlu0 %1706
      %1708 = vrot.lane.b32.xlu0 %v1674, 127
      %v1709 = vpop.permute.xlu0 %1708
      %1710 = vrot.lane.b32.xlu0 %v1675, 127
      %v1711 = vpop.permute.xlu0 %1710
      %vm1712 = vcmask 1039360
      %v1713 = vsel %vm1712, %v1689, %v1691
      %v1714 = vsel %vm1712, %v1691, %v1693
      %v1715 = vsel %vm1712, %v1695, %v1697
      %v1716 = vsel %vm1712, %v1697, %v1699
      %v1717 = vsel %vm1712, %v1701, %v1703
      %v1718 = vsel %vm1712, %v1703, %v1705
      %v1719 = vsel %vm1712, %v1707, %v1709
      %v1720 = vsel %vm1712, %v1709, %v1711
      %v1733 = vadd.f32 %v1016, %v1713
      %v1734 = vadd.f32 %v1017, %v1714
      %v1735 = vadd.f32 %v1018, %v1693
      %v1736 = vadd.f32 %v1019, %v1715
      %v1737 = vadd.f32 %v1020, %v1716
      %v1738 = vadd.f32 %v1021, %v1699
      %v1739 = vadd.f32 %v1022, %v1717
      %v1740 = vadd.f32 %v1023, %v1718
      %v1741 = vadd.f32 %v1024, %v1705
      %v1742 = vadd.f32 %v1025, %v1719
      %v1743 = vadd.f32 %v1026, %v1720
      %v1744 = vadd.f32 %v1027, %v1711
      %1745 = vset.pattern.permute.xlu0 2
      %1746 = vperm.xlu0 %1745, %v331
      %v1747 = vpop.permute.xlu0 %1746
      %1749 = vset.pattern.permute.xlu0 2
      %1750 = vperm.xlu0 %1749, %v332
      %v1751 = vpop.permute.xlu0 %1750
      %1753 = vset.pattern.permute.xlu0 2
      %1754 = vperm.xlu0 %1753, %v333
      %v1755 = vpop.permute.xlu0 %1754
      %1757 = vset.pattern.permute.xlu0 2
      %1758 = vperm.xlu0 %1757, %v334
      %v1759 = vpop.permute.xlu0 %1758
      %v1761 = vmul.f32 %v1747, %v335
      %v1762 = vmul.f32 %v1747, %v336
      %v1763 = vmul.f32 %v1747, %v337
      %v1764 = vmul.f32 %v1751, %v338
      %v1765 = vmul.f32 %v1751, %v339
      %v1766 = vmul.f32 %v1751, %v340
      %v1767 = vmul.f32 %v1755, %v341
      %v1768 = vmul.f32 %v1755, %v342
      %v1769 = vmul.f32 %v1755, %v343
      %v1770 = vmul.f32 %v1759, %v344
      %v1771 = vmul.f32 %v1759, %v345
      %v1772 = vmul.f32 %v1759, %v346
      %v1773 = vadd.f32 %v1761, 0.0
      %v1774 = vadd.f32 %v1762, 0.0
      %v1775 = vadd.f32 %v1763, 0.0
      %v1776 = vadd.f32 %v1764, 0.0
      %v1777 = vadd.f32 %v1765, 0.0
      %v1778 = vadd.f32 %v1766, 0.0
      %v1779 = vadd.f32 %v1767, 0.0
      %v1780 = vadd.f32 %v1768, 0.0
      %v1781 = vadd.f32 %v1769, 0.0
      %v1782 = vadd.f32 %v1770, 0.0
      %v1783 = vadd.f32 %v1771, 0.0
      %v1784 = vadd.f32 %v1772, 0.0
      %1785 = vset.pattern.permute.xlu0 9
      %1786 = vperm.xlu0 %1785, %v331
      %v1787 = vpop.permute.xlu0 %1786
      %1789 = vset.pattern.permute.xlu0 9
      %1790 = vperm.xlu0 %1789, %v332
      %v1791 = vpop.permute.xlu0 %1790
      %1793 = vset.pattern.permute.xlu0 9
      %1794 = vperm.xlu0 %1793, %v333
      %v1795 = vpop.permute.xlu0 %1794
      %1797 = vset.pattern.permute.xlu0 9
      %1798 = vperm.xlu0 %1797, %v334
      %v1799 = vpop.permute.xlu0 %1798
      %v1801 = vmul.f32 %v1787, %v335
      %v1802 = vmul.f32 %v1787, %v336
      %v1803 = vmul.f32 %v1787, %v337
      %v1804 = vmul.f32 %v1791, %v338
      %v1805 = vmul.f32 %v1791, %v339
      %v1806 = vmul.f32 %v1791, %v340
      %v1807 = vmul.f32 %v1795, %v341
      %v1808 = vmul.f32 %v1795, %v342
      %v1809 = vmul.f32 %v1795, %v343
      %v1810 = vmul.f32 %v1799, %v344
      %v1811 = vmul.f32 %v1799, %v345
      %v1812 = vmul.f32 %v1799, %v346
      %1825 = vrot.lane.b32.xlu0 %v1801, 112
      %v1826 = vpop.permute.xlu0 %1825
      %1827 = vrot.lane.b32.xlu0 %v1802, 112
      %v1828 = vpop.permute.xlu0 %1827
      %1829 = vrot.lane.b32.xlu0 %v1803, 112
      %v1830 = vpop.permute.xlu0 %1829
      %1831 = vrot.lane.b32.xlu0 %v1804, 112
      %v1832 = vpop.permute.xlu0 %1831
      %1833 = vrot.lane.b32.xlu0 %v1805, 112
      %v1834 = vpop.permute.xlu0 %1833
      %1835 = vrot.lane.b32.xlu0 %v1806, 112
      %v1836 = vpop.permute.xlu0 %1835
      %1837 = vrot.lane.b32.xlu0 %v1807, 112
      %v1838 = vpop.permute.xlu0 %1837
      %1839 = vrot.lane.b32.xlu0 %v1808, 112
      %v1840 = vpop.permute.xlu0 %1839
      %1841 = vrot.lane.b32.xlu0 %v1809, 112
      %v1842 = vpop.permute.xlu0 %1841
      %1843 = vrot.lane.b32.xlu0 %v1810, 112
      %v1844 = vpop.permute.xlu0 %1843
      %1845 = vrot.lane.b32.xlu0 %v1811, 112
      %v1846 = vpop.permute.xlu0 %1845
      %1847 = vrot.lane.b32.xlu0 %v1812, 112
      %v1848 = vpop.permute.xlu0 %1847
      %v1849 = vsel %vm455, %v1826, %v1828
      %v1850 = vsel %vm455, %v1828, %v1830
      %v1851 = vsel %vm455, %v1832, %v1834
      %v1852 = vsel %vm455, %v1834, %v1836
      %v1853 = vsel %vm455, %v1838, %v1840
      %v1854 = vsel %vm455, %v1840, %v1842
      %v1855 = vsel %vm455, %v1844, %v1846
      %v1856 = vsel %vm455, %v1846, %v1848
      %v1869 = vadd.f32 %v1773, %v1849
      %v1870 = vadd.f32 %v1774, %v1850
      %v1871 = vadd.f32 %v1775, %v1830
      %v1872 = vadd.f32 %v1776, %v1851
      %v1873 = vadd.f32 %v1777, %v1852
      %v1874 = vadd.f32 %v1778, %v1836
      %v1875 = vadd.f32 %v1779, %v1853
      %v1876 = vadd.f32 %v1780, %v1854
      %v1877 = vadd.f32 %v1781, %v1842
      %v1878 = vadd.f32 %v1782, %v1855
      %v1879 = vadd.f32 %v1783, %v1856
      %v1880 = vadd.f32 %v1784, %v1848
      %1881 = vset.pattern.permute.xlu0 16
      %1882 = vperm.xlu0 %1881, %v331
      %v1883 = vpop.permute.xlu0 %1882
      %1885 = vset.pattern.permute.xlu0 16
      %1886 = vperm.xlu0 %1885, %v332
      %v1887 = vpop.permute.xlu0 %1886
      %1889 = vset.pattern.permute.xlu0 16
      %1890 = vperm.xlu0 %1889, %v333
      %v1891 = vpop.permute.xlu0 %1890
      %1893 = vset.pattern.permute.xlu0 16
      %1894 = vperm.xlu0 %1893, %v334
      %v1895 = vpop.permute.xlu0 %1894
      %v1897 = vmul.f32 %v1883, %v335
      %v1898 = vmul.f32 %v1883, %v336
      %v1899 = vmul.f32 %v1883, %v337
      %v1900 = vmul.f32 %v1887, %v338
      %v1901 = vmul.f32 %v1887, %v339
      %v1902 = vmul.f32 %v1887, %v340
      %v1903 = vmul.f32 %v1891, %v341
      %v1904 = vmul.f32 %v1891, %v342
      %v1905 = vmul.f32 %v1891, %v343
      %v1906 = vmul.f32 %v1895, %v344
      %v1907 = vmul.f32 %v1895, %v345
      %v1908 = vmul.f32 %v1895, %v346
      %1921 = vrot.lane.b32.xlu0 %v1897, 96
      %v1922 = vpop.permute.xlu0 %1921
      %1923 = vrot.lane.b32.xlu0 %v1898, 96
      %v1924 = vpop.permute.xlu0 %1923
      %1925 = vrot.lane.b32.xlu0 %v1899, 96
      %v1926 = vpop.permute.xlu0 %1925
      %1927 = vrot.lane.b32.xlu0 %v1900, 96
      %v1928 = vpop.permute.xlu0 %1927
      %1929 = vrot.lane.b32.xlu0 %v1901, 96
      %v1930 = vpop.permute.xlu0 %1929
      %1931 = vrot.lane.b32.xlu0 %v1902, 96
      %v1932 = vpop.permute.xlu0 %1931
      %1933 = vrot.lane.b32.xlu0 %v1903, 96
      %v1934 = vpop.permute.xlu0 %1933
      %1935 = vrot.lane.b32.xlu0 %v1904, 96
      %v1936 = vpop.permute.xlu0 %1935
      %1937 = vrot.lane.b32.xlu0 %v1905, 96
      %v1938 = vpop.permute.xlu0 %1937
      %1939 = vrot.lane.b32.xlu0 %v1906, 96
      %v1940 = vpop.permute.xlu0 %1939
      %1941 = vrot.lane.b32.xlu0 %v1907, 96
      %v1942 = vpop.permute.xlu0 %1941
      %1943 = vrot.lane.b32.xlu0 %v1908, 96
      %v1944 = vpop.permute.xlu0 %1943
      %v1945 = vsel %vm552, %v1922, %v1924
      %v1946 = vsel %vm552, %v1924, %v1926
      %v1947 = vsel %vm552, %v1928, %v1930
      %v1948 = vsel %vm552, %v1930, %v1932
      %v1949 = vsel %vm552, %v1934, %v1936
      %v1950 = vsel %vm552, %v1936, %v1938
      %v1951 = vsel %vm552, %v1940, %v1942
      %v1952 = vsel %vm552, %v1942, %v1944
      %v1965 = vadd.f32 %v1869, %v1945
      %v1966 = vadd.f32 %v1870, %v1946
      %v1967 = vadd.f32 %v1871, %v1926
      %v1968 = vadd.f32 %v1872, %v1947
      %v1969 = vadd.f32 %v1873, %v1948
      %v1970 = vadd.f32 %v1874, %v1932
      %v1971 = vadd.f32 %v1875, %v1949
      %v1972 = vadd.f32 %v1876, %v1950
      %v1973 = vadd.f32 %v1877, %v1938
      %v1974 = vadd.f32 %v1878, %v1951
      %v1975 = vadd.f32 %v1879, %v1952
      %v1976 = vadd.f32 %v1880, %v1944
      %1977 = vset.pattern.permute.xlu0 23
      %1978 = vperm.xlu0 %1977, %v331
      %v1979 = vpop.permute.xlu0 %1978
      %1981 = vset.pattern.permute.xlu0 23
      %1982 = vperm.xlu0 %1981, %v332
      %v1983 = vpop.permute.xlu0 %1982
      %1985 = vset.pattern.permute.xlu0 23
      %1986 = vperm.xlu0 %1985, %v333
      %v1987 = vpop.permute.xlu0 %1986
      %1989 = vset.pattern.permute.xlu0 23
      %1990 = vperm.xlu0 %1989, %v334
      %v1991 = vpop.permute.xlu0 %1990
      %v1993 = vmul.f32 %v1979, %v335
      %v1994 = vmul.f32 %v1979, %v336
      %v1995 = vmul.f32 %v1979, %v337
      %v1996 = vmul.f32 %v1983, %v338
      %v1997 = vmul.f32 %v1983, %v339
      %v1998 = vmul.f32 %v1983, %v340
      %v1999 = vmul.f32 %v1987, %v341
      %v2000 = vmul.f32 %v1987, %v342
      %v2001 = vmul.f32 %v1987, %v343
      %v2002 = vmul.f32 %v1991, %v344
      %v2003 = vmul.f32 %v1991, %v345
      %v2004 = vmul.f32 %v1991, %v346
      %2017 = vrot.lane.b32.xlu0 %v1993, 80
      %v2018 = vpop.permute.xlu0 %2017
      %2019 = vrot.lane.b32.xlu0 %v1994, 80
      %v2020 = vpop.permute.xlu0 %2019
      %2021 = vrot.lane.b32.xlu0 %v1995, 80
      %v2022 = vpop.permute.xlu0 %2021
      %2023 = vrot.lane.b32.xlu0 %v1996, 80
      %v2024 = vpop.permute.xlu0 %2023
      %2025 = vrot.lane.b32.xlu0 %v1997, 80
      %v2026 = vpop.permute.xlu0 %2025
      %2027 = vrot.lane.b32.xlu0 %v1998, 80
      %v2028 = vpop.permute.xlu0 %2027
      %2029 = vrot.lane.b32.xlu0 %v1999, 80
      %v2030 = vpop.permute.xlu0 %2029
      %2031 = vrot.lane.b32.xlu0 %v2000, 80
      %v2032 = vpop.permute.xlu0 %2031
      %2033 = vrot.lane.b32.xlu0 %v2001, 80
      %v2034 = vpop.permute.xlu0 %2033
      %2035 = vrot.lane.b32.xlu0 %v2002, 80
      %v2036 = vpop.permute.xlu0 %2035
      %2037 = vrot.lane.b32.xlu0 %v2003, 80
      %v2038 = vpop.permute.xlu0 %2037
      %2039 = vrot.lane.b32.xlu0 %v2004, 80
      %v2040 = vpop.permute.xlu0 %2039
      %v2041 = vsel %vm649, %v2018, %v2020
      %v2042 = vsel %vm649, %v2020, %v2022
      %v2043 = vsel %vm649, %v2024, %v2026
      %v2044 = vsel %vm649, %v2026, %v2028
      %v2045 = vsel %vm649, %v2030, %v2032
      %v2046 = vsel %vm649, %v2032, %v2034
      %v2047 = vsel %vm649, %v2036, %v2038
      %v2048 = vsel %vm649, %v2038, %v2040
      %v2061 = vadd.f32 %v1965, %v2041
      %v2062 = vadd.f32 %v1966, %v2042
      %v2063 = vadd.f32 %v1967, %v2022
      %v2064 = vadd.f32 %v1968, %v2043
      %v2065 = vadd.f32 %v1969, %v2044
      %v2066 = vadd.f32 %v1970, %v2028
      %v2067 = vadd.f32 %v1971, %v2045
      %v2068 = vadd.f32 %v1972, %v2046
      %v2069 = vadd.f32 %v1973, %v2034
      %v2070 = vadd.f32 %v1974, %v2047
      %v2071 = vadd.f32 %v1975, %v2048
      %v2072 = vadd.f32 %v1976, %v2040
      %2073 = vset.pattern.permute.xlu0 30
      %2074 = vperm.xlu0 %2073, %v331
      %v2075 = vpop.permute.xlu0 %2074
      %2077 = vset.pattern.permute.xlu0 30
      %2078 = vperm.xlu0 %2077, %v332
      %v2079 = vpop.permute.xlu0 %2078
      %2081 = vset.pattern.permute.xlu0 30
      %2082 = vperm.xlu0 %2081, %v333
      %v2083 = vpop.permute.xlu0 %2082
      %2085 = vset.pattern.permute.xlu0 30
      %2086 = vperm.xlu0 %2085, %v334
      %v2087 = vpop.permute.xlu0 %2086
      %v2089 = vmul.f32 %v2075, %v682
      %v2090 = vmul.f32 %v2075, %v683
      %v2091 = vmul.f32 %v2075, %v684
      %v2092 = vmul.f32 %v2079, %v685
      %v2093 = vmul.f32 %v2079, %v686
      %v2094 = vmul.f32 %v2079, %v687
      %v2095 = vmul.f32 %v2083, %v688
      %v2096 = vmul.f32 %v2083, %v689
      %v2097 = vmul.f32 %v2083, %v690
      %v2098 = vmul.f32 %v2087, %v691
      %v2099 = vmul.f32 %v2087, %v692
      %v2100 = vmul.f32 %v2087, %v693
      %2113 = vrot.lane.b32.xlu0 %v2089, 64
      %v2114 = vpop.permute.xlu0 %2113
      %2115 = vrot.lane.b32.xlu0 %v2090, 64
      %v2116 = vpop.permute.xlu0 %2115
      %2117 = vrot.lane.b32.xlu0 %v2091, 64
      %v2118 = vpop.permute.xlu0 %2117
      %2119 = vrot.lane.b32.xlu0 %v2092, 64
      %v2120 = vpop.permute.xlu0 %2119
      %2121 = vrot.lane.b32.xlu0 %v2093, 64
      %v2122 = vpop.permute.xlu0 %2121
      %2123 = vrot.lane.b32.xlu0 %v2094, 64
      %v2124 = vpop.permute.xlu0 %2123
      %2125 = vrot.lane.b32.xlu0 %v2095, 64
      %v2126 = vpop.permute.xlu0 %2125
      %2127 = vrot.lane.b32.xlu0 %v2096, 64
      %v2128 = vpop.permute.xlu0 %2127
      %2129 = vrot.lane.b32.xlu0 %v2097, 64
      %v2130 = vpop.permute.xlu0 %2129
      %2131 = vrot.lane.b32.xlu0 %v2098, 64
      %v2132 = vpop.permute.xlu0 %2131
      %2133 = vrot.lane.b32.xlu0 %v2099, 64
      %v2134 = vpop.permute.xlu0 %2133
      %2135 = vrot.lane.b32.xlu0 %v2100, 64
      %v2136 = vpop.permute.xlu0 %2135
      %v2137 = vsel %vm758, %v2114, %v2116
      %v2138 = vsel %vm758, %v2116, %v2118
      %v2139 = vsel %vm758, %v2120, %v2122
      %v2140 = vsel %vm758, %v2122, %v2124
      %v2141 = vsel %vm758, %v2126, %v2128
      %v2142 = vsel %vm758, %v2128, %v2130
      %v2143 = vsel %vm758, %v2132, %v2134
      %v2144 = vsel %vm758, %v2134, %v2136
      %v2157 = vadd.f32 %v2061, %v2114
      %v2158 = vadd.f32 %v2062, %v2137
      %v2159 = vadd.f32 %v2063, %v2138
      %v2160 = vadd.f32 %v2064, %v2120
      %v2161 = vadd.f32 %v2065, %v2139
      %v2162 = vadd.f32 %v2066, %v2140
      %v2163 = vadd.f32 %v2067, %v2126
      %v2164 = vadd.f32 %v2068, %v2141
      %v2165 = vadd.f32 %v2069, %v2142
      %v2166 = vadd.f32 %v2070, %v2132
      %v2167 = vadd.f32 %v2071, %v2143
      %v2168 = vadd.f32 %v2072, %v2144
      %2169 = vset.pattern.permute.xlu0 37
      %2170 = vperm.xlu0 %2169, %v331
      %v2171 = vpop.permute.xlu0 %2170
      %2173 = vset.pattern.permute.xlu0 37
      %2174 = vperm.xlu0 %2173, %v332
      %v2175 = vpop.permute.xlu0 %2174
      %2177 = vset.pattern.permute.xlu0 37
      %2178 = vperm.xlu0 %2177, %v333
      %v2179 = vpop.permute.xlu0 %2178
      %2181 = vset.pattern.permute.xlu0 37
      %2182 = vperm.xlu0 %2181, %v334
      %v2183 = vpop.permute.xlu0 %2182
      %v2185 = vmul.f32 %v2171, %v682
      %v2186 = vmul.f32 %v2171, %v683
      %v2187 = vmul.f32 %v2171, %v684
      %v2188 = vmul.f32 %v2175, %v685
      %v2189 = vmul.f32 %v2175, %v686
      %v2190 = vmul.f32 %v2175, %v687
      %v2191 = vmul.f32 %v2179, %v688
      %v2192 = vmul.f32 %v2179, %v689
      %v2193 = vmul.f32 %v2179, %v690
      %v2194 = vmul.f32 %v2183, %v691
      %v2195 = vmul.f32 %v2183, %v692
      %v2196 = vmul.f32 %v2183, %v693
      %2209 = vrot.lane.b32.xlu0 %v2185, 48
      %v2210 = vpop.permute.xlu0 %2209
      %2211 = vrot.lane.b32.xlu0 %v2186, 48
      %v2212 = vpop.permute.xlu0 %2211
      %2213 = vrot.lane.b32.xlu0 %v2187, 48
      %v2214 = vpop.permute.xlu0 %2213
      %2215 = vrot.lane.b32.xlu0 %v2188, 48
      %v2216 = vpop.permute.xlu0 %2215
      %2217 = vrot.lane.b32.xlu0 %v2189, 48
      %v2218 = vpop.permute.xlu0 %2217
      %2219 = vrot.lane.b32.xlu0 %v2190, 48
      %v2220 = vpop.permute.xlu0 %2219
      %2221 = vrot.lane.b32.xlu0 %v2191, 48
      %v2222 = vpop.permute.xlu0 %2221
      %2223 = vrot.lane.b32.xlu0 %v2192, 48
      %v2224 = vpop.permute.xlu0 %2223
      %2225 = vrot.lane.b32.xlu0 %v2193, 48
      %v2226 = vpop.permute.xlu0 %2225
      %2227 = vrot.lane.b32.xlu0 %v2194, 48
      %v2228 = vpop.permute.xlu0 %2227
      %2229 = vrot.lane.b32.xlu0 %v2195, 48
      %v2230 = vpop.permute.xlu0 %2229
      %2231 = vrot.lane.b32.xlu0 %v2196, 48
      %v2232 = vpop.permute.xlu0 %2231
      %v2233 = vsel %vm855, %v2210, %v2212
      %v2234 = vsel %vm855, %v2212, %v2214
      %v2235 = vsel %vm855, %v2216, %v2218
      %v2236 = vsel %vm855, %v2218, %v2220
      %v2237 = vsel %vm855, %v2222, %v2224
      %v2238 = vsel %vm855, %v2224, %v2226
      %v2239 = vsel %vm855, %v2228, %v2230
      %v2240 = vsel %vm855, %v2230, %v2232
      %v2253 = vadd.f32 %v2157, %v2210
      %v2254 = vadd.f32 %v2158, %v2233
      %v2255 = vadd.f32 %v2159, %v2234
      %v2256 = vadd.f32 %v2160, %v2216
      %v2257 = vadd.f32 %v2161, %v2235
      %v2258 = vadd.f32 %v2162, %v2236
      %v2259 = vadd.f32 %v2163, %v2222
      %v2260 = vadd.f32 %v2164, %v2237
      %v2261 = vadd.f32 %v2165, %v2238
      %v2262 = vadd.f32 %v2166, %v2228
      %v2263 = vadd.f32 %v2167, %v2239
      %v2264 = vadd.f32 %v2168, %v2240
      %2265 = vset.pattern.permute.xlu0 44
      %2266 = vperm.xlu0 %2265, %v331
      %v2267 = vpop.permute.xlu0 %2266
      %2269 = vset.pattern.permute.xlu0 44
      %2270 = vperm.xlu0 %2269, %v332
      %v2271 = vpop.permute.xlu0 %2270
      %2273 = vset.pattern.permute.xlu0 44
      %2274 = vperm.xlu0 %2273, %v333
      %v2275 = vpop.permute.xlu0 %2274
      %2277 = vset.pattern.permute.xlu0 44
      %2278 = vperm.xlu0 %2277, %v334
      %v2279 = vpop.permute.xlu0 %2278
      %v2281 = vmul.f32 %v2267, %v682
      %v2282 = vmul.f32 %v2267, %v683
      %v2283 = vmul.f32 %v2267, %v684
      %v2284 = vmul.f32 %v2271, %v685
      %v2285 = vmul.f32 %v2271, %v686
      %v2286 = vmul.f32 %v2271, %v687
      %v2287 = vmul.f32 %v2275, %v688
      %v2288 = vmul.f32 %v2275, %v689
      %v2289 = vmul.f32 %v2275, %v690
      %v2290 = vmul.f32 %v2279, %v691
      %v2291 = vmul.f32 %v2279, %v692
      %v2292 = vmul.f32 %v2279, %v693
      %2305 = vrot.lane.b32.xlu0 %v2281, 32
      %v2306 = vpop.permute.xlu0 %2305
      %2307 = vrot.lane.b32.xlu0 %v2282, 32
      %v2308 = vpop.permute.xlu0 %2307
      %2309 = vrot.lane.b32.xlu0 %v2283, 32
      %v2310 = vpop.permute.xlu0 %2309
      %2311 = vrot.lane.b32.xlu0 %v2284, 32
      %v2312 = vpop.permute.xlu0 %2311
      %2313 = vrot.lane.b32.xlu0 %v2285, 32
      %v2314 = vpop.permute.xlu0 %2313
      %2315 = vrot.lane.b32.xlu0 %v2286, 32
      %v2316 = vpop.permute.xlu0 %2315
      %2317 = vrot.lane.b32.xlu0 %v2287, 32
      %v2318 = vpop.permute.xlu0 %2317
      %2319 = vrot.lane.b32.xlu0 %v2288, 32
      %v2320 = vpop.permute.xlu0 %2319
      %2321 = vrot.lane.b32.xlu0 %v2289, 32
      %v2322 = vpop.permute.xlu0 %2321
      %2323 = vrot.lane.b32.xlu0 %v2290, 32
      %v2324 = vpop.permute.xlu0 %2323
      %2325 = vrot.lane.b32.xlu0 %v2291, 32
      %v2326 = vpop.permute.xlu0 %2325
      %2327 = vrot.lane.b32.xlu0 %v2292, 32
      %v2328 = vpop.permute.xlu0 %2327
      %v2329 = vsel %vm952, %v2306, %v2308
      %v2330 = vsel %vm952, %v2308, %v2310
      %v2331 = vsel %vm952, %v2312, %v2314
      %v2332 = vsel %vm952, %v2314, %v2316
      %v2333 = vsel %vm952, %v2318, %v2320
      %v2334 = vsel %vm952, %v2320, %v2322
      %v2335 = vsel %vm952, %v2324, %v2326
      %v2336 = vsel %vm952, %v2326, %v2328
      %v2349 = vadd.f32 %v2253, %v2306
      %v2350 = vadd.f32 %v2254, %v2329
      %v2351 = vadd.f32 %v2255, %v2330
      %v2352 = vadd.f32 %v2256, %v2312
      %v2353 = vadd.f32 %v2257, %v2331
      %v2354 = vadd.f32 %v2258, %v2332
      %v2355 = vadd.f32 %v2259, %v2318
      %v2356 = vadd.f32 %v2260, %v2333
      %v2357 = vadd.f32 %v2261, %v2334
      %v2358 = vadd.f32 %v2262, %v2324
      %v2359 = vadd.f32 %v2263, %v2335
      %v2360 = vadd.f32 %v2264, %v2336
      %s2361 = scalar_lea.vmem %s3, 2
      %v2362 = vld [vmem:[%s2361] ss:$8 sm:$0x3]
      %v2364 = vlaneseq
      %v2365 = vshrl.u32 %v2364, 7
      %v2366 = vsub.s32 0, %v2365
      %v2367 = vrot.slane %v2362, %v2366
      %v2368 = vlaneseq
      %v2369 = vshrl.u32 %v2368, 7
      %v2370 = vsub.s32 1, %v2369
      %v2371 = vrot.slane %v2362, %v2370
      %2372 = vrot.lane.b32.xlu0 %v2367, 79
      %v2373 = vpop.permute.xlu0 %2372
      %2374 = vrot.lane.b32.xlu0 %v2371, 79
      %v2375 = vpop.permute.xlu0 %2374
      %vm2376 = vcmask 646144
      %v2377 = vsel %vm2376, %v2373, %v2375
      %v2381 = vmul.f32 %v2349, %v2373
      %v2382 = vmul.f32 %v2350, %v2377
      %v2383 = vmul.f32 %v2351, %v2375
      %v2384 = vmul.f32 %v2352, %v2373
      %v2385 = vmul.f32 %v2353, %v2377
      %v2386 = vmul.f32 %v2354, %v2375
      %v2387 = vmul.f32 %v2355, %v2373
      %v2388 = vmul.f32 %v2356, %v2377
      %v2389 = vmul.f32 %v2357, %v2375
      %v2390 = vmul.f32 %v2358, %v2373
      %v2391 = vmul.f32 %v2359, %v2377
      %v2392 = vmul.f32 %v2360, %v2375
      %2405 = vrot.lane.b32.xlu0 %v2381, 126
      %v2406 = vpop.permute.xlu0 %2405
      %2407 = vrot.lane.b32.xlu0 %v2382, 126
      %v2408 = vpop.permute.xlu0 %2407
      %2409 = vrot.lane.b32.xlu0 %v2383, 126
      %v2410 = vpop.permute.xlu0 %2409
      %2411 = vrot.lane.b32.xlu0 %v2384, 126
      %v2412 = vpop.permute.xlu0 %2411
      %2413 = vrot.lane.b32.xlu0 %v2385, 126
      %v2414 = vpop.permute.xlu0 %2413
      %2415 = vrot.lane.b32.xlu0 %v2386, 126
      %v2416 = vpop.permute.xlu0 %2415
      %2417 = vrot.lane.b32.xlu0 %v2387, 126
      %v2418 = vpop.permute.xlu0 %2417
      %2419 = vrot.lane.b32.xlu0 %v2388, 126
      %v2420 = vpop.permute.xlu0 %2419
      %2421 = vrot.lane.b32.xlu0 %v2389, 126
      %v2422 = vpop.permute.xlu0 %2421
      %2423 = vrot.lane.b32.xlu0 %v2390, 126
      %v2424 = vpop.permute.xlu0 %2423
      %2425 = vrot.lane.b32.xlu0 %v2391, 126
      %v2426 = vpop.permute.xlu0 %2425
      %2427 = vrot.lane.b32.xlu0 %v2392, 126
      %v2428 = vpop.permute.xlu0 %2427
      %vm2429 = vcmask 1031168
      %v2430 = vsel %vm2429, %v2406, %v2408
      %v2431 = vsel %vm2429, %v2408, %v2410
      %v2432 = vsel %vm2429, %v2412, %v2414
      %v2433 = vsel %vm2429, %v2414, %v2416
      %v2434 = vsel %vm2429, %v2418, %v2420
      %v2435 = vsel %vm2429, %v2420, %v2422
      %v2436 = vsel %vm2429, %v2424, %v2426
      %v2437 = vsel %vm2429, %v2426, %v2428
      %v2450 = vadd.f32 %v1733, %v2430
      %v2451 = vadd.f32 %v1734, %v2431
      %v2452 = vadd.f32 %v1735, %v2410
      %v2453 = vadd.f32 %v1736, %v2432
      %v2454 = vadd.f32 %v1737, %v2433
      %v2455 = vadd.f32 %v1738, %v2416
      %v2456 = vadd.f32 %v1739, %v2434
      %v2457 = vadd.f32 %v1740, %v2435
      %v2458 = vadd.f32 %v1741, %v2422
      %v2459 = vadd.f32 %v1742, %v2436
      %v2460 = vadd.f32 %v1743, %v2437
      %v2461 = vadd.f32 %v1744, %v2428
      %2462 = vset.pattern.permute.xlu0 3
      %2463 = vperm.xlu0 %2462, %v331
      %v2464 = vpop.permute.xlu0 %2463
      %2466 = vset.pattern.permute.xlu0 3
      %2467 = vperm.xlu0 %2466, %v332
      %v2468 = vpop.permute.xlu0 %2467
      %2470 = vset.pattern.permute.xlu0 3
      %2471 = vperm.xlu0 %2470, %v333
      %v2472 = vpop.permute.xlu0 %2471
      %2474 = vset.pattern.permute.xlu0 3
      %2475 = vperm.xlu0 %2474, %v334
      %v2476 = vpop.permute.xlu0 %2475
      %v2478 = vmul.f32 %v2464, %v335
      %v2479 = vmul.f32 %v2464, %v336
      %v2480 = vmul.f32 %v2464, %v337
      %v2481 = vmul.f32 %v2468, %v338
      %v2482 = vmul.f32 %v2468, %v339
      %v2483 = vmul.f32 %v2468, %v340
      %v2484 = vmul.f32 %v2472, %v341
      %v2485 = vmul.f32 %v2472, %v342
      %v2486 = vmul.f32 %v2472, %v343
      %v2487 = vmul.f32 %v2476, %v344
      %v2488 = vmul.f32 %v2476, %v345
      %v2489 = vmul.f32 %v2476, %v346
      %v2490 = vadd.f32 %v2478, 0.0
      %v2491 = vadd.f32 %v2479, 0.0
      %v2492 = vadd.f32 %v2480, 0.0
      %v2493 = vadd.f32 %v2481, 0.0
      %v2494 = vadd.f32 %v2482, 0.0
      %v2495 = vadd.f32 %v2483, 0.0
      %v2496 = vadd.f32 %v2484, 0.0
      %v2497 = vadd.f32 %v2485, 0.0
      %v2498 = vadd.f32 %v2486, 0.0
      %v2499 = vadd.f32 %v2487, 0.0
      %v2500 = vadd.f32 %v2488, 0.0
      %v2501 = vadd.f32 %v2489, 0.0
      %2502 = vset.pattern.permute.xlu0 10
      %2503 = vperm.xlu0 %2502, %v331
      %v2504 = vpop.permute.xlu0 %2503
      %2506 = vset.pattern.permute.xlu0 10
      %2507 = vperm.xlu0 %2506, %v332
      %v2508 = vpop.permute.xlu0 %2507
      %2510 = vset.pattern.permute.xlu0 10
      %2511 = vperm.xlu0 %2510, %v333
      %v2512 = vpop.permute.xlu0 %2511
      %2514 = vset.pattern.permute.xlu0 10
      %2515 = vperm.xlu0 %2514, %v334
      %v2516 = vpop.permute.xlu0 %2515
      %v2518 = vmul.f32 %v2504, %v335
      %v2519 = vmul.f32 %v2504, %v336
      %v2520 = vmul.f32 %v2504, %v337
      %v2521 = vmul.f32 %v2508, %v338
      %v2522 = vmul.f32 %v2508, %v339
      %v2523 = vmul.f32 %v2508, %v340
      %v2524 = vmul.f32 %v2512, %v341
      %v2525 = vmul.f32 %v2512, %v342
      %v2526 = vmul.f32 %v2512, %v343
      %v2527 = vmul.f32 %v2516, %v344
      %v2528 = vmul.f32 %v2516, %v345
      %v2529 = vmul.f32 %v2516, %v346
      %2542 = vrot.lane.b32.xlu0 %v2518, 112
      %v2543 = vpop.permute.xlu0 %2542
      %2544 = vrot.lane.b32.xlu0 %v2519, 112
      %v2545 = vpop.permute.xlu0 %2544
      %2546 = vrot.lane.b32.xlu0 %v2520, 112
      %v2547 = vpop.permute.xlu0 %2546
      %2548 = vrot.lane.b32.xlu0 %v2521, 112
      %v2549 = vpop.permute.xlu0 %2548
      %2550 = vrot.lane.b32.xlu0 %v2522, 112
      %v2551 = vpop.permute.xlu0 %2550
      %2552 = vrot.lane.b32.xlu0 %v2523, 112
      %v2553 = vpop.permute.xlu0 %2552
      %2554 = vrot.lane.b32.xlu0 %v2524, 112
      %v2555 = vpop.permute.xlu0 %2554
      %2556 = vrot.lane.b32.xlu0 %v2525, 112
      %v2557 = vpop.permute.xlu0 %2556
      %2558 = vrot.lane.b32.xlu0 %v2526, 112
      %v2559 = vpop.permute.xlu0 %2558
      %2560 = vrot.lane.b32.xlu0 %v2527, 112
      %v2561 = vpop.permute.xlu0 %2560
      %2562 = vrot.lane.b32.xlu0 %v2528, 112
      %v2563 = vpop.permute.xlu0 %2562
      %2564 = vrot.lane.b32.xlu0 %v2529, 112
      %v2565 = vpop.permute.xlu0 %2564
      %v2566 = vsel %vm455, %v2543, %v2545
      %v2567 = vsel %vm455, %v2545, %v2547
      %v2568 = vsel %vm455, %v2549, %v2551
      %v2569 = vsel %vm455, %v2551, %v2553
      %v2570 = vsel %vm455, %v2555, %v2557
      %v2571 = vsel %vm455, %v2557, %v2559
      %v2572 = vsel %vm455, %v2561, %v2563
      %v2573 = vsel %vm455, %v2563, %v2565
      %v2586 = vadd.f32 %v2490, %v2566
      %v2587 = vadd.f32 %v2491, %v2567
      %v2588 = vadd.f32 %v2492, %v2547
      %v2589 = vadd.f32 %v2493, %v2568
      %v2590 = vadd.f32 %v2494, %v2569
      %v2591 = vadd.f32 %v2495, %v2553
      %v2592 = vadd.f32 %v2496, %v2570
      %v2593 = vadd.f32 %v2497, %v2571
      %v2594 = vadd.f32 %v2498, %v2559
      %v2595 = vadd.f32 %v2499, %v2572
      %v2596 = vadd.f32 %v2500, %v2573
      %v2597 = vadd.f32 %v2501, %v2565
      %2598 = vset.pattern.permute.xlu0 17
      %2599 = vperm.xlu0 %2598, %v331
      %v2600 = vpop.permute.xlu0 %2599
      %2602 = vset.pattern.permute.xlu0 17
      %2603 = vperm.xlu0 %2602, %v332
      %v2604 = vpop.permute.xlu0 %2603
      %2606 = vset.pattern.permute.xlu0 17
      %2607 = vperm.xlu0 %2606, %v333
      %v2608 = vpop.permute.xlu0 %2607
      %2610 = vset.pattern.permute.xlu0 17
      %2611 = vperm.xlu0 %2610, %v334
      %v2612 = vpop.permute.xlu0 %2611
      %v2614 = vmul.f32 %v2600, %v335
      %v2615 = vmul.f32 %v2600, %v336
      %v2616 = vmul.f32 %v2600, %v337
      %v2617 = vmul.f32 %v2604, %v338
      %v2618 = vmul.f32 %v2604, %v339
      %v2619 = vmul.f32 %v2604, %v340
      %v2620 = vmul.f32 %v2608, %v341
      %v2621 = vmul.f32 %v2608, %v342
      %v2622 = vmul.f32 %v2608, %v343
      %v2623 = vmul.f32 %v2612, %v344
      %v2624 = vmul.f32 %v2612, %v345
      %v2625 = vmul.f32 %v2612, %v346
      %2638 = vrot.lane.b32.xlu0 %v2614, 96
      %v2639 = vpop.permute.xlu0 %2638
      %2640 = vrot.lane.b32.xlu0 %v2615, 96
      %v2641 = vpop.permute.xlu0 %2640
      %2642 = vrot.lane.b32.xlu0 %v2616, 96
      %v2643 = vpop.permute.xlu0 %2642
      %2644 = vrot.lane.b32.xlu0 %v2617, 96
      %v2645 = vpop.permute.xlu0 %2644
      %2646 = vrot.lane.b32.xlu0 %v2618, 96
      %v2647 = vpop.permute.xlu0 %2646
      %2648 = vrot.lane.b32.xlu0 %v2619, 96
      %v2649 = vpop.permute.xlu0 %2648
      %2650 = vrot.lane.b32.xlu0 %v2620, 96
      %v2651 = vpop.permute.xlu0 %2650
      %2652 = vrot.lane.b32.xlu0 %v2621, 96
      %v2653 = vpop.permute.xlu0 %2652
      %2654 = vrot.lane.b32.xlu0 %v2622, 96
      %v2655 = vpop.permute.xlu0 %2654
      %2656 = vrot.lane.b32.xlu0 %v2623, 96
      %v2657 = vpop.permute.xlu0 %2656
      %2658 = vrot.lane.b32.xlu0 %v2624, 96
      %v2659 = vpop.permute.xlu0 %2658
      %2660 = vrot.lane.b32.xlu0 %v2625, 96
      %v2661 = vpop.permute.xlu0 %2660
      %v2662 = vsel %vm552, %v2639, %v2641
      %v2663 = vsel %vm552, %v2641, %v2643
      %v2664 = vsel %vm552, %v2645, %v2647
      %v2665 = vsel %vm552, %v2647, %v2649
      %v2666 = vsel %vm552, %v2651, %v2653
      %v2667 = vsel %vm552, %v2653, %v2655
      %v2668 = vsel %vm552, %v2657, %v2659
      %v2669 = vsel %vm552, %v2659, %v2661
      %v2682 = vadd.f32 %v2586, %v2662
      %v2683 = vadd.f32 %v2587, %v2663
      %v2684 = vadd.f32 %v2588, %v2643
      %v2685 = vadd.f32 %v2589, %v2664
      %v2686 = vadd.f32 %v2590, %v2665
      %v2687 = vadd.f32 %v2591, %v2649
      %v2688 = vadd.f32 %v2592, %v2666
      %v2689 = vadd.f32 %v2593, %v2667
      %v2690 = vadd.f32 %v2594, %v2655
      %v2691 = vadd.f32 %v2595, %v2668
      %v2692 = vadd.f32 %v2596, %v2669
      %v2693 = vadd.f32 %v2597, %v2661
      %2694 = vset.pattern.permute.xlu0 24
      %2695 = vperm.xlu0 %2694, %v331
      %v2696 = vpop.permute.xlu0 %2695
      %2698 = vset.pattern.permute.xlu0 24
      %2699 = vperm.xlu0 %2698, %v332
      %v2700 = vpop.permute.xlu0 %2699
      %2702 = vset.pattern.permute.xlu0 24
      %2703 = vperm.xlu0 %2702, %v333
      %v2704 = vpop.permute.xlu0 %2703
      %2706 = vset.pattern.permute.xlu0 24
      %2707 = vperm.xlu0 %2706, %v334
      %v2708 = vpop.permute.xlu0 %2707
      %v2710 = vmul.f32 %v2696, %v336
      %v2711 = vmul.f32 %v2696, %v337
      %v2712 = vmul.f32 %v2700, %v339
      %v2713 = vmul.f32 %v2700, %v340
      %v2714 = vmul.f32 %v2704, %v342
      %v2715 = vmul.f32 %v2704, %v343
      %v2716 = vmul.f32 %v2708, %v345
      %v2717 = vmul.f32 %v2708, %v346
      %2726 = vrot.lane.b32.xlu0 %v2710, 80
      %v2727 = vpop.permute.xlu0 %2726
      %2728 = vrot.lane.b32.xlu0 %v2711, 80
      %v2729 = vpop.permute.xlu0 %2728
      %2730 = vrot.lane.b32.xlu0 %v2712, 80
      %v2731 = vpop.permute.xlu0 %2730
      %2732 = vrot.lane.b32.xlu0 %v2713, 80
      %v2733 = vpop.permute.xlu0 %2732
      %2734 = vrot.lane.b32.xlu0 %v2714, 80
      %v2735 = vpop.permute.xlu0 %2734
      %2736 = vrot.lane.b32.xlu0 %v2715, 80
      %v2737 = vpop.permute.xlu0 %2736
      %2738 = vrot.lane.b32.xlu0 %v2716, 80
      %v2739 = vpop.permute.xlu0 %2738
      %2740 = vrot.lane.b32.xlu0 %v2717, 80
      %v2741 = vpop.permute.xlu0 %2740
      %v2742 = vsel %vm649, %v2727, %v2729
      %v2743 = vsel %vm649, %v2731, %v2733
      %v2744 = vsel %vm649, %v2735, %v2737
      %v2745 = vsel %vm649, %v2739, %v2741
      %v2758 = vadd.f32 %v2682, %v2727
      %v2759 = vadd.f32 %v2683, %v2742
      %v2760 = vadd.f32 %v2684, %v2729
      %v2761 = vadd.f32 %v2685, %v2731
      %v2762 = vadd.f32 %v2686, %v2743
      %v2763 = vadd.f32 %v2687, %v2733
      %v2764 = vadd.f32 %v2688, %v2735
      %v2765 = vadd.f32 %v2689, %v2744
      %v2766 = vadd.f32 %v2690, %v2737
      %v2767 = vadd.f32 %v2691, %v2739
      %v2768 = vadd.f32 %v2692, %v2745
      %v2769 = vadd.f32 %v2693, %v2741
      %2770 = vset.pattern.permute.xlu0 31
      %2771 = vperm.xlu0 %2770, %v331
      %v2772 = vpop.permute.xlu0 %2771
      %2774 = vset.pattern.permute.xlu0 31
      %2775 = vperm.xlu0 %2774, %v332
      %v2776 = vpop.permute.xlu0 %2775
      %2778 = vset.pattern.permute.xlu0 31
      %2779 = vperm.xlu0 %2778, %v333
      %v2780 = vpop.permute.xlu0 %2779
      %2782 = vset.pattern.permute.xlu0 31
      %2783 = vperm.xlu0 %2782, %v334
      %v2784 = vpop.permute.xlu0 %2783
      %v2786 = vmul.f32 %v2772, %v682
      %v2787 = vmul.f32 %v2772, %v683
      %v2788 = vmul.f32 %v2772, %v684
      %v2789 = vmul.f32 %v2776, %v685
      %v2790 = vmul.f32 %v2776, %v686
      %v2791 = vmul.f32 %v2776, %v687
      %v2792 = vmul.f32 %v2780, %v688
      %v2793 = vmul.f32 %v2780, %v689
      %v2794 = vmul.f32 %v2780, %v690
      %v2795 = vmul.f32 %v2784, %v691
      %v2796 = vmul.f32 %v2784, %v692
      %v2797 = vmul.f32 %v2784, %v693
      %2810 = vrot.lane.b32.xlu0 %v2786, 64
      %v2811 = vpop.permute.xlu0 %2810
      %2812 = vrot.lane.b32.xlu0 %v2787, 64
      %v2813 = vpop.permute.xlu0 %2812
      %2814 = vrot.lane.b32.xlu0 %v2788, 64
      %v2815 = vpop.permute.xlu0 %2814
      %2816 = vrot.lane.b32.xlu0 %v2789, 64
      %v2817 = vpop.permute.xlu0 %2816
      %2818 = vrot.lane.b32.xlu0 %v2790, 64
      %v2819 = vpop.permute.xlu0 %2818
      %2820 = vrot.lane.b32.xlu0 %v2791, 64
      %v2821 = vpop.permute.xlu0 %2820
      %2822 = vrot.lane.b32.xlu0 %v2792, 64
      %v2823 = vpop.permute.xlu0 %2822
      %2824 = vrot.lane.b32.xlu0 %v2793, 64
      %v2825 = vpop.permute.xlu0 %2824
      %2826 = vrot.lane.b32.xlu0 %v2794, 64
      %v2827 = vpop.permute.xlu0 %2826
      %2828 = vrot.lane.b32.xlu0 %v2795, 64
      %v2829 = vpop.permute.xlu0 %2828
      %2830 = vrot.lane.b32.xlu0 %v2796, 64
      %v2831 = vpop.permute.xlu0 %2830
      %2832 = vrot.lane.b32.xlu0 %v2797, 64
      %v2833 = vpop.permute.xlu0 %2832
      %v2834 = vsel %vm758, %v2811, %v2813
      %v2835 = vsel %vm758, %v2813, %v2815
      %v2836 = vsel %vm758, %v2817, %v2819
      %v2837 = vsel %vm758, %v2819, %v2821
      %v2838 = vsel %vm758, %v2823, %v2825
      %v2839 = vsel %vm758, %v2825, %v2827
      %v2840 = vsel %vm758, %v2829, %v2831
      %v2841 = vsel %vm758, %v2831, %v2833
      %v2854 = vadd.f32 %v2758, %v2811
      %v2855 = vadd.f32 %v2759, %v2834
      %v2856 = vadd.f32 %v2760, %v2835
      %v2857 = vadd.f32 %v2761, %v2817
      %v2858 = vadd.f32 %v2762, %v2836
      %v2859 = vadd.f32 %v2763, %v2837
      %v2860 = vadd.f32 %v2764, %v2823
      %v2861 = vadd.f32 %v2765, %v2838
      %v2862 = vadd.f32 %v2766, %v2839
      %v2863 = vadd.f32 %v2767, %v2829
      %v2864 = vadd.f32 %v2768, %v2840
      %v2865 = vadd.f32 %v2769, %v2841
      %2866 = vset.pattern.permute.xlu0 38
      %2867 = vperm.xlu0 %2866, %v331
      %v2868 = vpop.permute.xlu0 %2867
      %2870 = vset.pattern.permute.xlu0 38
      %2871 = vperm.xlu0 %2870, %v332
      %v2872 = vpop.permute.xlu0 %2871
      %2874 = vset.pattern.permute.xlu0 38
      %2875 = vperm.xlu0 %2874, %v333
      %v2876 = vpop.permute.xlu0 %2875
      %2878 = vset.pattern.permute.xlu0 38
      %2879 = vperm.xlu0 %2878, %v334
      %v2880 = vpop.permute.xlu0 %2879
      %v2882 = vmul.f32 %v2868, %v682
      %v2883 = vmul.f32 %v2868, %v683
      %v2884 = vmul.f32 %v2868, %v684
      %v2885 = vmul.f32 %v2872, %v685
      %v2886 = vmul.f32 %v2872, %v686
      %v2887 = vmul.f32 %v2872, %v687
      %v2888 = vmul.f32 %v2876, %v688
      %v2889 = vmul.f32 %v2876, %v689
      %v2890 = vmul.f32 %v2876, %v690
      %v2891 = vmul.f32 %v2880, %v691
      %v2892 = vmul.f32 %v2880, %v692
      %v2893 = vmul.f32 %v2880, %v693
      %2906 = vrot.lane.b32.xlu0 %v2882, 48
      %v2907 = vpop.permute.xlu0 %2906
      %2908 = vrot.lane.b32.xlu0 %v2883, 48
      %v2909 = vpop.permute.xlu0 %2908
      %2910 = vrot.lane.b32.xlu0 %v2884, 48
      %v2911 = vpop.permute.xlu0 %2910
      %2912 = vrot.lane.b32.xlu0 %v2885, 48
      %v2913 = vpop.permute.xlu0 %2912
      %2914 = vrot.lane.b32.xlu0 %v2886, 48
      %v2915 = vpop.permute.xlu0 %2914
      %2916 = vrot.lane.b32.xlu0 %v2887, 48
      %v2917 = vpop.permute.xlu0 %2916
      %2918 = vrot.lane.b32.xlu0 %v2888, 48
      %v2919 = vpop.permute.xlu0 %2918
      %2920 = vrot.lane.b32.xlu0 %v2889, 48
      %v2921 = vpop.permute.xlu0 %2920
      %2922 = vrot.lane.b32.xlu0 %v2890, 48
      %v2923 = vpop.permute.xlu0 %2922
      %2924 = vrot.lane.b32.xlu0 %v2891, 48
      %v2925 = vpop.permute.xlu0 %2924
      %2926 = vrot.lane.b32.xlu0 %v2892, 48
      %v2927 = vpop.permute.xlu0 %2926
      %2928 = vrot.lane.b32.xlu0 %v2893, 48
      %v2929 = vpop.permute.xlu0 %2928
      %v2930 = vsel %vm855, %v2907, %v2909
      %v2931 = vsel %vm855, %v2909, %v2911
      %v2932 = vsel %vm855, %v2913, %v2915
      %v2933 = vsel %vm855, %v2915, %v2917
      %v2934 = vsel %vm855, %v2919, %v2921
      %v2935 = vsel %vm855, %v2921, %v2923
      %v2936 = vsel %vm855, %v2925, %v2927
      %v2937 = vsel %vm855, %v2927, %v2929
      %v2950 = vadd.f32 %v2854, %v2907
      %v2951 = vadd.f32 %v2855, %v2930
      %v2952 = vadd.f32 %v2856, %v2931
      %v2953 = vadd.f32 %v2857, %v2913
      %v2954 = vadd.f32 %v2858, %v2932
      %v2955 = vadd.f32 %v2859, %v2933
      %v2956 = vadd.f32 %v2860, %v2919
      %v2957 = vadd.f32 %v2861, %v2934
      %v2958 = vadd.f32 %v2862, %v2935
      %v2959 = vadd.f32 %v2863, %v2925
      %v2960 = vadd.f32 %v2864, %v2936
      %v2961 = vadd.f32 %v2865, %v2937
      %2962 = vset.pattern.permute.xlu0 45
      %2963 = vperm.xlu0 %2962, %v331
      %v2964 = vpop.permute.xlu0 %2963
      %2966 = vset.pattern.permute.xlu0 45
      %2967 = vperm.xlu0 %2966, %v332
      %v2968 = vpop.permute.xlu0 %2967
      %2970 = vset.pattern.permute.xlu0 45
      %2971 = vperm.xlu0 %2970, %v333
      %v2972 = vpop.permute.xlu0 %2971
      %2974 = vset.pattern.permute.xlu0 45
      %2975 = vperm.xlu0 %2974, %v334
      %v2976 = vpop.permute.xlu0 %2975
      %v2978 = vmul.f32 %v2964, %v682
      %v2979 = vmul.f32 %v2964, %v683
      %v2980 = vmul.f32 %v2964, %v684
      %v2981 = vmul.f32 %v2968, %v685
      %v2982 = vmul.f32 %v2968, %v686
      %v2983 = vmul.f32 %v2968, %v687
      %v2984 = vmul.f32 %v2972, %v688
      %v2985 = vmul.f32 %v2972, %v689
      %v2986 = vmul.f32 %v2972, %v690
      %v2987 = vmul.f32 %v2976, %v691
      %v2988 = vmul.f32 %v2976, %v692
      %v2989 = vmul.f32 %v2976, %v693
      %3002 = vrot.lane.b32.xlu0 %v2978, 32
      %v3003 = vpop.permute.xlu0 %3002
      %3004 = vrot.lane.b32.xlu0 %v2979, 32
      %v3005 = vpop.permute.xlu0 %3004
      %3006 = vrot.lane.b32.xlu0 %v2980, 32
      %v3007 = vpop.permute.xlu0 %3006
      %3008 = vrot.lane.b32.xlu0 %v2981, 32
      %v3009 = vpop.permute.xlu0 %3008
      %3010 = vrot.lane.b32.xlu0 %v2982, 32
      %v3011 = vpop.permute.xlu0 %3010
      %3012 = vrot.lane.b32.xlu0 %v2983, 32
      %v3013 = vpop.permute.xlu0 %3012
      %3014 = vrot.lane.b32.xlu0 %v2984, 32
      %v3015 = vpop.permute.xlu0 %3014
      %3016 = vrot.lane.b32.xlu0 %v2985, 32
      %v3017 = vpop.permute.xlu0 %3016
      %3018 = vrot.lane.b32.xlu0 %v2986, 32
      %v3019 = vpop.permute.xlu0 %3018
      %3020 = vrot.lane.b32.xlu0 %v2987, 32
      %v3021 = vpop.permute.xlu0 %3020
      %3022 = vrot.lane.b32.xlu0 %v2988, 32
      %v3023 = vpop.permute.xlu0 %3022
      %3024 = vrot.lane.b32.xlu0 %v2989, 32
      %v3025 = vpop.permute.xlu0 %3024
      %v3026 = vsel %vm952, %v3003, %v3005
      %v3027 = vsel %vm952, %v3005, %v3007
      %v3028 = vsel %vm952, %v3009, %v3011
      %v3029 = vsel %vm952, %v3011, %v3013
      %v3030 = vsel %vm952, %v3015, %v3017
      %v3031 = vsel %vm952, %v3017, %v3019
      %v3032 = vsel %vm952, %v3021, %v3023
      %v3033 = vsel %vm952, %v3023, %v3025
      %v3046 = vadd.f32 %v2950, %v3003
      %v3047 = vadd.f32 %v2951, %v3026
      %v3048 = vadd.f32 %v2952, %v3027
      %v3049 = vadd.f32 %v2953, %v3009
      %v3050 = vadd.f32 %v2954, %v3028
      %v3051 = vadd.f32 %v2955, %v3029
      %v3052 = vadd.f32 %v2956, %v3015
      %v3053 = vadd.f32 %v2957, %v3030
      %v3054 = vadd.f32 %v2958, %v3031
      %v3055 = vadd.f32 %v2959, %v3021
      %v3056 = vadd.f32 %v2960, %v3032
      %v3057 = vadd.f32 %v2961, %v3033
      %s3058 = scalar_lea.vmem %s3, 3
      %v3059 = vld [vmem:[%s3058] ss:$8 sm:$0x3]
      %v3061 = vlaneseq
      %v3062 = vshrl.u32 %v3061, 7
      %v3063 = vsub.s32 0, %v3062
      %v3064 = vrot.slane %v3059, %v3063
      %v3065 = vlaneseq
      %v3066 = vshrl.u32 %v3065, 7
      %v3067 = vsub.s32 1, %v3066
      %v3068 = vrot.slane %v3059, %v3067
      %3069 = vrot.lane.b32.xlu0 %v3064, 80
      %v3070 = vpop.permute.xlu0 %3069
      %3071 = vrot.lane.b32.xlu0 %v3068, 80
      %v3072 = vpop.permute.xlu0 %3071
      %v3073 = vsel %vm649, %v3070, %v3072
      %v3077 = vmul.f32 %v3046, %v3070
      %v3078 = vmul.f32 %v3047, %v3073
      %v3079 = vmul.f32 %v3048, %v3072
      %v3080 = vmul.f32 %v3049, %v3070
      %v3081 = vmul.f32 %v3050, %v3073
      %v3082 = vmul.f32 %v3051, %v3072
      %v3083 = vmul.f32 %v3052, %v3070
      %v3084 = vmul.f32 %v3053, %v3073
      %v3085 = vmul.f32 %v3054, %v3072
      %v3086 = vmul.f32 %v3055, %v3070
      %v3087 = vmul.f32 %v3056, %v3073
      %v3088 = vmul.f32 %v3057, %v3072
      %3101 = vrot.lane.b32.xlu0 %v3077, 125
      %v3102 = vpop.permute.xlu0 %3101
      %3103 = vrot.lane.b32.xlu0 %v3078, 125
      %v3104 = vpop.permute.xlu0 %3103
      %3105 = vrot.lane.b32.xlu0 %v3079, 125
      %v3106 = vpop.permute.xlu0 %3105
      %3107 = vrot.lane.b32.xlu0 %v3080, 125
      %v3108 = vpop.permute.xlu0 %3107
      %3109 = vrot.lane.b32.xlu0 %v3081, 125
      %v3110 = vpop.permute.xlu0 %3109
      %3111 = vrot.lane.b32.xlu0 %v3082, 125
      %v3112 = vpop.permute.xlu0 %3111
      %3113 = vrot.lane.b32.xlu0 %v3083, 125
      %v3114 = vpop.permute.xlu0 %3113
      %3115 = vrot.lane.b32.xlu0 %v3084, 125
      %v3116 = vpop.permute.xlu0 %3115
      %3117 = vrot.lane.b32.xlu0 %v3085, 125
      %v3118 = vpop.permute.xlu0 %3117
      %3119 = vrot.lane.b32.xlu0 %v3086, 125
      %v3120 = vpop.permute.xlu0 %3119
      %3121 = vrot.lane.b32.xlu0 %v3087, 125
      %v3122 = vpop.permute.xlu0 %3121
      %3123 = vrot.lane.b32.xlu0 %v3088, 125
      %v3124 = vpop.permute.xlu0 %3123
      %vm3125 = vcmask 1022976
      %v3126 = vsel %vm3125, %v3102, %v3104
      %v3127 = vsel %vm3125, %v3104, %v3106
      %v3128 = vsel %vm3125, %v3108, %v3110
      %v3129 = vsel %vm3125, %v3110, %v3112
      %v3130 = vsel %vm3125, %v3114, %v3116
      %v3131 = vsel %vm3125, %v3116, %v3118
      %v3132 = vsel %vm3125, %v3120, %v3122
      %v3133 = vsel %vm3125, %v3122, %v3124
      %v3146 = vadd.f32 %v2450, %v3126
      %v3147 = vadd.f32 %v2451, %v3127
      %v3148 = vadd.f32 %v2452, %v3106
      %v3149 = vadd.f32 %v2453, %v3128
      %v3150 = vadd.f32 %v2454, %v3129
      %v3151 = vadd.f32 %v2455, %v3112
      %v3152 = vadd.f32 %v2456, %v3130
      %v3153 = vadd.f32 %v2457, %v3131
      %v3154 = vadd.f32 %v2458, %v3118
      %v3155 = vadd.f32 %v2459, %v3132
      %v3156 = vadd.f32 %v2460, %v3133
      %v3157 = vadd.f32 %v2461, %v3124
      %3158 = vset.pattern.permute.xlu0 4
      %3159 = vperm.xlu0 %3158, %v331
      %v3160 = vpop.permute.xlu0 %3159
      %3162 = vset.pattern.permute.xlu0 4
      %3163 = vperm.xlu0 %3162, %v332
      %v3164 = vpop.permute.xlu0 %3163
      %3166 = vset.pattern.permute.xlu0 4
      %3167 = vperm.xlu0 %3166, %v333
      %v3168 = vpop.permute.xlu0 %3167
      %3170 = vset.pattern.permute.xlu0 4
      %3171 = vperm.xlu0 %3170, %v334
      %v3172 = vpop.permute.xlu0 %3171
      %v3174 = vmul.f32 %v3160, %v335
      %v3175 = vmul.f32 %v3160, %v336
      %v3176 = vmul.f32 %v3160, %v337
      %v3177 = vmul.f32 %v3164, %v338
      %v3178 = vmul.f32 %v3164, %v339
      %v3179 = vmul.f32 %v3164, %v340
      %v3180 = vmul.f32 %v3168, %v341
      %v3181 = vmul.f32 %v3168, %v342
      %v3182 = vmul.f32 %v3168, %v343
      %v3183 = vmul.f32 %v3172, %v344
      %v3184 = vmul.f32 %v3172, %v345
      %v3185 = vmul.f32 %v3172, %v346
      %v3186 = vadd.f32 %v3174, 0.0
      %v3187 = vadd.f32 %v3175, 0.0
      %v3188 = vadd.f32 %v3176, 0.0
      %v3189 = vadd.f32 %v3177, 0.0
      %v3190 = vadd.f32 %v3178, 0.0
      %v3191 = vadd.f32 %v3179, 0.0
      %v3192 = vadd.f32 %v3180, 0.0
      %v3193 = vadd.f32 %v3181, 0.0
      %v3194 = vadd.f32 %v3182, 0.0
      %v3195 = vadd.f32 %v3183, 0.0
      %v3196 = vadd.f32 %v3184, 0.0
      %v3197 = vadd.f32 %v3185, 0.0
      %3198 = vset.pattern.permute.xlu0 11
      %3199 = vperm.xlu0 %3198, %v331
      %v3200 = vpop.permute.xlu0 %3199
      %3202 = vset.pattern.permute.xlu0 11
      %3203 = vperm.xlu0 %3202, %v332
      %v3204 = vpop.permute.xlu0 %3203
      %3206 = vset.pattern.permute.xlu0 11
      %3207 = vperm.xlu0 %3206, %v333
      %v3208 = vpop.permute.xlu0 %3207
      %3210 = vset.pattern.permute.xlu0 11
      %3211 = vperm.xlu0 %3210, %v334
      %v3212 = vpop.permute.xlu0 %3211
      %v3214 = vmul.f32 %v3200, %v335
      %v3215 = vmul.f32 %v3200, %v336
      %v3216 = vmul.f32 %v3200, %v337
      %v3217 = vmul.f32 %v3204, %v338
      %v3218 = vmul.f32 %v3204, %v339
      %v3219 = vmul.f32 %v3204, %v340
      %v3220 = vmul.f32 %v3208, %v341
      %v3221 = vmul.f32 %v3208, %v342
      %v3222 = vmul.f32 %v3208, %v343
      %v3223 = vmul.f32 %v3212, %v344
      %v3224 = vmul.f32 %v3212, %v345
      %v3225 = vmul.f32 %v3212, %v346
      %3238 = vrot.lane.b32.xlu0 %v3214, 112
      %v3239 = vpop.permute.xlu0 %3238
      %3240 = vrot.lane.b32.xlu0 %v3215, 112
      %v3241 = vpop.permute.xlu0 %3240
      %3242 = vrot.lane.b32.xlu0 %v3216, 112
      %v3243 = vpop.permute.xlu0 %3242
      %3244 = vrot.lane.b32.xlu0 %v3217, 112
      %v3245 = vpop.permute.xlu0 %3244
      %3246 = vrot.lane.b32.xlu0 %v3218, 112
      %v3247 = vpop.permute.xlu0 %3246
      %3248 = vrot.lane.b32.xlu0 %v3219, 112
      %v3249 = vpop.permute.xlu0 %3248
      %3250 = vrot.lane.b32.xlu0 %v3220, 112
      %v3251 = vpop.permute.xlu0 %3250
      %3252 = vrot.lane.b32.xlu0 %v3221, 112
      %v3253 = vpop.permute.xlu0 %3252
      %3254 = vrot.lane.b32.xlu0 %v3222, 112
      %v3255 = vpop.permute.xlu0 %3254
      %3256 = vrot.lane.b32.xlu0 %v3223, 112
      %v3257 = vpop.permute.xlu0 %3256
      %3258 = vrot.lane.b32.xlu0 %v3224, 112
      %v3259 = vpop.permute.xlu0 %3258
      %3260 = vrot.lane.b32.xlu0 %v3225, 112
      %v3261 = vpop.permute.xlu0 %3260
      %v3262 = vsel %vm455, %v3239, %v3241
      %v3263 = vsel %vm455, %v3241, %v3243
      %v3264 = vsel %vm455, %v3245, %v3247
      %v3265 = vsel %vm455, %v3247, %v3249
      %v3266 = vsel %vm455, %v3251, %v3253
      %v3267 = vsel %vm455, %v3253, %v3255
      %v3268 = vsel %vm455, %v3257, %v3259
      %v3269 = vsel %vm455, %v3259, %v3261
      %v3282 = vadd.f32 %v3186, %v3262
      %v3283 = vadd.f32 %v3187, %v3263
      %v3284 = vadd.f32 %v3188, %v3243
      %v3285 = vadd.f32 %v3189, %v3264
      %v3286 = vadd.f32 %v3190, %v3265
      %v3287 = vadd.f32 %v3191, %v3249
      %v3288 = vadd.f32 %v3192, %v3266
      %v3289 = vadd.f32 %v3193, %v3267
      %v3290 = vadd.f32 %v3194, %v3255
      %v3291 = vadd.f32 %v3195, %v3268
      %v3292 = vadd.f32 %v3196, %v3269
      %v3293 = vadd.f32 %v3197, %v3261
      %3294 = vset.pattern.permute.xlu0 18
      %3295 = vperm.xlu0 %3294, %v331
      %v3296 = vpop.permute.xlu0 %3295
      %3298 = vset.pattern.permute.xlu0 18
      %3299 = vperm.xlu0 %3298, %v332
      %v3300 = vpop.permute.xlu0 %3299
      %3302 = vset.pattern.permute.xlu0 18
      %3303 = vperm.xlu0 %3302, %v333
      %v3304 = vpop.permute.xlu0 %3303
      %3306 = vset.pattern.permute.xlu0 18
      %3307 = vperm.xlu0 %3306, %v334
      %v3308 = vpop.permute.xlu0 %3307
      %v3310 = vmul.f32 %v3296, %v335
      %v3311 = vmul.f32 %v3296, %v336
      %v3312 = vmul.f32 %v3296, %v337
      %v3313 = vmul.f32 %v3300, %v338
      %v3314 = vmul.f32 %v3300, %v339
      %v3315 = vmul.f32 %v3300, %v340
      %v3316 = vmul.f32 %v3304, %v341
      %v3317 = vmul.f32 %v3304, %v342
      %v3318 = vmul.f32 %v3304, %v343
      %v3319 = vmul.f32 %v3308, %v344
      %v3320 = vmul.f32 %v3308, %v345
      %v3321 = vmul.f32 %v3308, %v346
      %3334 = vrot.lane.b32.xlu0 %v3310, 96
      %v3335 = vpop.permute.xlu0 %3334
      %3336 = vrot.lane.b32.xlu0 %v3311, 96
      %v3337 = vpop.permute.xlu0 %3336
      %3338 = vrot.lane.b32.xlu0 %v3312, 96
      %v3339 = vpop.permute.xlu0 %3338
      %3340 = vrot.lane.b32.xlu0 %v3313, 96
      %v3341 = vpop.permute.xlu0 %3340
      %3342 = vrot.lane.b32.xlu0 %v3314, 96
      %v3343 = vpop.permute.xlu0 %3342
      %3344 = vrot.lane.b32.xlu0 %v3315, 96
      %v3345 = vpop.permute.xlu0 %3344
      %3346 = vrot.lane.b32.xlu0 %v3316, 96
      %v3347 = vpop.permute.xlu0 %3346
      %3348 = vrot.lane.b32.xlu0 %v3317, 96
      %v3349 = vpop.permute.xlu0 %3348
      %3350 = vrot.lane.b32.xlu0 %v3318, 96
      %v3351 = vpop.permute.xlu0 %3350
      %3352 = vrot.lane.b32.xlu0 %v3319, 96
      %v3353 = vpop.permute.xlu0 %3352
      %3354 = vrot.lane.b32.xlu0 %v3320, 96
      %v3355 = vpop.permute.xlu0 %3354
      %3356 = vrot.lane.b32.xlu0 %v3321, 96
      %v3357 = vpop.permute.xlu0 %3356
      %v3358 = vsel %vm552, %v3335, %v3337
      %v3359 = vsel %vm552, %v3337, %v3339
      %v3360 = vsel %vm552, %v3341, %v3343
      %v3361 = vsel %vm552, %v3343, %v3345
      %v3362 = vsel %vm552, %v3347, %v3349
      %v3363 = vsel %vm552, %v3349, %v3351
      %v3364 = vsel %vm552, %v3353, %v3355
      %v3365 = vsel %vm552, %v3355, %v3357
      %v3378 = vadd.f32 %v3282, %v3358
      %v3379 = vadd.f32 %v3283, %v3359
      %v3380 = vadd.f32 %v3284, %v3339
      %v3381 = vadd.f32 %v3285, %v3360
      %v3382 = vadd.f32 %v3286, %v3361
      %v3383 = vadd.f32 %v3287, %v3345
      %v3384 = vadd.f32 %v3288, %v3362
      %v3385 = vadd.f32 %v3289, %v3363
      %v3386 = vadd.f32 %v3290, %v3351
      %v3387 = vadd.f32 %v3291, %v3364
      %v3388 = vadd.f32 %v3292, %v3365
      %v3389 = vadd.f32 %v3293, %v3357
      %3390 = vset.pattern.permute.xlu0 25
      %3391 = vperm.xlu0 %3390, %v331
      %v3392 = vpop.permute.xlu0 %3391
      %3394 = vset.pattern.permute.xlu0 25
      %3395 = vperm.xlu0 %3394, %v332
      %v3396 = vpop.permute.xlu0 %3395
      %3398 = vset.pattern.permute.xlu0 25
      %3399 = vperm.xlu0 %3398, %v333
      %v3400 = vpop.permute.xlu0 %3399
      %3402 = vset.pattern.permute.xlu0 25
      %3403 = vperm.xlu0 %3402, %v334
      %v3404 = vpop.permute.xlu0 %3403
      %v3406 = vmul.f32 %v3392, %v682
      %v3407 = vmul.f32 %v3392, %v683
      %v3408 = vmul.f32 %v3392, %v684
      %v3409 = vmul.f32 %v3396, %v685
      %v3410 = vmul.f32 %v3396, %v686
      %v3411 = vmul.f32 %v3396, %v687
      %v3412 = vmul.f32 %v3400, %v688
      %v3413 = vmul.f32 %v3400, %v689
      %v3414 = vmul.f32 %v3400, %v690
      %v3415 = vmul.f32 %v3404, %v691
      %v3416 = vmul.f32 %v3404, %v692
      %v3417 = vmul.f32 %v3404, %v693
      %3430 = vrot.lane.b32.xlu0 %v3406, 80
      %v3431 = vpop.permute.xlu0 %3430
      %3432 = vrot.lane.b32.xlu0 %v3407, 80
      %v3433 = vpop.permute.xlu0 %3432
      %3434 = vrot.lane.b32.xlu0 %v3408, 80
      %v3435 = vpop.permute.xlu0 %3434
      %3436 = vrot.lane.b32.xlu0 %v3409, 80
      %v3437 = vpop.permute.xlu0 %3436
      %3438 = vrot.lane.b32.xlu0 %v3410, 80
      %v3439 = vpop.permute.xlu0 %3438
      %3440 = vrot.lane.b32.xlu0 %v3411, 80
      %v3441 = vpop.permute.xlu0 %3440
      %3442 = vrot.lane.b32.xlu0 %v3412, 80
      %v3443 = vpop.permute.xlu0 %3442
      %3444 = vrot.lane.b32.xlu0 %v3413, 80
      %v3445 = vpop.permute.xlu0 %3444
      %3446 = vrot.lane.b32.xlu0 %v3414, 80
      %v3447 = vpop.permute.xlu0 %3446
      %3448 = vrot.lane.b32.xlu0 %v3415, 80
      %v3449 = vpop.permute.xlu0 %3448
      %3450 = vrot.lane.b32.xlu0 %v3416, 80
      %v3451 = vpop.permute.xlu0 %3450
      %3452 = vrot.lane.b32.xlu0 %v3417, 80
      %v3453 = vpop.permute.xlu0 %3452
      %v3454 = vsel %vm649, %v3431, %v3433
      %v3455 = vsel %vm649, %v3433, %v3435
      %v3456 = vsel %vm649, %v3437, %v3439
      %v3457 = vsel %vm649, %v3439, %v3441
      %v3458 = vsel %vm649, %v3443, %v3445
      %v3459 = vsel %vm649, %v3445, %v3447
      %v3460 = vsel %vm649, %v3449, %v3451
      %v3461 = vsel %vm649, %v3451, %v3453
      %v3474 = vadd.f32 %v3378, %v3431
      %v3475 = vadd.f32 %v3379, %v3454
      %v3476 = vadd.f32 %v3380, %v3455
      %v3477 = vadd.f32 %v3381, %v3437
      %v3478 = vadd.f32 %v3382, %v3456
      %v3479 = vadd.f32 %v3383, %v3457
      %v3480 = vadd.f32 %v3384, %v3443
      %v3481 = vadd.f32 %v3385, %v3458
      %v3482 = vadd.f32 %v3386, %v3459
      %v3483 = vadd.f32 %v3387, %v3449
      %v3484 = vadd.f32 %v3388, %v3460
      %v3485 = vadd.f32 %v3389, %v3461
      %3486 = vset.pattern.permute.xlu0 32
      %3487 = vperm.xlu0 %3486, %v331
      %v3488 = vpop.permute.xlu0 %3487
      %3490 = vset.pattern.permute.xlu0 32
      %3491 = vperm.xlu0 %3490, %v332
      %v3492 = vpop.permute.xlu0 %3491
      %3494 = vset.pattern.permute.xlu0 32
      %3495 = vperm.xlu0 %3494, %v333
      %v3496 = vpop.permute.xlu0 %3495
      %3498 = vset.pattern.permute.xlu0 32
      %3499 = vperm.xlu0 %3498, %v334
      %v3500 = vpop.permute.xlu0 %3499
      %v3502 = vmul.f32 %v3488, %v682
      %v3503 = vmul.f32 %v3488, %v683
      %v3504 = vmul.f32 %v3488, %v684
      %v3505 = vmul.f32 %v3492, %v685
      %v3506 = vmul.f32 %v3492, %v686
      %v3507 = vmul.f32 %v3492, %v687
      %v3508 = vmul.f32 %v3496, %v688
      %v3509 = vmul.f32 %v3496, %v689
      %v3510 = vmul.f32 %v3496, %v690
      %v3511 = vmul.f32 %v3500, %v691
      %v3512 = vmul.f32 %v3500, %v692
      %v3513 = vmul.f32 %v3500, %v693
      %3526 = vrot.lane.b32.xlu0 %v3502, 64
      %v3527 = vpop.permute.xlu0 %3526
      %3528 = vrot.lane.b32.xlu0 %v3503, 64
      %v3529 = vpop.permute.xlu0 %3528
      %3530 = vrot.lane.b32.xlu0 %v3504, 64
      %v3531 = vpop.permute.xlu0 %3530
      %3532 = vrot.lane.b32.xlu0 %v3505, 64
      %v3533 = vpop.permute.xlu0 %3532
      %3534 = vrot.lane.b32.xlu0 %v3506, 64
      %v3535 = vpop.permute.xlu0 %3534
      %3536 = vrot.lane.b32.xlu0 %v3507, 64
      %v3537 = vpop.permute.xlu0 %3536
      %3538 = vrot.lane.b32.xlu0 %v3508, 64
      %v3539 = vpop.permute.xlu0 %3538
      %3540 = vrot.lane.b32.xlu0 %v3509, 64
      %v3541 = vpop.permute.xlu0 %3540
      %3542 = vrot.lane.b32.xlu0 %v3510, 64
      %v3543 = vpop.permute.xlu0 %3542
      %3544 = vrot.lane.b32.xlu0 %v3511, 64
      %v3545 = vpop.permute.xlu0 %3544
      %3546 = vrot.lane.b32.xlu0 %v3512, 64
      %v3547 = vpop.permute.xlu0 %3546
      %3548 = vrot.lane.b32.xlu0 %v3513, 64
      %v3549 = vpop.permute.xlu0 %3548
      %v3550 = vsel %vm758, %v3527, %v3529
      %v3551 = vsel %vm758, %v3529, %v3531
      %v3552 = vsel %vm758, %v3533, %v3535
      %v3553 = vsel %vm758, %v3535, %v3537
      %v3554 = vsel %vm758, %v3539, %v3541
      %v3555 = vsel %vm758, %v3541, %v3543
      %v3556 = vsel %vm758, %v3545, %v3547
      %v3557 = vsel %vm758, %v3547, %v3549
      %v3570 = vadd.f32 %v3474, %v3527
      %v3571 = vadd.f32 %v3475, %v3550
      %v3572 = vadd.f32 %v3476, %v3551
      %v3573 = vadd.f32 %v3477, %v3533
      %v3574 = vadd.f32 %v3478, %v3552
      %v3575 = vadd.f32 %v3479, %v3553
      %v3576 = vadd.f32 %v3480, %v3539
      %v3577 = vadd.f32 %v3481, %v3554
      %v3578 = vadd.f32 %v3482, %v3555
      %v3579 = vadd.f32 %v3483, %v3545
      %v3580 = vadd.f32 %v3484, %v3556
      %v3581 = vadd.f32 %v3485, %v3557
      %3582 = vset.pattern.permute.xlu0 39
      %3583 = vperm.xlu0 %3582, %v331
      %v3584 = vpop.permute.xlu0 %3583
      %3586 = vset.pattern.permute.xlu0 39
      %3587 = vperm.xlu0 %3586, %v332
      %v3588 = vpop.permute.xlu0 %3587
      %3590 = vset.pattern.permute.xlu0 39
      %3591 = vperm.xlu0 %3590, %v333
      %v3592 = vpop.permute.xlu0 %3591
      %3594 = vset.pattern.permute.xlu0 39
      %3595 = vperm.xlu0 %3594, %v334
      %v3596 = vpop.permute.xlu0 %3595
      %v3598 = vmul.f32 %v3584, %v682
      %v3599 = vmul.f32 %v3584, %v683
      %v3600 = vmul.f32 %v3584, %v684
      %v3601 = vmul.f32 %v3588, %v685
      %v3602 = vmul.f32 %v3588, %v686
      %v3603 = vmul.f32 %v3588, %v687
      %v3604 = vmul.f32 %v3592, %v688
      %v3605 = vmul.f32 %v3592, %v689
      %v3606 = vmul.f32 %v3592, %v690
      %v3607 = vmul.f32 %v3596, %v691
      %v3608 = vmul.f32 %v3596, %v692
      %v3609 = vmul.f32 %v3596, %v693
      %3622 = vrot.lane.b32.xlu0 %v3598, 48
      %v3623 = vpop.permute.xlu0 %3622
      %3624 = vrot.lane.b32.xlu0 %v3599, 48
      %v3625 = vpop.permute.xlu0 %3624
      %3626 = vrot.lane.b32.xlu0 %v3600, 48
      %v3627 = vpop.permute.xlu0 %3626
      %3628 = vrot.lane.b32.xlu0 %v3601, 48
      %v3629 = vpop.permute.xlu0 %3628
      %3630 = vrot.lane.b32.xlu0 %v3602, 48
      %v3631 = vpop.permute.xlu0 %3630
      %3632 = vrot.lane.b32.xlu0 %v3603, 48
      %v3633 = vpop.permute.xlu0 %3632
      %3634 = vrot.lane.b32.xlu0 %v3604, 48
      %v3635 = vpop.permute.xlu0 %3634
      %3636 = vrot.lane.b32.xlu0 %v3605, 48
      %v3637 = vpop.permute.xlu0 %3636
      %3638 = vrot.lane.b32.xlu0 %v3606, 48
      %v3639 = vpop.permute.xlu0 %3638
      %3640 = vrot.lane.b32.xlu0 %v3607, 48
      %v3641 = vpop.permute.xlu0 %3640
      %3642 = vrot.lane.b32.xlu0 %v3608, 48
      %v3643 = vpop.permute.xlu0 %3642
      %3644 = vrot.lane.b32.xlu0 %v3609, 48
      %v3645 = vpop.permute.xlu0 %3644
      %v3646 = vsel %vm855, %v3623, %v3625
      %v3647 = vsel %vm855, %v3625, %v3627
      %v3648 = vsel %vm855, %v3629, %v3631
      %v3649 = vsel %vm855, %v3631, %v3633
      %v3650 = vsel %vm855, %v3635, %v3637
      %v3651 = vsel %vm855, %v3637, %v3639
      %v3652 = vsel %vm855, %v3641, %v3643
      %v3653 = vsel %vm855, %v3643, %v3645
      %v3666 = vadd.f32 %v3570, %v3623
      %v3667 = vadd.f32 %v3571, %v3646
      %v3668 = vadd.f32 %v3572, %v3647
      %v3669 = vadd.f32 %v3573, %v3629
      %v3670 = vadd.f32 %v3574, %v3648
      %v3671 = vadd.f32 %v3575, %v3649
      %v3672 = vadd.f32 %v3576, %v3635
      %v3673 = vadd.f32 %v3577, %v3650
      %v3674 = vadd.f32 %v3578, %v3651
      %v3675 = vadd.f32 %v3579, %v3641
      %v3676 = vadd.f32 %v3580, %v3652
      %v3677 = vadd.f32 %v3581, %v3653
      %3678 = vset.pattern.permute.xlu0 46
      %3679 = vperm.xlu0 %3678, %v331
      %v3680 = vpop.permute.xlu0 %3679
      %3682 = vset.pattern.permute.xlu0 46
      %3683 = vperm.xlu0 %3682, %v332
      %v3684 = vpop.permute.xlu0 %3683
      %3686 = vset.pattern.permute.xlu0 46
      %3687 = vperm.xlu0 %3686, %v333
      %v3688 = vpop.permute.xlu0 %3687
      %3690 = vset.pattern.permute.xlu0 46
      %3691 = vperm.xlu0 %3690, %v334
      %v3692 = vpop.permute.xlu0 %3691
      %v3694 = vmul.f32 %v3680, %v682
      %v3695 = vmul.f32 %v3680, %v683
      %v3696 = vmul.f32 %v3680, %v684
      %v3697 = vmul.f32 %v3684, %v685
      %v3698 = vmul.f32 %v3684, %v686
      %v3699 = vmul.f32 %v3684, %v687
      %v3700 = vmul.f32 %v3688, %v688
      %v3701 = vmul.f32 %v3688, %v689
      %v3702 = vmul.f32 %v3688, %v690
      %v3703 = vmul.f32 %v3692, %v691
      %v3704 = vmul.f32 %v3692, %v692
      %v3705 = vmul.f32 %v3692, %v693
      %3718 = vrot.lane.b32.xlu0 %v3694, 32
      %v3719 = vpop.permute.xlu0 %3718
      %3720 = vrot.lane.b32.xlu0 %v3695, 32
      %v3721 = vpop.permute.xlu0 %3720
      %3722 = vrot.lane.b32.xlu0 %v3696, 32
      %v3723 = vpop.permute.xlu0 %3722
      %3724 = vrot.lane.b32.xlu0 %v3697, 32
      %v3725 = vpop.permute.xlu0 %3724
      %3726 = vrot.lane.b32.xlu0 %v3698, 32
      %v3727 = vpop.permute.xlu0 %3726
      %3728 = vrot.lane.b32.xlu0 %v3699, 32
      %v3729 = vpop.permute.xlu0 %3728
      %3730 = vrot.lane.b32.xlu0 %v3700, 32
      %v3731 = vpop.permute.xlu0 %3730
      %3732 = vrot.lane.b32.xlu0 %v3701, 32
      %v3733 = vpop.permute.xlu0 %3732
      %3734 = vrot.lane.b32.xlu0 %v3702, 32
      %v3735 = vpop.permute.xlu0 %3734
      %3736 = vrot.lane.b32.xlu0 %v3703, 32
      %v3737 = vpop.permute.xlu0 %3736
      %3738 = vrot.lane.b32.xlu0 %v3704, 32
      %v3739 = vpop.permute.xlu0 %3738
      %3740 = vrot.lane.b32.xlu0 %v3705, 32
      %v3741 = vpop.permute.xlu0 %3740
      %v3742 = vsel %vm952, %v3719, %v3721
      %v3743 = vsel %vm952, %v3721, %v3723
      %v3744 = vsel %vm952, %v3725, %v3727
      %v3745 = vsel %vm952, %v3727, %v3729
      %v3746 = vsel %vm952, %v3731, %v3733
      %v3747 = vsel %vm952, %v3733, %v3735
      %v3748 = vsel %vm952, %v3737, %v3739
      %v3749 = vsel %vm952, %v3739, %v3741
      %v3762 = vadd.f32 %v3666, %v3719
      %v3763 = vadd.f32 %v3667, %v3742
      %v3764 = vadd.f32 %v3668, %v3743
      %v3765 = vadd.f32 %v3669, %v3725
      %v3766 = vadd.f32 %v3670, %v3744
      %v3767 = vadd.f32 %v3671, %v3745
      %v3768 = vadd.f32 %v3672, %v3731
      %v3769 = vadd.f32 %v3673, %v3746
      %v3770 = vadd.f32 %v3674, %v3747
      %v3771 = vadd.f32 %v3675, %v3737
      %v3772 = vadd.f32 %v3676, %v3748
      %v3773 = vadd.f32 %v3677, %v3749
      %s3774 = scalar_lea.vmem %s3, 4
      %v3775 = vld [vmem:[%s3774] ss:$8 sm:$0x3]
      %v3777 = vlaneseq
      %v3778 = vshrl.u32 %v3777, 7
      %v3779 = vsub.s32 0, %v3778
      %v3780 = vrot.slane %v3775, %v3779
      %v3781 = vlaneseq
      %v3782 = vshrl.u32 %v3781, 7
      %v3783 = vsub.s32 1, %v3782
      %v3784 = vrot.slane %v3775, %v3783
      %3785 = vrot.lane.b32.xlu0 %v3780, 81
      %v3786 = vpop.permute.xlu0 %3785
      %3787 = vrot.lane.b32.xlu0 %v3784, 81
      %v3788 = vpop.permute.xlu0 %3787
      %vm3789 = vcmask 662528
      %v3790 = vsel %vm3789, %v3786, %v3788
      %v3794 = vmul.f32 %v3762, %v3786
      %v3795 = vmul.f32 %v3763, %v3790
      %v3796 = vmul.f32 %v3764, %v3788
      %v3797 = vmul.f32 %v3765, %v3786
      %v3798 = vmul.f32 %v3766, %v3790
      %v3799 = vmul.f32 %v3767, %v3788
      %v3800 = vmul.f32 %v3768, %v3786
      %v3801 = vmul.f32 %v3769, %v3790
      %v3802 = vmul.f32 %v3770, %v3788
      %v3803 = vmul.f32 %v3771, %v3786
      %v3804 = vmul.f32 %v3772, %v3790
      %v3805 = vmul.f32 %v3773, %v3788
      %3818 = vrot.lane.b32.xlu0 %v3794, 124
      %v3819 = vpop.permute.xlu0 %3818
      %3820 = vrot.lane.b32.xlu0 %v3795, 124
      %v3821 = vpop.permute.xlu0 %3820
      %3822 = vrot.lane.b32.xlu0 %v3796, 124
      %v3823 = vpop.permute.xlu0 %3822
      %3824 = vrot.lane.b32.xlu0 %v3797, 124
      %v3825 = vpop.permute.xlu0 %3824
      %3826 = vrot.lane.b32.xlu0 %v3798, 124
      %v3827 = vpop.permute.xlu0 %3826
      %3828 = vrot.lane.b32.xlu0 %v3799, 124
      %v3829 = vpop.permute.xlu0 %3828
      %3830 = vrot.lane.b32.xlu0 %v3800, 124
      %v3831 = vpop.permute.xlu0 %3830
      %3832 = vrot.lane.b32.xlu0 %v3801, 124
      %v3833 = vpop.permute.xlu0 %3832
      %3834 = vrot.lane.b32.xlu0 %v3802, 124
      %v3835 = vpop.permute.xlu0 %3834
      %3836 = vrot.lane.b32.xlu0 %v3803, 124
      %v3837 = vpop.permute.xlu0 %3836
      %3838 = vrot.lane.b32.xlu0 %v3804, 124
      %v3839 = vpop.permute.xlu0 %3838
      %3840 = vrot.lane.b32.xlu0 %v3805, 124
      %v3841 = vpop.permute.xlu0 %3840
      %vm3842 = vcmask 1014784
      %v3843 = vsel %vm3842, %v3819, %v3821
      %v3844 = vsel %vm3842, %v3821, %v3823
      %v3845 = vsel %vm3842, %v3825, %v3827
      %v3846 = vsel %vm3842, %v3827, %v3829
      %v3847 = vsel %vm3842, %v3831, %v3833
      %v3848 = vsel %vm3842, %v3833, %v3835
      %v3849 = vsel %vm3842, %v3837, %v3839
      %v3850 = vsel %vm3842, %v3839, %v3841
      %v3863 = vadd.f32 %v3146, %v3843
      %v3864 = vadd.f32 %v3147, %v3844
      %v3865 = vadd.f32 %v3148, %v3823
      %v3866 = vadd.f32 %v3149, %v3845
      %v3867 = vadd.f32 %v3150, %v3846
      %v3868 = vadd.f32 %v3151, %v3829
      %v3869 = vadd.f32 %v3152, %v3847
      %v3870 = vadd.f32 %v3153, %v3848
      %v3871 = vadd.f32 %v3154, %v3835
      %v3872 = vadd.f32 %v3155, %v3849
      %v3873 = vadd.f32 %v3156, %v3850
      %v3874 = vadd.f32 %v3157, %v3841
      %3875 = vset.pattern.permute.xlu0 5
      %3876 = vperm.xlu0 %3875, %v331
      %v3877 = vpop.permute.xlu0 %3876
      %3879 = vset.pattern.permute.xlu0 5
      %3880 = vperm.xlu0 %3879, %v332
      %v3881 = vpop.permute.xlu0 %3880
      %3883 = vset.pattern.permute.xlu0 5
      %3884 = vperm.xlu0 %3883, %v333
      %v3885 = vpop.permute.xlu0 %3884
      %3887 = vset.pattern.permute.xlu0 5
      %3888 = vperm.xlu0 %3887, %v334
      %v3889 = vpop.permute.xlu0 %3888
      %v3891 = vmul.f32 %v3877, %v335
      %v3892 = vmul.f32 %v3877, %v336
      %v3893 = vmul.f32 %v3877, %v337
      %v3894 = vmul.f32 %v3881, %v338
      %v3895 = vmul.f32 %v3881, %v339
      %v3896 = vmul.f32 %v3881, %v340
      %v3897 = vmul.f32 %v3885, %v341
      %v3898 = vmul.f32 %v3885, %v342
      %v3899 = vmul.f32 %v3885, %v343
      %v3900 = vmul.f32 %v3889, %v344
      %v3901 = vmul.f32 %v3889, %v345
      %v3902 = vmul.f32 %v3889, %v346
      %v3903 = vadd.f32 %v3891, 0.0
      %v3904 = vadd.f32 %v3892, 0.0
      %v3905 = vadd.f32 %v3893, 0.0
      %v3906 = vadd.f32 %v3894, 0.0
      %v3907 = vadd.f32 %v3895, 0.0
      %v3908 = vadd.f32 %v3896, 0.0
      %v3909 = vadd.f32 %v3897, 0.0
      %v3910 = vadd.f32 %v3898, 0.0
      %v3911 = vadd.f32 %v3899, 0.0
      %v3912 = vadd.f32 %v3900, 0.0
      %v3913 = vadd.f32 %v3901, 0.0
      %v3914 = vadd.f32 %v3902, 0.0
      %3915 = vset.pattern.permute.xlu0 12
      %3916 = vperm.xlu0 %3915, %v331
      %v3917 = vpop.permute.xlu0 %3916
      %3919 = vset.pattern.permute.xlu0 12
      %3920 = vperm.xlu0 %3919, %v332
      %v3921 = vpop.permute.xlu0 %3920
      %3923 = vset.pattern.permute.xlu0 12
      %3924 = vperm.xlu0 %3923, %v333
      %v3925 = vpop.permute.xlu0 %3924
      %3927 = vset.pattern.permute.xlu0 12
      %3928 = vperm.xlu0 %3927, %v334
      %v3929 = vpop.permute.xlu0 %3928
      %v3931 = vmul.f32 %v3917, %v335
      %v3932 = vmul.f32 %v3917, %v336
      %v3933 = vmul.f32 %v3917, %v337
      %v3934 = vmul.f32 %v3921, %v338
      %v3935 = vmul.f32 %v3921, %v339
      %v3936 = vmul.f32 %v3921, %v340
      %v3937 = vmul.f32 %v3925, %v341
      %v3938 = vmul.f32 %v3925, %v342
      %v3939 = vmul.f32 %v3925, %v343
      %v3940 = vmul.f32 %v3929, %v344
      %v3941 = vmul.f32 %v3929, %v345
      %v3942 = vmul.f32 %v3929, %v346
      %3955 = vrot.lane.b32.xlu0 %v3931, 112
      %v3956 = vpop.permute.xlu0 %3955
      %3957 = vrot.lane.b32.xlu0 %v3932, 112
      %v3958 = vpop.permute.xlu0 %3957
      %3959 = vrot.lane.b32.xlu0 %v3933, 112
      %v3960 = vpop.permute.xlu0 %3959
      %3961 = vrot.lane.b32.xlu0 %v3934, 112
      %v3962 = vpop.permute.xlu0 %3961
      %3963 = vrot.lane.b32.xlu0 %v3935, 112
      %v3964 = vpop.permute.xlu0 %3963
      %3965 = vrot.lane.b32.xlu0 %v3936, 112
      %v3966 = vpop.permute.xlu0 %3965
      %3967 = vrot.lane.b32.xlu0 %v3937, 112
      %v3968 = vpop.permute.xlu0 %3967
      %3969 = vrot.lane.b32.xlu0 %v3938, 112
      %v3970 = vpop.permute.xlu0 %3969
      %3971 = vrot.lane.b32.xlu0 %v3939, 112
      %v3972 = vpop.permute.xlu0 %3971
      %3973 = vrot.lane.b32.xlu0 %v3940, 112
      %v3974 = vpop.permute.xlu0 %3973
      %3975 = vrot.lane.b32.xlu0 %v3941, 112
      %v3976 = vpop.permute.xlu0 %3975
      %3977 = vrot.lane.b32.xlu0 %v3942, 112
      %v3978 = vpop.permute.xlu0 %3977
      %v3979 = vsel %vm455, %v3956, %v3958
      %v3980 = vsel %vm455, %v3958, %v3960
      %v3981 = vsel %vm455, %v3962, %v3964
      %v3982 = vsel %vm455, %v3964, %v3966
      %v3983 = vsel %vm455, %v3968, %v3970
      %v3984 = vsel %vm455, %v3970, %v3972
      %v3985 = vsel %vm455, %v3974, %v3976
      %v3986 = vsel %vm455, %v3976, %v3978
      %v3999 = vadd.f32 %v3903, %v3979
      %v4000 = vadd.f32 %v3904, %v3980
      %v4001 = vadd.f32 %v3905, %v3960
      %v4002 = vadd.f32 %v3906, %v3981
      %v4003 = vadd.f32 %v3907, %v3982
      %v4004 = vadd.f32 %v3908, %v3966
      %v4005 = vadd.f32 %v3909, %v3983
      %v4006 = vadd.f32 %v3910, %v3984
      %v4007 = vadd.f32 %v3911, %v3972
      %v4008 = vadd.f32 %v3912, %v3985
      %v4009 = vadd.f32 %v3913, %v3986
      %v4010 = vadd.f32 %v3914, %v3978
      %4011 = vset.pattern.permute.xlu0 19
      %4012 = vperm.xlu0 %4011, %v331
      %v4013 = vpop.permute.xlu0 %4012
      %4015 = vset.pattern.permute.xlu0 19
      %4016 = vperm.xlu0 %4015, %v332
      %v4017 = vpop.permute.xlu0 %4016
      %4019 = vset.pattern.permute.xlu0 19
      %4020 = vperm.xlu0 %4019, %v333
      %v4021 = vpop.permute.xlu0 %4020
      %4023 = vset.pattern.permute.xlu0 19
      %4024 = vperm.xlu0 %4023, %v334
      %v4025 = vpop.permute.xlu0 %4024
      %v4027 = vmul.f32 %v4013, %v335
      %v4028 = vmul.f32 %v4013, %v336
      %v4029 = vmul.f32 %v4013, %v337
      %v4030 = vmul.f32 %v4017, %v338
      %v4031 = vmul.f32 %v4017, %v339
      %v4032 = vmul.f32 %v4017, %v340
      %v4033 = vmul.f32 %v4021, %v341
      %v4034 = vmul.f32 %v4021, %v342
      %v4035 = vmul.f32 %v4021, %v343
      %v4036 = vmul.f32 %v4025, %v344
      %v4037 = vmul.f32 %v4025, %v345
      %v4038 = vmul.f32 %v4025, %v346
      %4051 = vrot.lane.b32.xlu0 %v4027, 96
      %v4052 = vpop.permute.xlu0 %4051
      %4053 = vrot.lane.b32.xlu0 %v4028, 96
      %v4054 = vpop.permute.xlu0 %4053
      %4055 = vrot.lane.b32.xlu0 %v4029, 96
      %v4056 = vpop.permute.xlu0 %4055
      %4057 = vrot.lane.b32.xlu0 %v4030, 96
      %v4058 = vpop.permute.xlu0 %4057
      %4059 = vrot.lane.b32.xlu0 %v4031, 96
      %v4060 = vpop.permute.xlu0 %4059
      %4061 = vrot.lane.b32.xlu0 %v4032, 96
      %v4062 = vpop.permute.xlu0 %4061
      %4063 = vrot.lane.b32.xlu0 %v4033, 96
      %v4064 = vpop.permute.xlu0 %4063
      %4065 = vrot.lane.b32.xlu0 %v4034, 96
      %v4066 = vpop.permute.xlu0 %4065
      %4067 = vrot.lane.b32.xlu0 %v4035, 96
      %v4068 = vpop.permute.xlu0 %4067
      %4069 = vrot.lane.b32.xlu0 %v4036, 96
      %v4070 = vpop.permute.xlu0 %4069
      %4071 = vrot.lane.b32.xlu0 %v4037, 96
      %v4072 = vpop.permute.xlu0 %4071
      %4073 = vrot.lane.b32.xlu0 %v4038, 96
      %v4074 = vpop.permute.xlu0 %4073
      %v4075 = vsel %vm552, %v4052, %v4054
      %v4076 = vsel %vm552, %v4054, %v4056
      %v4077 = vsel %vm552, %v4058, %v4060
      %v4078 = vsel %vm552, %v4060, %v4062
      %v4079 = vsel %vm552, %v4064, %v4066
      %v4080 = vsel %vm552, %v4066, %v4068
      %v4081 = vsel %vm552, %v4070, %v4072
      %v4082 = vsel %vm552, %v4072, %v4074
      %v4095 = vadd.f32 %v3999, %v4075
      %v4096 = vadd.f32 %v4000, %v4076
      %v4097 = vadd.f32 %v4001, %v4056
      %v4098 = vadd.f32 %v4002, %v4077
      %v4099 = vadd.f32 %v4003, %v4078
      %v4100 = vadd.f32 %v4004, %v4062
      %v4101 = vadd.f32 %v4005, %v4079
      %v4102 = vadd.f32 %v4006, %v4080
      %v4103 = vadd.f32 %v4007, %v4068
      %v4104 = vadd.f32 %v4008, %v4081
      %v4105 = vadd.f32 %v4009, %v4082
      %v4106 = vadd.f32 %v4010, %v4074
      %4107 = vset.pattern.permute.xlu0 26
      %4108 = vperm.xlu0 %4107, %v331
      %v4109 = vpop.permute.xlu0 %4108
      %4111 = vset.pattern.permute.xlu0 26
      %4112 = vperm.xlu0 %4111, %v332
      %v4113 = vpop.permute.xlu0 %4112
      %4115 = vset.pattern.permute.xlu0 26
      %4116 = vperm.xlu0 %4115, %v333
      %v4117 = vpop.permute.xlu0 %4116
      %4119 = vset.pattern.permute.xlu0 26
      %4120 = vperm.xlu0 %4119, %v334
      %v4121 = vpop.permute.xlu0 %4120
      %v4123 = vmul.f32 %v4109, %v682
      %v4124 = vmul.f32 %v4109, %v683
      %v4125 = vmul.f32 %v4109, %v684
      %v4126 = vmul.f32 %v4113, %v685
      %v4127 = vmul.f32 %v4113, %v686
      %v4128 = vmul.f32 %v4113, %v687
      %v4129 = vmul.f32 %v4117, %v688
      %v4130 = vmul.f32 %v4117, %v689
      %v4131 = vmul.f32 %v4117, %v690
      %v4132 = vmul.f32 %v4121, %v691
      %v4133 = vmul.f32 %v4121, %v692
      %v4134 = vmul.f32 %v4121, %v693
      %4147 = vrot.lane.b32.xlu0 %v4123, 80
      %v4148 = vpop.permute.xlu0 %4147
      %4149 = vrot.lane.b32.xlu0 %v4124, 80
      %v4150 = vpop.permute.xlu0 %4149
      %4151 = vrot.lane.b32.xlu0 %v4125, 80
      %v4152 = vpop.permute.xlu0 %4151
      %4153 = vrot.lane.b32.xlu0 %v4126, 80
      %v4154 = vpop.permute.xlu0 %4153
      %4155 = vrot.lane.b32.xlu0 %v4127, 80
      %v4156 = vpop.permute.xlu0 %4155
      %4157 = vrot.lane.b32.xlu0 %v4128, 80
      %v4158 = vpop.permute.xlu0 %4157
      %4159 = vrot.lane.b32.xlu0 %v4129, 80
      %v4160 = vpop.permute.xlu0 %4159
      %4161 = vrot.lane.b32.xlu0 %v4130, 80
      %v4162 = vpop.permute.xlu0 %4161
      %4163 = vrot.lane.b32.xlu0 %v4131, 80
      %v4164 = vpop.permute.xlu0 %4163
      %4165 = vrot.lane.b32.xlu0 %v4132, 80
      %v4166 = vpop.permute.xlu0 %4165
      %4167 = vrot.lane.b32.xlu0 %v4133, 80
      %v4168 = vpop.permute.xlu0 %4167
      %4169 = vrot.lane.b32.xlu0 %v4134, 80
      %v4170 = vpop.permute.xlu0 %4169
      %v4171 = vsel %vm649, %v4148, %v4150
      %v4172 = vsel %vm649, %v4150, %v4152
      %v4173 = vsel %vm649, %v4154, %v4156
      %v4174 = vsel %vm649, %v4156, %v4158
      %v4175 = vsel %vm649, %v4160, %v4162
      %v4176 = vsel %vm649, %v4162, %v4164
      %v4177 = vsel %vm649, %v4166, %v4168
      %v4178 = vsel %vm649, %v4168, %v4170
      %v4191 = vadd.f32 %v4095, %v4148
      %v4192 = vadd.f32 %v4096, %v4171
      %v4193 = vadd.f32 %v4097, %v4172
      %v4194 = vadd.f32 %v4098, %v4154
      %v4195 = vadd.f32 %v4099, %v4173
      %v4196 = vadd.f32 %v4100, %v4174
      %v4197 = vadd.f32 %v4101, %v4160
      %v4198 = vadd.f32 %v4102, %v4175
      %v4199 = vadd.f32 %v4103, %v4176
      %v4200 = vadd.f32 %v4104, %v4166
      %v4201 = vadd.f32 %v4105, %v4177
      %v4202 = vadd.f32 %v4106, %v4178
      %4203 = vset.pattern.permute.xlu0 33
      %4204 = vperm.xlu0 %4203, %v331
      %v4205 = vpop.permute.xlu0 %4204
      %4207 = vset.pattern.permute.xlu0 33
      %4208 = vperm.xlu0 %4207, %v332
      %v4209 = vpop.permute.xlu0 %4208
      %4211 = vset.pattern.permute.xlu0 33
      %4212 = vperm.xlu0 %4211, %v333
      %v4213 = vpop.permute.xlu0 %4212
      %4215 = vset.pattern.permute.xlu0 33
      %4216 = vperm.xlu0 %4215, %v334
      %v4217 = vpop.permute.xlu0 %4216
      %v4219 = vmul.f32 %v4205, %v682
      %v4220 = vmul.f32 %v4205, %v683
      %v4221 = vmul.f32 %v4205, %v684
      %v4222 = vmul.f32 %v4209, %v685
      %v4223 = vmul.f32 %v4209, %v686
      %v4224 = vmul.f32 %v4209, %v687
      %v4225 = vmul.f32 %v4213, %v688
      %v4226 = vmul.f32 %v4213, %v689
      %v4227 = vmul.f32 %v4213, %v690
      %v4228 = vmul.f32 %v4217, %v691
      %v4229 = vmul.f32 %v4217, %v692
      %v4230 = vmul.f32 %v4217, %v693
      %4243 = vrot.lane.b32.xlu0 %v4219, 64
      %v4244 = vpop.permute.xlu0 %4243
      %4245 = vrot.lane.b32.xlu0 %v4220, 64
      %v4246 = vpop.permute.xlu0 %4245
      %4247 = vrot.lane.b32.xlu0 %v4221, 64
      %v4248 = vpop.permute.xlu0 %4247
      %4249 = vrot.lane.b32.xlu0 %v4222, 64
      %v4250 = vpop.permute.xlu0 %4249
      %4251 = vrot.lane.b32.xlu0 %v4223, 64
      %v4252 = vpop.permute.xlu0 %4251
      %4253 = vrot.lane.b32.xlu0 %v4224, 64
      %v4254 = vpop.permute.xlu0 %4253
      %4255 = vrot.lane.b32.xlu0 %v4225, 64
      %v4256 = vpop.permute.xlu0 %4255
      %4257 = vrot.lane.b32.xlu0 %v4226, 64
      %v4258 = vpop.permute.xlu0 %4257
      %4259 = vrot.lane.b32.xlu0 %v4227, 64
      %v4260 = vpop.permute.xlu0 %4259
      %4261 = vrot.lane.b32.xlu0 %v4228, 64
      %v4262 = vpop.permute.xlu0 %4261
      %4263 = vrot.lane.b32.xlu0 %v4229, 64
      %v4264 = vpop.permute.xlu0 %4263
      %4265 = vrot.lane.b32.xlu0 %v4230, 64
      %v4266 = vpop.permute.xlu0 %4265
      %v4267 = vsel %vm758, %v4244, %v4246
      %v4268 = vsel %vm758, %v4246, %v4248
      %v4269 = vsel %vm758, %v4250, %v4252
      %v4270 = vsel %vm758, %v4252, %v4254
      %v4271 = vsel %vm758, %v4256, %v4258
      %v4272 = vsel %vm758, %v4258, %v4260
      %v4273 = vsel %vm758, %v4262, %v4264
      %v4274 = vsel %vm758, %v4264, %v4266
      %v4287 = vadd.f32 %v4191, %v4244
      %v4288 = vadd.f32 %v4192, %v4267
      %v4289 = vadd.f32 %v4193, %v4268
      %v4290 = vadd.f32 %v4194, %v4250
      %v4291 = vadd.f32 %v4195, %v4269
      %v4292 = vadd.f32 %v4196, %v4270
      %v4293 = vadd.f32 %v4197, %v4256
      %v4294 = vadd.f32 %v4198, %v4271
      %v4295 = vadd.f32 %v4199, %v4272
      %v4296 = vadd.f32 %v4200, %v4262
      %v4297 = vadd.f32 %v4201, %v4273
      %v4298 = vadd.f32 %v4202, %v4274
      %4299 = vset.pattern.permute.xlu0 40
      %4300 = vperm.xlu0 %4299, %v331
      %v4301 = vpop.permute.xlu0 %4300
      %4303 = vset.pattern.permute.xlu0 40
      %4304 = vperm.xlu0 %4303, %v332
      %v4305 = vpop.permute.xlu0 %4304
      %4307 = vset.pattern.permute.xlu0 40
      %4308 = vperm.xlu0 %4307, %v333
      %v4309 = vpop.permute.xlu0 %4308
      %4311 = vset.pattern.permute.xlu0 40
      %4312 = vperm.xlu0 %4311, %v334
      %v4313 = vpop.permute.xlu0 %4312
      %v4315 = vmul.f32 %v4301, %v682
      %v4316 = vmul.f32 %v4301, %v683
      %v4317 = vmul.f32 %v4301, %v684
      %v4318 = vmul.f32 %v4305, %v685
      %v4319 = vmul.f32 %v4305, %v686
      %v4320 = vmul.f32 %v4305, %v687
      %v4321 = vmul.f32 %v4309, %v688
      %v4322 = vmul.f32 %v4309, %v689
      %v4323 = vmul.f32 %v4309, %v690
      %v4324 = vmul.f32 %v4313, %v691
      %v4325 = vmul.f32 %v4313, %v692
      %v4326 = vmul.f32 %v4313, %v693
      %4339 = vrot.lane.b32.xlu0 %v4315, 48
      %v4340 = vpop.permute.xlu0 %4339
      %4341 = vrot.lane.b32.xlu0 %v4316, 48
      %v4342 = vpop.permute.xlu0 %4341
      %4343 = vrot.lane.b32.xlu0 %v4317, 48
      %v4344 = vpop.permute.xlu0 %4343
      %4345 = vrot.lane.b32.xlu0 %v4318, 48
      %v4346 = vpop.permute.xlu0 %4345
      %4347 = vrot.lane.b32.xlu0 %v4319, 48
      %v4348 = vpop.permute.xlu0 %4347
      %4349 = vrot.lane.b32.xlu0 %v4320, 48
      %v4350 = vpop.permute.xlu0 %4349
      %4351 = vrot.lane.b32.xlu0 %v4321, 48
      %v4352 = vpop.permute.xlu0 %4351
      %4353 = vrot.lane.b32.xlu0 %v4322, 48
      %v4354 = vpop.permute.xlu0 %4353
      %4355 = vrot.lane.b32.xlu0 %v4323, 48
      %v4356 = vpop.permute.xlu0 %4355
      %4357 = vrot.lane.b32.xlu0 %v4324, 48
      %v4358 = vpop.permute.xlu0 %4357
      %4359 = vrot.lane.b32.xlu0 %v4325, 48
      %v4360 = vpop.permute.xlu0 %4359
      %4361 = vrot.lane.b32.xlu0 %v4326, 48
      %v4362 = vpop.permute.xlu0 %4361
      %v4363 = vsel %vm855, %v4340, %v4342
      %v4364 = vsel %vm855, %v4342, %v4344
      %v4365 = vsel %vm855, %v4346, %v4348
      %v4366 = vsel %vm855, %v4348, %v4350
      %v4367 = vsel %vm855, %v4352, %v4354
      %v4368 = vsel %vm855, %v4354, %v4356
      %v4369 = vsel %vm855, %v4358, %v4360
      %v4370 = vsel %vm855, %v4360, %v4362
      %v4383 = vadd.f32 %v4287, %v4340
      %v4384 = vadd.f32 %v4288, %v4363
      %v4385 = vadd.f32 %v4289, %v4364
      %v4386 = vadd.f32 %v4290, %v4346
      %v4387 = vadd.f32 %v4291, %v4365
      %v4388 = vadd.f32 %v4292, %v4366
      %v4389 = vadd.f32 %v4293, %v4352
      %v4390 = vadd.f32 %v4294, %v4367
      %v4391 = vadd.f32 %v4295, %v4368
      %v4392 = vadd.f32 %v4296, %v4358
      %v4393 = vadd.f32 %v4297, %v4369
      %v4394 = vadd.f32 %v4298, %v4370
      %4395 = vset.pattern.permute.xlu0 47
      %4396 = vperm.xlu0 %4395, %v331
      %v4397 = vpop.permute.xlu0 %4396
      %4399 = vset.pattern.permute.xlu0 47
      %4400 = vperm.xlu0 %4399, %v332
      %v4401 = vpop.permute.xlu0 %4400
      %4403 = vset.pattern.permute.xlu0 47
      %4404 = vperm.xlu0 %4403, %v333
      %v4405 = vpop.permute.xlu0 %4404
      %4407 = vset.pattern.permute.xlu0 47
      %4408 = vperm.xlu0 %4407, %v334
      %v4409 = vpop.permute.xlu0 %4408
      %v4411 = vmul.f32 %v4397, %v682
      %v4412 = vmul.f32 %v4397, %v683
      %v4413 = vmul.f32 %v4397, %v684
      %v4414 = vmul.f32 %v4401, %v685
      %v4415 = vmul.f32 %v4401, %v686
      %v4416 = vmul.f32 %v4401, %v687
      %v4417 = vmul.f32 %v4405, %v688
      %v4418 = vmul.f32 %v4405, %v689
      %v4419 = vmul.f32 %v4405, %v690
      %v4420 = vmul.f32 %v4409, %v691
      %v4421 = vmul.f32 %v4409, %v692
      %v4422 = vmul.f32 %v4409, %v693
      %4435 = vrot.lane.b32.xlu0 %v4411, 32
      %v4436 = vpop.permute.xlu0 %4435
      %4437 = vrot.lane.b32.xlu0 %v4412, 32
      %v4438 = vpop.permute.xlu0 %4437
      %4439 = vrot.lane.b32.xlu0 %v4413, 32
      %v4440 = vpop.permute.xlu0 %4439
      %4441 = vrot.lane.b32.xlu0 %v4414, 32
      %v4442 = vpop.permute.xlu0 %4441
      %4443 = vrot.lane.b32.xlu0 %v4415, 32
      %v4444 = vpop.permute.xlu0 %4443
      %4445 = vrot.lane.b32.xlu0 %v4416, 32
      %v4446 = vpop.permute.xlu0 %4445
      %4447 = vrot.lane.b32.xlu0 %v4417, 32
      %v4448 = vpop.permute.xlu0 %4447
      %4449 = vrot.lane.b32.xlu0 %v4418, 32
      %v4450 = vpop.permute.xlu0 %4449
      %4451 = vrot.lane.b32.xlu0 %v4419, 32
      %v4452 = vpop.permute.xlu0 %4451
      %4453 = vrot.lane.b32.xlu0 %v4420, 32
      %v4454 = vpop.permute.xlu0 %4453
      %4455 = vrot.lane.b32.xlu0 %v4421, 32
      %v4456 = vpop.permute.xlu0 %4455
      %4457 = vrot.lane.b32.xlu0 %v4422, 32
      %v4458 = vpop.permute.xlu0 %4457
      %v4459 = vsel %vm952, %v4436, %v4438
      %v4460 = vsel %vm952, %v4438, %v4440
      %v4461 = vsel %vm952, %v4442, %v4444
      %v4462 = vsel %vm952, %v4444, %v4446
      %v4463 = vsel %vm952, %v4448, %v4450
      %v4464 = vsel %vm952, %v4450, %v4452
      %v4465 = vsel %vm952, %v4454, %v4456
      %v4466 = vsel %vm952, %v4456, %v4458
      %v4479 = vadd.f32 %v4383, %v4436
      %v4480 = vadd.f32 %v4384, %v4459
      %v4481 = vadd.f32 %v4385, %v4460
      %v4482 = vadd.f32 %v4386, %v4442
      %v4483 = vadd.f32 %v4387, %v4461
      %v4484 = vadd.f32 %v4388, %v4462
      %v4485 = vadd.f32 %v4389, %v4448
      %v4486 = vadd.f32 %v4390, %v4463
      %v4487 = vadd.f32 %v4391, %v4464
      %v4488 = vadd.f32 %v4392, %v4454
      %v4489 = vadd.f32 %v4393, %v4465
      %v4490 = vadd.f32 %v4394, %v4466
      %s4491 = scalar_lea.vmem %s3, 5
      %v4492 = vld [vmem:[%s4491] ss:$8 sm:$0x3]
      %v4494 = vlaneseq
      %v4495 = vshrl.u32 %v4494, 7
      %v4496 = vsub.s32 0, %v4495
      %v4497 = vrot.slane %v4492, %v4496
      %v4498 = vlaneseq
      %v4499 = vshrl.u32 %v4498, 7
      %v4500 = vsub.s32 1, %v4499
      %v4501 = vrot.slane %v4492, %v4500
      %4502 = vrot.lane.b32.xlu0 %v4497, 82
      %v4503 = vpop.permute.xlu0 %4502
      %4504 = vrot.lane.b32.xlu0 %v4501, 82
      %v4505 = vpop.permute.xlu0 %4504
      %vm4506 = vcmask 670720
      %v4507 = vsel %vm4506, %v4503, %v4505
      %v4511 = vmul.f32 %v4479, %v4503
      %v4512 = vmul.f32 %v4480, %v4507
      %v4513 = vmul.f32 %v4481, %v4505
      %v4514 = vmul.f32 %v4482, %v4503
      %v4515 = vmul.f32 %v4483, %v4507
      %v4516 = vmul.f32 %v4484, %v4505
      %v4517 = vmul.f32 %v4485, %v4503
      %v4518 = vmul.f32 %v4486, %v4507
      %v4519 = vmul.f32 %v4487, %v4505
      %v4520 = vmul.f32 %v4488, %v4503
      %v4521 = vmul.f32 %v4489, %v4507
      %v4522 = vmul.f32 %v4490, %v4505
      %4535 = vrot.lane.b32.xlu0 %v4511, 123
      %v4536 = vpop.permute.xlu0 %4535
      %4537 = vrot.lane.b32.xlu0 %v4512, 123
      %v4538 = vpop.permute.xlu0 %4537
      %4539 = vrot.lane.b32.xlu0 %v4513, 123
      %v4540 = vpop.permute.xlu0 %4539
      %4541 = vrot.lane.b32.xlu0 %v4514, 123
      %v4542 = vpop.permute.xlu0 %4541
      %4543 = vrot.lane.b32.xlu0 %v4515, 123
      %v4544 = vpop.permute.xlu0 %4543
      %4545 = vrot.lane.b32.xlu0 %v4516, 123
      %v4546 = vpop.permute.xlu0 %4545
      %4547 = vrot.lane.b32.xlu0 %v4517, 123
      %v4548 = vpop.permute.xlu0 %4547
      %4549 = vrot.lane.b32.xlu0 %v4518, 123
      %v4550 = vpop.permute.xlu0 %4549
      %4551 = vrot.lane.b32.xlu0 %v4519, 123
      %v4552 = vpop.permute.xlu0 %4551
      %4553 = vrot.lane.b32.xlu0 %v4520, 123
      %v4554 = vpop.permute.xlu0 %4553
      %4555 = vrot.lane.b32.xlu0 %v4521, 123
      %v4556 = vpop.permute.xlu0 %4555
      %4557 = vrot.lane.b32.xlu0 %v4522, 123
      %v4558 = vpop.permute.xlu0 %4557
      %vm4559 = vcmask 1006592
      %v4560 = vsel %vm4559, %v4536, %v4538
      %v4561 = vsel %vm4559, %v4538, %v4540
      %v4562 = vsel %vm4559, %v4542, %v4544
      %v4563 = vsel %vm4559, %v4544, %v4546
      %v4564 = vsel %vm4559, %v4548, %v4550
      %v4565 = vsel %vm4559, %v4550, %v4552
      %v4566 = vsel %vm4559, %v4554, %v4556
      %v4567 = vsel %vm4559, %v4556, %v4558
      %v4580 = vadd.f32 %v3863, %v4560
      %v4581 = vadd.f32 %v3864, %v4561
      %v4582 = vadd.f32 %v3865, %v4540
      %v4583 = vadd.f32 %v3866, %v4562
      %v4584 = vadd.f32 %v3867, %v4563
      %v4585 = vadd.f32 %v3868, %v4546
      %v4586 = vadd.f32 %v3869, %v4564
      %v4587 = vadd.f32 %v3870, %v4565
      %v4588 = vadd.f32 %v3871, %v4552
      %v4589 = vadd.f32 %v3872, %v4566
      %v4590 = vadd.f32 %v3873, %v4567
      %v4591 = vadd.f32 %v3874, %v4558
      %4592 = vset.pattern.permute.xlu0 6
      %4593 = vperm.xlu0 %4592, %v331
      %v4594 = vpop.permute.xlu0 %4593
      %4596 = vset.pattern.permute.xlu0 6
      %4597 = vperm.xlu0 %4596, %v332
      %v4598 = vpop.permute.xlu0 %4597
      %4600 = vset.pattern.permute.xlu0 6
      %4601 = vperm.xlu0 %4600, %v333
      %v4602 = vpop.permute.xlu0 %4601
      %4604 = vset.pattern.permute.xlu0 6
      %4605 = vperm.xlu0 %4604, %v334
      %v4606 = vpop.permute.xlu0 %4605
      %v4608 = vmul.f32 %v4594, %v335
      %v4609 = vmul.f32 %v4594, %v336
      %v4610 = vmul.f32 %v4594, %v337
      %v4611 = vmul.f32 %v4598, %v338
      %v4612 = vmul.f32 %v4598, %v339
      %v4613 = vmul.f32 %v4598, %v340
      %v4614 = vmul.f32 %v4602, %v341
      %v4615 = vmul.f32 %v4602, %v342
      %v4616 = vmul.f32 %v4602, %v343
      %v4617 = vmul.f32 %v4606, %v344
      %v4618 = vmul.f32 %v4606, %v345
      %v4619 = vmul.f32 %v4606, %v346
      %v4620 = vadd.f32 %v4608, 0.0
      %v4621 = vadd.f32 %v4609, 0.0
      %v4622 = vadd.f32 %v4610, 0.0
      %v4623 = vadd.f32 %v4611, 0.0
      %v4624 = vadd.f32 %v4612, 0.0
      %v4625 = vadd.f32 %v4613, 0.0
      %v4626 = vadd.f32 %v4614, 0.0
      %v4627 = vadd.f32 %v4615, 0.0
      %v4628 = vadd.f32 %v4616, 0.0
      %v4629 = vadd.f32 %v4617, 0.0
      %v4630 = vadd.f32 %v4618, 0.0
      %v4631 = vadd.f32 %v4619, 0.0
      %4632 = vset.pattern.permute.xlu0 13
      %4633 = vperm.xlu0 %4632, %v331
      %v4634 = vpop.permute.xlu0 %4633
      %4636 = vset.pattern.permute.xlu0 13
      %4637 = vperm.xlu0 %4636, %v332
      %v4638 = vpop.permute.xlu0 %4637
      %4640 = vset.pattern.permute.xlu0 13
      %4641 = vperm.xlu0 %4640, %v333
      %v4642 = vpop.permute.xlu0 %4641
      %4644 = vset.pattern.permute.xlu0 13
      %4645 = vperm.xlu0 %4644, %v334
      %v4646 = vpop.permute.xlu0 %4645
      %v4648 = vmul.f32 %v4634, %v335
      %v4649 = vmul.f32 %v4634, %v336
      %v4650 = vmul.f32 %v4634, %v337
      %v4651 = vmul.f32 %v4638, %v338
      %v4652 = vmul.f32 %v4638, %v339
      %v4653 = vmul.f32 %v4638, %v340
      %v4654 = vmul.f32 %v4642, %v341
      %v4655 = vmul.f32 %v4642, %v342
      %v4656 = vmul.f32 %v4642, %v343
      %v4657 = vmul.f32 %v4646, %v344
      %v4658 = vmul.f32 %v4646, %v345
      %v4659 = vmul.f32 %v4646, %v346
      %4672 = vrot.lane.b32.xlu0 %v4648, 112
      %v4673 = vpop.permute.xlu0 %4672
      %4674 = vrot.lane.b32.xlu0 %v4649, 112
      %v4675 = vpop.permute.xlu0 %4674
      %4676 = vrot.lane.b32.xlu0 %v4650, 112
      %v4677 = vpop.permute.xlu0 %4676
      %4678 = vrot.lane.b32.xlu0 %v4651, 112
      %v4679 = vpop.permute.xlu0 %4678
      %4680 = vrot.lane.b32.xlu0 %v4652, 112
      %v4681 = vpop.permute.xlu0 %4680
      %4682 = vrot.lane.b32.xlu0 %v4653, 112
      %v4683 = vpop.permute.xlu0 %4682
      %4684 = vrot.lane.b32.xlu0 %v4654, 112
      %v4685 = vpop.permute.xlu0 %4684
      %4686 = vrot.lane.b32.xlu0 %v4655, 112
      %v4687 = vpop.permute.xlu0 %4686
      %4688 = vrot.lane.b32.xlu0 %v4656, 112
      %v4689 = vpop.permute.xlu0 %4688
      %4690 = vrot.lane.b32.xlu0 %v4657, 112
      %v4691 = vpop.permute.xlu0 %4690
      %4692 = vrot.lane.b32.xlu0 %v4658, 112
      %v4693 = vpop.permute.xlu0 %4692
      %4694 = vrot.lane.b32.xlu0 %v4659, 112
      %v4695 = vpop.permute.xlu0 %4694
      %v4696 = vsel %vm455, %v4673, %v4675
      %v4697 = vsel %vm455, %v4675, %v4677
      %v4698 = vsel %vm455, %v4679, %v4681
      %v4699 = vsel %vm455, %v4681, %v4683
      %v4700 = vsel %vm455, %v4685, %v4687
      %v4701 = vsel %vm455, %v4687, %v4689
      %v4702 = vsel %vm455, %v4691, %v4693
      %v4703 = vsel %vm455, %v4693, %v4695
      %v4716 = vadd.f32 %v4620, %v4696
      %v4717 = vadd.f32 %v4621, %v4697
      %v4718 = vadd.f32 %v4622, %v4677
      %v4719 = vadd.f32 %v4623, %v4698
      %v4720 = vadd.f32 %v4624, %v4699
      %v4721 = vadd.f32 %v4625, %v4683
      %v4722 = vadd.f32 %v4626, %v4700
      %v4723 = vadd.f32 %v4627, %v4701
      %v4724 = vadd.f32 %v4628, %v4689
      %v4725 = vadd.f32 %v4629, %v4702
      %v4726 = vadd.f32 %v4630, %v4703
      %v4727 = vadd.f32 %v4631, %v4695
      %4728 = vset.pattern.permute.xlu0 20
      %4729 = vperm.xlu0 %4728, %v331
      %v4730 = vpop.permute.xlu0 %4729
      %4732 = vset.pattern.permute.xlu0 20
      %4733 = vperm.xlu0 %4732, %v332
      %v4734 = vpop.permute.xlu0 %4733
      %4736 = vset.pattern.permute.xlu0 20
      %4737 = vperm.xlu0 %4736, %v333
      %v4738 = vpop.permute.xlu0 %4737
      %4740 = vset.pattern.permute.xlu0 20
      %4741 = vperm.xlu0 %4740, %v334
      %v4742 = vpop.permute.xlu0 %4741
      %v4744 = vmul.f32 %v4730, %v335
      %v4745 = vmul.f32 %v4730, %v336
      %v4746 = vmul.f32 %v4730, %v337
      %v4747 = vmul.f32 %v4734, %v338
      %v4748 = vmul.f32 %v4734, %v339
      %v4749 = vmul.f32 %v4734, %v340
      %v4750 = vmul.f32 %v4738, %v341
      %v4751 = vmul.f32 %v4738, %v342
      %v4752 = vmul.f32 %v4738, %v343
      %v4753 = vmul.f32 %v4742, %v344
      %v4754 = vmul.f32 %v4742, %v345
      %v4755 = vmul.f32 %v4742, %v346
      %4768 = vrot.lane.b32.xlu0 %v4744, 96
      %v4769 = vpop.permute.xlu0 %4768
      %4770 = vrot.lane.b32.xlu0 %v4745, 96
      %v4771 = vpop.permute.xlu0 %4770
      %4772 = vrot.lane.b32.xlu0 %v4746, 96
      %v4773 = vpop.permute.xlu0 %4772
      %4774 = vrot.lane.b32.xlu0 %v4747, 96
      %v4775 = vpop.permute.xlu0 %4774
      %4776 = vrot.lane.b32.xlu0 %v4748, 96
      %v4777 = vpop.permute.xlu0 %4776
      %4778 = vrot.lane.b32.xlu0 %v4749, 96
      %v4779 = vpop.permute.xlu0 %4778
      %4780 = vrot.lane.b32.xlu0 %v4750, 96
      %v4781 = vpop.permute.xlu0 %4780
      %4782 = vrot.lane.b32.xlu0 %v4751, 96
      %v4783 = vpop.permute.xlu0 %4782
      %4784 = vrot.lane.b32.xlu0 %v4752, 96
      %v4785 = vpop.permute.xlu0 %4784
      %4786 = vrot.lane.b32.xlu0 %v4753, 96
      %v4787 = vpop.permute.xlu0 %4786
      %4788 = vrot.lane.b32.xlu0 %v4754, 96
      %v4789 = vpop.permute.xlu0 %4788
      %4790 = vrot.lane.b32.xlu0 %v4755, 96
      %v4791 = vpop.permute.xlu0 %4790
      %v4792 = vsel %vm552, %v4769, %v4771
      %v4793 = vsel %vm552, %v4771, %v4773
      %v4794 = vsel %vm552, %v4775, %v4777
      %v4795 = vsel %vm552, %v4777, %v4779
      %v4796 = vsel %vm552, %v4781, %v4783
      %v4797 = vsel %vm552, %v4783, %v4785
      %v4798 = vsel %vm552, %v4787, %v4789
      %v4799 = vsel %vm552, %v4789, %v4791
      %v4812 = vadd.f32 %v4716, %v4792
      %v4813 = vadd.f32 %v4717, %v4793
      %v4814 = vadd.f32 %v4718, %v4773
      %v4815 = vadd.f32 %v4719, %v4794
      %v4816 = vadd.f32 %v4720, %v4795
      %v4817 = vadd.f32 %v4721, %v4779
      %v4818 = vadd.f32 %v4722, %v4796
      %v4819 = vadd.f32 %v4723, %v4797
      %v4820 = vadd.f32 %v4724, %v4785
      %v4821 = vadd.f32 %v4725, %v4798
      %v4822 = vadd.f32 %v4726, %v4799
      %v4823 = vadd.f32 %v4727, %v4791
      %4824 = vset.pattern.permute.xlu0 27
      %4825 = vperm.xlu0 %4824, %v331
      %v4826 = vpop.permute.xlu0 %4825
      %4828 = vset.pattern.permute.xlu0 27
      %4829 = vperm.xlu0 %4828, %v332
      %v4830 = vpop.permute.xlu0 %4829
      %4832 = vset.pattern.permute.xlu0 27
      %4833 = vperm.xlu0 %4832, %v333
      %v4834 = vpop.permute.xlu0 %4833
      %4836 = vset.pattern.permute.xlu0 27
      %4837 = vperm.xlu0 %4836, %v334
      %v4838 = vpop.permute.xlu0 %4837
      %v4840 = vmul.f32 %v4826, %v682
      %v4841 = vmul.f32 %v4826, %v683
      %v4842 = vmul.f32 %v4826, %v684
      %v4843 = vmul.f32 %v4830, %v685
      %v4844 = vmul.f32 %v4830, %v686
      %v4845 = vmul.f32 %v4830, %v687
      %v4846 = vmul.f32 %v4834, %v688
      %v4847 = vmul.f32 %v4834, %v689
      %v4848 = vmul.f32 %v4834, %v690
      %v4849 = vmul.f32 %v4838, %v691
      %v4850 = vmul.f32 %v4838, %v692
      %v4851 = vmul.f32 %v4838, %v693
      %4864 = vrot.lane.b32.xlu0 %v4840, 80
      %v4865 = vpop.permute.xlu0 %4864
      %4866 = vrot.lane.b32.xlu0 %v4841, 80
      %v4867 = vpop.permute.xlu0 %4866
      %4868 = vrot.lane.b32.xlu0 %v4842, 80
      %v4869 = vpop.permute.xlu0 %4868
      %4870 = vrot.lane.b32.xlu0 %v4843, 80
      %v4871 = vpop.permute.xlu0 %4870
      %4872 = vrot.lane.b32.xlu0 %v4844, 80
      %v4873 = vpop.permute.xlu0 %4872
      %4874 = vrot.lane.b32.xlu0 %v4845, 80
      %v4875 = vpop.permute.xlu0 %4874
      %4876 = vrot.lane.b32.xlu0 %v4846, 80
      %v4877 = vpop.permute.xlu0 %4876
      %4878 = vrot.lane.b32.xlu0 %v4847, 80
      %v4879 = vpop.permute.xlu0 %4878
      %4880 = vrot.lane.b32.xlu0 %v4848, 80
      %v4881 = vpop.permute.xlu0 %4880
      %4882 = vrot.lane.b32.xlu0 %v4849, 80
      %v4883 = vpop.permute.xlu0 %4882
      %4884 = vrot.lane.b32.xlu0 %v4850, 80
      %v4885 = vpop.permute.xlu0 %4884
      %4886 = vrot.lane.b32.xlu0 %v4851, 80
      %v4887 = vpop.permute.xlu0 %4886
      %v4888 = vsel %vm649, %v4865, %v4867
      %v4889 = vsel %vm649, %v4867, %v4869
      %v4890 = vsel %vm649, %v4871, %v4873
      %v4891 = vsel %vm649, %v4873, %v4875
      %v4892 = vsel %vm649, %v4877, %v4879
      %v4893 = vsel %vm649, %v4879, %v4881
      %v4894 = vsel %vm649, %v4883, %v4885
      %v4895 = vsel %vm649, %v4885, %v4887
      %v4908 = vadd.f32 %v4812, %v4865
      %v4909 = vadd.f32 %v4813, %v4888
      %v4910 = vadd.f32 %v4814, %v4889
      %v4911 = vadd.f32 %v4815, %v4871
      %v4912 = vadd.f32 %v4816, %v4890
      %v4913 = vadd.f32 %v4817, %v4891
      %v4914 = vadd.f32 %v4818, %v4877
      %v4915 = vadd.f32 %v4819, %v4892
      %v4916 = vadd.f32 %v4820, %v4893
      %v4917 = vadd.f32 %v4821, %v4883
      %v4918 = vadd.f32 %v4822, %v4894
      %v4919 = vadd.f32 %v4823, %v4895
      %4920 = vset.pattern.permute.xlu0 34
      %4921 = vperm.xlu0 %4920, %v331
      %v4922 = vpop.permute.xlu0 %4921
      %4924 = vset.pattern.permute.xlu0 34
      %4925 = vperm.xlu0 %4924, %v332
      %v4926 = vpop.permute.xlu0 %4925
      %4928 = vset.pattern.permute.xlu0 34
      %4929 = vperm.xlu0 %4928, %v333
      %v4930 = vpop.permute.xlu0 %4929
      %4932 = vset.pattern.permute.xlu0 34
      %4933 = vperm.xlu0 %4932, %v334
      %v4934 = vpop.permute.xlu0 %4933
      %v4936 = vmul.f32 %v4922, %v682
      %v4937 = vmul.f32 %v4922, %v683
      %v4938 = vmul.f32 %v4922, %v684
      %v4939 = vmul.f32 %v4926, %v685
      %v4940 = vmul.f32 %v4926, %v686
      %v4941 = vmul.f32 %v4926, %v687
      %v4942 = vmul.f32 %v4930, %v688
      %v4943 = vmul.f32 %v4930, %v689
      %v4944 = vmul.f32 %v4930, %v690
      %v4945 = vmul.f32 %v4934, %v691
      %v4946 = vmul.f32 %v4934, %v692
      %v4947 = vmul.f32 %v4934, %v693
      %4960 = vrot.lane.b32.xlu0 %v4936, 64
      %v4961 = vpop.permute.xlu0 %4960
      %4962 = vrot.lane.b32.xlu0 %v4937, 64
      %v4963 = vpop.permute.xlu0 %4962
      %4964 = vrot.lane.b32.xlu0 %v4938, 64
      %v4965 = vpop.permute.xlu0 %4964
      %4966 = vrot.lane.b32.xlu0 %v4939, 64
      %v4967 = vpop.permute.xlu0 %4966
      %4968 = vrot.lane.b32.xlu0 %v4940, 64
      %v4969 = vpop.permute.xlu0 %4968
      %4970 = vrot.lane.b32.xlu0 %v4941, 64
      %v4971 = vpop.permute.xlu0 %4970
      %4972 = vrot.lane.b32.xlu0 %v4942, 64
      %v4973 = vpop.permute.xlu0 %4972
      %4974 = vrot.lane.b32.xlu0 %v4943, 64
      %v4975 = vpop.permute.xlu0 %4974
      %4976 = vrot.lane.b32.xlu0 %v4944, 64
      %v4977 = vpop.permute.xlu0 %4976
      %4978 = vrot.lane.b32.xlu0 %v4945, 64
      %v4979 = vpop.permute.xlu0 %4978
      %4980 = vrot.lane.b32.xlu0 %v4946, 64
      %v4981 = vpop.permute.xlu0 %4980
      %4982 = vrot.lane.b32.xlu0 %v4947, 64
      %v4983 = vpop.permute.xlu0 %4982
      %v4984 = vsel %vm758, %v4961, %v4963
      %v4985 = vsel %vm758, %v4963, %v4965
      %v4986 = vsel %vm758, %v4967, %v4969
      %v4987 = vsel %vm758, %v4969, %v4971
      %v4988 = vsel %vm758, %v4973, %v4975
      %v4989 = vsel %vm758, %v4975, %v4977
      %v4990 = vsel %vm758, %v4979, %v4981
      %v4991 = vsel %vm758, %v4981, %v4983
      %v5004 = vadd.f32 %v4908, %v4961
      %v5005 = vadd.f32 %v4909, %v4984
      %v5006 = vadd.f32 %v4910, %v4985
      %v5007 = vadd.f32 %v4911, %v4967
      %v5008 = vadd.f32 %v4912, %v4986
      %v5009 = vadd.f32 %v4913, %v4987
      %v5010 = vadd.f32 %v4914, %v4973
      %v5011 = vadd.f32 %v4915, %v4988
      %v5012 = vadd.f32 %v4916, %v4989
      %v5013 = vadd.f32 %v4917, %v4979
      %v5014 = vadd.f32 %v4918, %v4990
      %v5015 = vadd.f32 %v4919, %v4991
      %5016 = vset.pattern.permute.xlu0 41
      %5017 = vperm.xlu0 %5016, %v331
      %v5018 = vpop.permute.xlu0 %5017
      %5020 = vset.pattern.permute.xlu0 41
      %5021 = vperm.xlu0 %5020, %v332
      %v5022 = vpop.permute.xlu0 %5021
      %5024 = vset.pattern.permute.xlu0 41
      %5025 = vperm.xlu0 %5024, %v333
      %v5026 = vpop.permute.xlu0 %5025
      %5028 = vset.pattern.permute.xlu0 41
      %5029 = vperm.xlu0 %5028, %v334
      %v5030 = vpop.permute.xlu0 %5029
      %v5032 = vmul.f32 %v5018, %v682
      %v5033 = vmul.f32 %v5018, %v683
      %v5034 = vmul.f32 %v5018, %v684
      %v5035 = vmul.f32 %v5022, %v685
      %v5036 = vmul.f32 %v5022, %v686
      %v5037 = vmul.f32 %v5022, %v687
      %v5038 = vmul.f32 %v5026, %v688
      %v5039 = vmul.f32 %v5026, %v689
      %v5040 = vmul.f32 %v5026, %v690
      %v5041 = vmul.f32 %v5030, %v691
      %v5042 = vmul.f32 %v5030, %v692
      %v5043 = vmul.f32 %v5030, %v693
      %5056 = vrot.lane.b32.xlu0 %v5032, 48
      %v5057 = vpop.permute.xlu0 %5056
      %5058 = vrot.lane.b32.xlu0 %v5033, 48
      %v5059 = vpop.permute.xlu0 %5058
      %5060 = vrot.lane.b32.xlu0 %v5034, 48
      %v5061 = vpop.permute.xlu0 %5060
      %5062 = vrot.lane.b32.xlu0 %v5035, 48
      %v5063 = vpop.permute.xlu0 %5062
      %5064 = vrot.lane.b32.xlu0 %v5036, 48
      %v5065 = vpop.permute.xlu0 %5064
      %5066 = vrot.lane.b32.xlu0 %v5037, 48
      %v5067 = vpop.permute.xlu0 %5066
      %5068 = vrot.lane.b32.xlu0 %v5038, 48
      %v5069 = vpop.permute.xlu0 %5068
      %5070 = vrot.lane.b32.xlu0 %v5039, 48
      %v5071 = vpop.permute.xlu0 %5070
      %5072 = vrot.lane.b32.xlu0 %v5040, 48
      %v5073 = vpop.permute.xlu0 %5072
      %5074 = vrot.lane.b32.xlu0 %v5041, 48
      %v5075 = vpop.permute.xlu0 %5074
      %5076 = vrot.lane.b32.xlu0 %v5042, 48
      %v5077 = vpop.permute.xlu0 %5076
      %5078 = vrot.lane.b32.xlu0 %v5043, 48
      %v5079 = vpop.permute.xlu0 %5078
      %v5080 = vsel %vm855, %v5057, %v5059
      %v5081 = vsel %vm855, %v5059, %v5061
      %v5082 = vsel %vm855, %v5063, %v5065
      %v5083 = vsel %vm855, %v5065, %v5067
      %v5084 = vsel %vm855, %v5069, %v5071
      %v5085 = vsel %vm855, %v5071, %v5073
      %v5086 = vsel %vm855, %v5075, %v5077
      %v5087 = vsel %vm855, %v5077, %v5079
      %v5100 = vadd.f32 %v5004, %v5057
      %v5101 = vadd.f32 %v5005, %v5080
      %v5102 = vadd.f32 %v5006, %v5081
      %v5103 = vadd.f32 %v5007, %v5063
      %v5104 = vadd.f32 %v5008, %v5082
      %v5105 = vadd.f32 %v5009, %v5083
      %v5106 = vadd.f32 %v5010, %v5069
      %v5107 = vadd.f32 %v5011, %v5084
      %v5108 = vadd.f32 %v5012, %v5085
      %v5109 = vadd.f32 %v5013, %v5075
      %v5110 = vadd.f32 %v5014, %v5086
      %v5111 = vadd.f32 %v5015, %v5087
      %5112 = vset.pattern.permute.xlu0 48
      %5113 = vperm.xlu0 %5112, %v331
      %v5114 = vpop.permute.xlu0 %5113
      %5116 = vset.pattern.permute.xlu0 48
      %5117 = vperm.xlu0 %5116, %v332
      %v5118 = vpop.permute.xlu0 %5117
      %5120 = vset.pattern.permute.xlu0 48
      %5121 = vperm.xlu0 %5120, %v333
      %v5122 = vpop.permute.xlu0 %5121
      %5124 = vset.pattern.permute.xlu0 48
      %5125 = vperm.xlu0 %5124, %v334
      %v5126 = vpop.permute.xlu0 %5125
      %v5128 = vmul.f32 %v5114, %v682
      %v5129 = vmul.f32 %v5114, %v683
      %v5130 = vmul.f32 %v5114, %v684
      %v5131 = vmul.f32 %v5118, %v685
      %v5132 = vmul.f32 %v5118, %v686
      %v5133 = vmul.f32 %v5118, %v687
      %v5134 = vmul.f32 %v5122, %v688
      %v5135 = vmul.f32 %v5122, %v689
      %v5136 = vmul.f32 %v5122, %v690
      %v5137 = vmul.f32 %v5126, %v691
      %v5138 = vmul.f32 %v5126, %v692
      %v5139 = vmul.f32 %v5126, %v693
      %5152 = vrot.lane.b32.xlu0 %v5128, 32
      %v5153 = vpop.permute.xlu0 %5152
      %5154 = vrot.lane.b32.xlu0 %v5129, 32
      %v5155 = vpop.permute.xlu0 %5154
      %5156 = vrot.lane.b32.xlu0 %v5130, 32
      %v5157 = vpop.permute.xlu0 %5156
      %5158 = vrot.lane.b32.xlu0 %v5131, 32
      %v5159 = vpop.permute.xlu0 %5158
      %5160 = vrot.lane.b32.xlu0 %v5132, 32
      %v5161 = vpop.permute.xlu0 %5160
      %5162 = vrot.lane.b32.xlu0 %v5133, 32
      %v5163 = vpop.permute.xlu0 %5162
      %5164 = vrot.lane.b32.xlu0 %v5134, 32
      %v5165 = vpop.permute.xlu0 %5164
      %5166 = vrot.lane.b32.xlu0 %v5135, 32
      %v5167 = vpop.permute.xlu0 %5166
      %5168 = vrot.lane.b32.xlu0 %v5136, 32
      %v5169 = vpop.permute.xlu0 %5168
      %5170 = vrot.lane.b32.xlu0 %v5137, 32
      %v5171 = vpop.permute.xlu0 %5170
      %5172 = vrot.lane.b32.xlu0 %v5138, 32
      %v5173 = vpop.permute.xlu0 %5172
      %5174 = vrot.lane.b32.xlu0 %v5139, 32
      %v5175 = vpop.permute.xlu0 %5174
      %v5176 = vsel %vm952, %v5153, %v5155
      %v5177 = vsel %vm952, %v5155, %v5157
      %v5178 = vsel %vm952, %v5159, %v5161
      %v5179 = vsel %vm952, %v5161, %v5163
      %v5180 = vsel %vm952, %v5165, %v5167
      %v5181 = vsel %vm952, %v5167, %v5169
      %v5182 = vsel %vm952, %v5171, %v5173
      %v5183 = vsel %vm952, %v5173, %v5175
      %v5196 = vadd.f32 %v5100, %v5153
      %v5197 = vadd.f32 %v5101, %v5176
      %v5198 = vadd.f32 %v5102, %v5177
      %v5199 = vadd.f32 %v5103, %v5159
      %v5200 = vadd.f32 %v5104, %v5178
      %v5201 = vadd.f32 %v5105, %v5179
      %v5202 = vadd.f32 %v5106, %v5165
      %v5203 = vadd.f32 %v5107, %v5180
      %v5204 = vadd.f32 %v5108, %v5181
      %v5205 = vadd.f32 %v5109, %v5171
      %v5206 = vadd.f32 %v5110, %v5182
      %v5207 = vadd.f32 %v5111, %v5183
      %s5208 = scalar_lea.vmem %s3, 6
      %v5209 = vld [vmem:[%s5208] ss:$8 sm:$0x3]
      %v5211 = vlaneseq
      %v5212 = vshrl.u32 %v5211, 7
      %v5213 = vsub.s32 0, %v5212
      %v5214 = vrot.slane %v5209, %v5213
      %v5215 = vlaneseq
      %v5216 = vshrl.u32 %v5215, 7
      %v5217 = vsub.s32 1, %v5216
      %v5218 = vrot.slane %v5209, %v5217
      %5219 = vrot.lane.b32.xlu0 %v5214, 83
      %v5220 = vpop.permute.xlu0 %5219
      %5221 = vrot.lane.b32.xlu0 %v5218, 83
      %v5222 = vpop.permute.xlu0 %5221
      %vm5223 = vcmask 678912
      %v5224 = vsel %vm5223, %v5220, %v5222
      %v5228 = vmul.f32 %v5196, %v5220
      %v5229 = vmul.f32 %v5197, %v5224
      %v5230 = vmul.f32 %v5198, %v5222
      %v5231 = vmul.f32 %v5199, %v5220
      %v5232 = vmul.f32 %v5200, %v5224
      %v5233 = vmul.f32 %v5201, %v5222
      %v5234 = vmul.f32 %v5202, %v5220
      %v5235 = vmul.f32 %v5203, %v5224
      %v5236 = vmul.f32 %v5204, %v5222
      %v5237 = vmul.f32 %v5205, %v5220
      %v5238 = vmul.f32 %v5206, %v5224
      %v5239 = vmul.f32 %v5207, %v5222
      %5252 = vrot.lane.b32.xlu0 %v5228, 122
      %v5253 = vpop.permute.xlu0 %5252
      %5254 = vrot.lane.b32.xlu0 %v5229, 122
      %v5255 = vpop.permute.xlu0 %5254
      %5256 = vrot.lane.b32.xlu0 %v5230, 122
      %v5257 = vpop.permute.xlu0 %5256
      %5258 = vrot.lane.b32.xlu0 %v5231, 122
      %v5259 = vpop.permute.xlu0 %5258
      %5260 = vrot.lane.b32.xlu0 %v5232, 122
      %v5261 = vpop.permute.xlu0 %5260
      %5262 = vrot.lane.b32.xlu0 %v5233, 122
      %v5263 = vpop.permute.xlu0 %5262
      %5264 = vrot.lane.b32.xlu0 %v5234, 122
      %v5265 = vpop.permute.xlu0 %5264
      %5266 = vrot.lane.b32.xlu0 %v5235, 122
      %v5267 = vpop.permute.xlu0 %5266
      %5268 = vrot.lane.b32.xlu0 %v5236, 122
      %v5269 = vpop.permute.xlu0 %5268
      %5270 = vrot.lane.b32.xlu0 %v5237, 122
      %v5271 = vpop.permute.xlu0 %5270
      %5272 = vrot.lane.b32.xlu0 %v5238, 122
      %v5273 = vpop.permute.xlu0 %5272
      %5274 = vrot.lane.b32.xlu0 %v5239, 122
      %v5275 = vpop.permute.xlu0 %5274
      %vm5276 = vcmask 998400
      %v5277 = vsel %vm5276, %v5253, %v5255
      %v5278 = vsel %vm5276, %v5255, %v5257
      %v5279 = vsel %vm5276, %v5259, %v5261
      %v5280 = vsel %vm5276, %v5261, %v5263
      %v5281 = vsel %vm5276, %v5265, %v5267
      %v5282 = vsel %vm5276, %v5267, %v5269
      %v5283 = vsel %vm5276, %v5271, %v5273
      %v5284 = vsel %vm5276, %v5273, %v5275
      %v5297 = vadd.f32 %v4580, %v5277
      %v5298 = vadd.f32 %v4581, %v5278
      %v5299 = vadd.f32 %v4582, %v5257
      %v5300 = vadd.f32 %v4583, %v5279
      %v5301 = vadd.f32 %v4584, %v5280
      %v5302 = vadd.f32 %v4585, %v5263
      %v5303 = vadd.f32 %v4586, %v5281
      %v5304 = vadd.f32 %v4587, %v5282
      %v5305 = vadd.f32 %v4588, %v5269
      %v5306 = vadd.f32 %v4589, %v5283
      %v5307 = vadd.f32 %v4590, %v5284
      %v5308 = vadd.f32 %v4591, %v5275
      %v5309 = vld [vmem:[%s2] sm:$0xff]
      %v5310 = vld [vmem:[%s2 + $0x8] sm:$0xff]
      %v5311 = vld [vmem:[%s2 + $0x10] sm:$0xff]
      %v5312 = vld [vmem:[%s2 + $0x18] sm:$0xff]
      %5314 = vset.pattern.permute.xlu0 0
      %5315 = vperm.xlu0 %5314, %v5309
      %v5316 = vpop.permute.xlu0 %5315
      %5319 = vset.pattern.permute.xlu0 0
      %5320 = vperm.xlu0 %5319, %v5310
      %v5321 = vpop.permute.xlu0 %5320
      %5324 = vset.pattern.permute.xlu0 0
      %5325 = vperm.xlu0 %5324, %v5311
      %v5326 = vpop.permute.xlu0 %5325
      %5329 = vset.pattern.permute.xlu0 0
      %5330 = vperm.xlu0 %5329, %v5312
      %v5331 = vpop.permute.xlu0 %5330
      %v5333 = vadd.f32 %v5297, %v5316
      %v5334 = vadd.f32 %v5298, %v5316
      %v5335 = vadd.f32 %v5299, %v5316
      %v5336 = vadd.f32 %v5300, %v5321
      %v5337 = vadd.f32 %v5301, %v5321
      %v5338 = vadd.f32 %v5302, %v5321
      %v5339 = vadd.f32 %v5303, %v5326
      %v5340 = vadd.f32 %v5304, %v5326
      %v5341 = vadd.f32 %v5305, %v5326
      %v5342 = vadd.f32 %v5306, %v5331
      %v5343 = vadd.f32 %v5307, %v5331
      %v5344 = vadd.f32 %v5308, %v5331
      %5357 = vrot.lane.b32.xlu0 %v5333, 51
      %v5358 = vpop.permute.xlu0 %5357
      %5359 = vrot.lane.b32.xlu0 %v5334, 51
      %v5360 = vpop.permute.xlu0 %5359
      %5361 = vrot.lane.b32.xlu0 %v5335, 51
      %v5362 = vpop.permute.xlu0 %5361
      %5363 = vrot.lane.b32.xlu0 %v5336, 51
      %v5364 = vpop.permute.xlu0 %5363
      %5365 = vrot.lane.b32.xlu0 %v5337, 51
      %v5366 = vpop.permute.xlu0 %5365
      %5367 = vrot.lane.b32.xlu0 %v5338, 51
      %v5368 = vpop.permute.xlu0 %5367
      %5369 = vrot.lane.b32.xlu0 %v5339, 51
      %v5370 = vpop.permute.xlu0 %5369
      %5371 = vrot.lane.b32.xlu0 %v5340, 51
      %v5372 = vpop.permute.xlu0 %5371
      %5373 = vrot.lane.b32.xlu0 %v5341, 51
      %v5374 = vpop.permute.xlu0 %5373
      %5375 = vrot.lane.b32.xlu0 %v5342, 51
      %v5376 = vpop.permute.xlu0 %5375
      %5377 = vrot.lane.b32.xlu0 %v5343, 51
      %v5378 = vpop.permute.xlu0 %5377
      %5379 = vrot.lane.b32.xlu0 %v5344, 51
      %v5380 = vpop.permute.xlu0 %5379
      %vm5381 = vcmask 416768
      %v5382 = vsel %vm5381, %v5358, %v5360
      %v5383 = vsel %vm5381, %v5360, %v5362
      %v5384 = vsel %vm5381, %v5364, %v5366
      %v5385 = vsel %vm5381, %v5366, %v5368
      %v5386 = vsel %vm5381, %v5370, %v5372
      %v5387 = vsel %vm5381, %v5372, %v5374
      %v5388 = vsel %vm5381, %v5376, %v5378
      %v5389 = vsel %vm5381, %v5378, %v5380
      %v5398 = vadd.f32 %v5382, %v5383
      %5399 = vadd.xlane.f32.xlu0 %v5398
      %v5400 = vpop.xlane.xlu0 %5399
      %v5401 = vadd.f32 %v5384, %v5385
      %5402 = vadd.xlane.f32.xlu0 %v5401
      %v5403 = vpop.xlane.xlu0 %5402
      %v5404 = vadd.f32 %v5386, %v5387
      %5405 = vadd.xlane.f32.xlu0 %v5404
      %v5406 = vpop.xlane.xlu0 %5405
      %v5407 = vadd.f32 %v5388, %v5389
      %5408 = vadd.xlane.f32.xlu0 %v5407
      %v5409 = vpop.xlane.xlu0 %5408
      %v5410 = vmul.f32 %v5400, 0.00390625
      %v5411 = vmul.f32 %v5403, 0.00390625
      %v5412 = vmul.f32 %v5406, 0.00390625
      %v5413 = vmul.f32 %v5409, 0.00390625
      %v5414 = vmul.f32 %v5333, %v5333
      %v5415 = vmul.f32 %v5334, %v5334
      %v5416 = vmul.f32 %v5335, %v5335
      %v5417 = vmul.f32 %v5336, %v5336
      %v5418 = vmul.f32 %v5337, %v5337
      %v5419 = vmul.f32 %v5338, %v5338
      %v5420 = vmul.f32 %v5339, %v5339
      %v5421 = vmul.f32 %v5340, %v5340
      %v5422 = vmul.f32 %v5341, %v5341
      %v5423 = vmul.f32 %v5342, %v5342
      %v5424 = vmul.f32 %v5343, %v5343
      %v5425 = vmul.f32 %v5344, %v5344
      %5438 = vrot.lane.b32.xlu0 %v5414, 51
      %v5439 = vpop.permute.xlu0 %5438
      %5440 = vrot.lane.b32.xlu0 %v5415, 51
      %v5441 = vpop.permute.xlu0 %5440
      %5442 = vrot.lane.b32.xlu0 %v5416, 51
      %v5443 = vpop.permute.xlu0 %5442
      %5444 = vrot.lane.b32.xlu0 %v5417, 51
      %v5445 = vpop.permute.xlu0 %5444
      %5446 = vrot.lane.b32.xlu0 %v5418, 51
      %v5447 = vpop.permute.xlu0 %5446
      %5448 = vrot.lane.b32.xlu0 %v5419, 51
      %v5449 = vpop.permute.xlu0 %5448
      %5450 = vrot.lane.b32.xlu0 %v5420, 51
      %v5451 = vpop.permute.xlu0 %5450
      %5452 = vrot.lane.b32.xlu0 %v5421, 51
      %v5453 = vpop.permute.xlu0 %5452
      %5454 = vrot.lane.b32.xlu0 %v5422, 51
      %v5455 = vpop.permute.xlu0 %5454
      %5456 = vrot.lane.b32.xlu0 %v5423, 51
      %v5457 = vpop.permute.xlu0 %5456
      %5458 = vrot.lane.b32.xlu0 %v5424, 51
      %v5459 = vpop.permute.xlu0 %5458
      %5460 = vrot.lane.b32.xlu0 %v5425, 51
      %v5461 = vpop.permute.xlu0 %5460
      %v5462 = vsel %vm5381, %v5439, %v5441
      %v5463 = vsel %vm5381, %v5441, %v5443
      %v5464 = vsel %vm5381, %v5445, %v5447
      %v5465 = vsel %vm5381, %v5447, %v5449
      %v5466 = vsel %vm5381, %v5451, %v5453
      %v5467 = vsel %vm5381, %v5453, %v5455
      %v5468 = vsel %vm5381, %v5457, %v5459
      %v5469 = vsel %vm5381, %v5459, %v5461
      %v5478 = vadd.f32 %v5462, %v5463
      %5479 = vadd.xlane.f32.xlu0 %v5478
      %v5480 = vpop.xlane.xlu0 %5479
      %v5481 = vadd.f32 %v5464, %v5465
      %5482 = vadd.xlane.f32.xlu0 %v5481
      %v5483 = vpop.xlane.xlu0 %5482
      %v5484 = vadd.f32 %v5466, %v5467
      %5485 = vadd.xlane.f32.xlu0 %v5484
      %v5486 = vpop.xlane.xlu0 %5485
      %v5487 = vadd.f32 %v5468, %v5469
      %5488 = vadd.xlane.f32.xlu0 %v5487
      %v5489 = vpop.xlane.xlu0 %5488
      %v5490 = vmul.f32 %v5480, 0.00390625
      %v5491 = vmul.f32 %v5483, 0.00390625
      %v5492 = vmul.f32 %v5486, 0.00390625
      %v5493 = vmul.f32 %v5489, 0.00390625
      %v5494 = vmul.f32 %v5410, %v5410
      %v5495 = vmul.f32 %v5411, %v5411
      %v5496 = vmul.f32 %v5412, %v5412
      %v5497 = vmul.f32 %v5413, %v5413
      %v5498 = vsub.f32 %v5490, %v5494
      %v5499 = vsub.f32 %v5491, %v5495
      %v5500 = vsub.f32 %v5492, %v5496
      %v5501 = vsub.f32 %v5493, %v5497
      %v5502 = vsub.f32 %v5333, %v5410
      %v5503 = vsub.f32 %v5334, %v5410
      %v5504 = vsub.f32 %v5335, %v5410
      %v5505 = vsub.f32 %v5336, %v5411
      %v5506 = vsub.f32 %v5337, %v5411
      %v5507 = vsub.f32 %v5338, %v5411
      %v5508 = vsub.f32 %v5339, %v5412
      %v5509 = vsub.f32 %v5340, %v5412
      %v5510 = vsub.f32 %v5341, %v5412
      %v5511 = vsub.f32 %v5342, %v5413
      %v5512 = vsub.f32 %v5343, %v5413
      %v5513 = vsub.f32 %v5344, %v5413
      %v5514 = vadd.f32 %v5498, 1e-05
      %v5515 = vadd.f32 %v5499, 1e-05
      %v5516 = vadd.f32 %v5500, 1e-05
      %v5517 = vadd.f32 %v5501, 1e-05
      %v5518 = vrsqrt.pop %v5514
      %v5519 = vrsqrt.pop %v5515
      %v5520 = vrsqrt.pop %v5516
      %v5521 = vrsqrt.pop %v5517
      %v5522 = vmul.f32 %v5502, %v5518
      %v5523 = vmul.f32 %v5503, %v5518
      %v5524 = vmul.f32 %v5504, %v5518
      %v5525 = vmul.f32 %v5505, %v5519
      %v5526 = vmul.f32 %v5506, %v5519
      %v5527 = vmul.f32 %v5507, %v5519
      %v5528 = vmul.f32 %v5508, %v5520
      %v5529 = vmul.f32 %v5509, %v5520
      %v5530 = vmul.f32 %v5510, %v5520
      %v5531 = vmul.f32 %v5511, %v5521
      %v5532 = vmul.f32 %v5512, %v5521
      %v5533 = vmul.f32 %v5513, %v5521
      %v5534 = vld [vmem:[%s4] sm:$0xf]
      %v5535 = vld [vmem:[%s4 + $0x4] sm:$0xf]
      %v5536 = vld [vmem:[%s4 + $0x8] sm:$0xf]
      %v5537 = vld [vmem:[%s4 + $0xc] sm:$0xf]
      %v5538 = vld [vmem:[%s4 + $0x10] sm:$0xf]
      %v5539 = vld [vmem:[%s4 + $0x14] sm:$0xf]
      %v5540 = vld [vmem:[%s4 + $0x18] sm:$0xf]
      %v5541 = vld [vmem:[%s4 + $0x1c] sm:$0xf]
      %v5542 = vpack.c.bf16 %v5525, %v5522
      %v5543 = vpack.c.bf16 %v5526, %v5523
      %v5544 = vpack.c.bf16 %v5527, %v5524
      %v5545 = vpack.c.bf16 %v5531, %v5528
      %v5546 = vpack.c.bf16 %v5532, %v5529
      %v5547 = vpack.c.bf16 %v5533, %v5530
      %v5548 = vld [vmem:[%s5] sm:$0xff]
      %v5549 = vld [vmem:[%s5 + $0x8] sm:$0xff]
      %v5550 = vld [vmem:[%s5 + $0x10] sm:$0xff]
      %v5551 = vld [vmem:[%s5 + $0x18] sm:$0xff]
      %v5552 = vld [vmem:[%s5 + $0x20] sm:$0xff]
      %v5553 = vld [vmem:[%s5 + $0x28] sm:$0xff]
      %v5554 = vld [vmem:[%s5 + $0x30] sm:$0xff]
      %v5555 = vld [vmem:[%s5 + $0x38] sm:$0xff]
      %5557 = vset.pattern.permute.xlu0 0
      %5558 = vperm.xlu0 %5557, %v5548
      %v5559 = vpop.permute.xlu0 %5558
      %5562 = vset.pattern.permute.xlu0 0
      %5563 = vperm.xlu0 %5562, %v5549
      %v5564 = vpop.permute.xlu0 %5563
      %5567 = vset.pattern.permute.xlu0 0
      %5568 = vperm.xlu0 %5567, %v5550
      %v5569 = vpop.permute.xlu0 %5568
      %5572 = vset.pattern.permute.xlu0 0
      %5573 = vperm.xlu0 %5572, %v5551
      %v5574 = vpop.permute.xlu0 %5573
      %5577 = vset.pattern.permute.xlu0 0
      %5578 = vperm.xlu0 %5577, %v5552
      %v5579 = vpop.permute.xlu0 %5578
      %5582 = vset.pattern.permute.xlu0 0
      %5583 = vperm.xlu0 %5582, %v5553
      %v5584 = vpop.permute.xlu0 %5583
      %5587 = vset.pattern.permute.xlu0 0
      %5588 = vperm.xlu0 %5587, %v5554
      %v5589 = vpop.permute.xlu0 %5588
      %5592 = vset.pattern.permute.xlu0 0
      %5593 = vperm.xlu0 %5592, %v5555
      %v5594 = vpop.permute.xlu0 %5593
      %v5604 = vunpack.c.l.b16 %v5534
      %v5605 = vunpack.c.l.b16 %v5535
      %v5606 = vunpack.c.l.b16 %v5536
      %v5607 = vunpack.c.l.b16 %v5537
      %v5608 = vunpack.c.l.b16 %v5538
      %v5609 = vunpack.c.l.b16 %v5539
      %v5610 = vunpack.c.l.b16 %v5540
      %v5611 = vunpack.c.l.b16 %v5541
      %v5612 = vpack.c.b16 %v5605, %v5604
      %v5613 = vpack.c.b16 %v5607, %v5606
      %v5614 = vpack.c.b16 %v5609, %v5608
      %v5615 = vpack.c.b16 %v5611, %v5610
      %5622 = vrot.lane.b32.xlu0 %v5542, 51
      %v5623 = vpop.permute.xlu0 %5622
      %5624 = vrot.lane.b32.xlu0 %v5543, 51
      %v5625 = vpop.permute.xlu0 %5624
      %5626 = vrot.lane.b32.xlu0 %v5544, 51
      %v5627 = vpop.permute.xlu0 %5626
      %5628 = vrot.lane.b32.xlu0 %v5545, 51
      %v5629 = vpop.permute.xlu0 %5628
      %5630 = vrot.lane.b32.xlu0 %v5546, 51
      %v5631 = vpop.permute.xlu0 %5630
      %5632 = vrot.lane.b32.xlu0 %v5547, 51
      %v5633 = vpop.permute.xlu0 %5632
      %vm5634 = vcmask 416768
      %v5635 = vsel %vm5634, %v5623, %v5625
      %v5636 = vsel %vm5634, %v5625, %v5627
      %v5637 = vsel %vm5634, %v5629, %v5631
      %v5638 = vsel %vm5634, %v5631, %v5633
      %v5644 = vsel %vm952, %v5612, 0
      %v5647 = vsel %vm952, %v5613, 0
      %v5650 = vsel %vm952, %v5614, 0
      %v5653 = vsel %vm952, %v5615, 0
      %5655 = vmatprep.subr.bf16.mxu0 %v5636
      %5656 = vmatpush1.bf16.msra.mxu0 %v5635
      %5657 = vmatprep.subr.bf16.mxu0 %v5638
      %5658 = vmatpush1.bf16.msra.mxu0 %v5637
      %5659 = vmatprep.subr.bf16.mxu0 0
      %5660 = vmatpush1.bf16.msra.mxu0 0
      %5661 = vmatprep.subr.bf16.mxu0 0
      %5662 = vmatpush1.bf16.msra.mxu0 0
      %5663 = vmatprep.subr.bf16.mxu0 0
      %5664 = vmatpush1.bf16.msra.mxu0 0
      %5665 = vmatprep.subr.bf16.mxu0 0
      %5666 = vmatpush1.bf16.msra.mxu0 0
      %5667 = vmatprep.subr.bf16.mxu0 0
      %5668 = vmatpush1.bf16.msra.mxu0 0
      %5669 = vmatprep.subr.bf16.mxu0 0
      %5670 = vmatpush1.bf16.msra.mxu0 0
      %5671 = vmatprep.subr.bf16.mxu0 0
      %5672 = vmatpush1.bf16.msra.mxu0 0
      %5673 = vmatprep.subr.bf16.mxu0 0
      %5674 = vmatpush1.bf16.msra.mxu0 0
      %5675 = vmatprep.subr.bf16.mxu0 0
      %5676 = vmatpush1.bf16.msra.mxu0 0
      %5677 = vmatprep.subr.bf16.mxu0 0
      %5678 = vmatpush1.bf16.msra.mxu0 0
      %5679 = vmatprep.subr.bf16.mxu0 0
      %5680 = vmatpush1.bf16.msra.mxu0 0
      %5681 = vmatprep.subr.bf16.mxu0 0
      %5682 = vmatpush1.bf16.msra.mxu0 0
      %5683 = vmatprep.subr.bf16.mxu0 0
      %5684 = vmatpush1.bf16.msra.mxu0 0
      %5685 = vmatprep.subr.bf16.mxu0 0
      %5686 = vmatpush1.bf16.msra.mxu0 0
      %5687 = vmatprep.mubr.bf16.mxu0 0
      %5688 = vmatmul.mubr.bf16.gmra.mrb[0].mxu0 %v5644
      %v5689 = vpop.f32.mrb[0].mxu0
      %v5690 = vadd.f32 %v5559, %v5689
      %v5691 = vpop.f32.mrb[0].mxu0
      %v5692 = vadd.f32 %v5559, %v5691
      %v5693 = vpop.f32.mrb[0].mxu0
      %v5694 = vadd.f32 %v5564, %v5693
      %v5695 = vpop.f32.mrb[0].mxu0
      %v5696 = vadd.f32 %v5564, %v5695
      %5697 = vmatprep.mubr.bf16.mxu0 0
      %5698 = vmatmul.mubr.bf16.gmra.mrb[0].mxu0 %v5647
      %v5699 = vpop.f32.mrb[0].mxu0
      %v5700 = vadd.f32 %v5569, %v5699
      %v5701 = vpop.f32.mrb[0].mxu0
      %v5702 = vadd.f32 %v5569, %v5701
      %v5703 = vpop.f32.mrb[0].mxu0
      %v5704 = vadd.f32 %v5574, %v5703
      %v5705 = vpop.f32.mrb[0].mxu0
      %v5706 = vadd.f32 %v5574, %v5705
      %5707 = vmatprep.mubr.bf16.mxu0 0
      %5708 = vmatmul.mubr.bf16.gmra.mrb[0].mxu0 %v5650
      %v5709 = vpop.f32.mrb[0].mxu0
      %v5710 = vadd.f32 %v5579, %v5709
      %v5711 = vpop.f32.mrb[0].mxu0
      %v5712 = vadd.f32 %v5579, %v5711
      %v5713 = vpop.f32.mrb[0].mxu0
      %v5714 = vadd.f32 %v5584, %v5713
      %v5715 = vpop.f32.mrb[0].mxu0
      %v5716 = vadd.f32 %v5584, %v5715
      %5717 = vmatprep.mubr.bf16.mxu0 0
      %5718 = vmatmul.mubr.bf16.gmra.mrb[0].mxu0 %v5653
      %v5719 = vpop.f32.mrb[0].mxu0
      %v5720 = vadd.f32 %v5589, %v5719
      %v5721 = vpop.f32.mrb[0].mxu0
      %v5722 = vadd.f32 %v5589, %v5721
      %v5723 = vpop.f32.mrb[0].mxu0
      %v5724 = vadd.f32 %v5594, %v5723
      %v5725 = vpop.f32.mrb[0].mxu0
      %v5726 = vadd.f32 %v5594, %v5725
      %5727 = vdwg.mxu0
      %v5728 = vmul.f32 %v5690, 0.5
      %v5729 = vmul.f32 %v5692, 0.5
      %v5730 = vmul.f32 %v5694, 0.5
      %v5731 = vmul.f32 %v5696, 0.5
      %v5732 = vmul.f32 %v5700, 0.5
      %v5733 = vmul.f32 %v5702, 0.5
      %v5734 = vmul.f32 %v5704, 0.5
      %v5735 = vmul.f32 %v5706, 0.5
      %v5736 = vmul.f32 %v5710, 0.5
      %v5737 = vmul.f32 %v5712, 0.5
      %v5738 = vmul.f32 %v5714, 0.5
      %v5739 = vmul.f32 %v5716, 0.5
      %v5740 = vmul.f32 %v5720, 0.5
      %v5741 = vmul.f32 %v5722, 0.5
      %v5742 = vmul.f32 %v5724, 0.5
      %v5743 = vmul.f32 %v5726, 0.5
      %v5744 = vmul.f32 %v5690, 0.70710677
      %v5745 = vmul.f32 %v5692, 0.70710677
      %v5746 = vmul.f32 %v5694, 0.70710677
      %v5747 = vmul.f32 %v5696, 0.70710677
      %v5748 = vmul.f32 %v5700, 0.70710677
      %v5749 = vmul.f32 %v5702, 0.70710677
      %v5750 = vmul.f32 %v5704, 0.70710677
      %v5751 = vmul.f32 %v5706, 0.70710677
      %v5752 = vmul.f32 %v5710, 0.70710677
      %v5753 = vmul.f32 %v5712, 0.70710677
      %v5754 = vmul.f32 %v5714, 0.70710677
      %v5755 = vmul.f32 %v5716, 0.70710677
      %v5756 = vmul.f32 %v5720, 0.70710677
      %v5757 = vmul.f32 %v5722, 0.70710677
      %v5758 = vmul.f32 %v5724, 0.70710677
      %v5759 = vmul.f32 %v5726, 0.70710677
      %v5760 = vand.u32 2147483647, %v5744
      %v5761 = vand.u32 2147483647, %v5745
      %v5762 = vand.u32 2147483647, %v5746
      %v5763 = vand.u32 2147483647, %v5747
      %v5764 = vand.u32 2147483647, %v5748
      %v5765 = vand.u32 2147483647, %v5749
      %v5766 = vand.u32 2147483647, %v5750
      %v5767 = vand.u32 2147483647, %v5751
      %v5768 = vand.u32 2147483647, %v5752
      %v5769 = vand.u32 2147483647, %v5753
      %v5770 = vand.u32 2147483647, %v5754
      %v5771 = vand.u32 2147483647, %v5755
      %v5772 = vand.u32 2147483647, %v5756
      %v5773 = vand.u32 2147483647, %v5757
      %v5774 = vand.u32 2147483647, %v5758
      %v5775 = vand.u32 2147483647, %v5759
      %v5776 = vmul.f32 %v5760, 0.3275911
      %v5777 = vmul.f32 %v5761, 0.3275911
      %v5778 = vmul.f32 %v5762, 0.3275911
      %v5779 = vmul.f32 %v5763, 0.3275911
      %v5780 = vmul.f32 %v5764, 0.3275911
      %v5781 = vmul.f32 %v5765, 0.3275911
      %v5782 = vmul.f32 %v5766, 0.3275911
      %v5783 = vmul.f32 %v5767, 0.3275911
      %v5784 = vmul.f32 %v5768, 0.3275911
      %v5785 = vmul.f32 %v5769, 0.3275911
      %v5786 = vmul.f32 %v5770, 0.3275911
      %v5787 = vmul.f32 %v5771, 0.3275911
      %v5788 = vmul.f32 %v5772, 0.3275911
      %v5789 = vmul.f32 %v5773, 0.3275911
      %v5790 = vmul.f32 %v5774, 0.3275911
      %v5791 = vmul.f32 %v5775, 0.3275911
      %v5792 = vadd.f32 %v5776, 1.0
      %v5793 = vadd.f32 %v5777, 1.0
      %v5794 = vadd.f32 %v5778, 1.0
      %v5795 = vadd.f32 %v5779, 1.0
      %v5796 = vadd.f32 %v5780, 1.0
      %v5797 = vadd.f32 %v5781, 1.0
      %v5798 = vadd.f32 %v5782, 1.0
      %v5799 = vadd.f32 %v5783, 1.0
      %v5800 = vadd.f32 %v5784, 1.0
      %v5801 = vadd.f32 %v5785, 1.0
      %v5802 = vadd.f32 %v5786, 1.0
      %v5803 = vadd.f32 %v5787, 1.0
      %v5804 = vadd.f32 %v5788, 1.0
      %v5805 = vadd.f32 %v5789, 1.0
      %v5806 = vadd.f32 %v5790, 1.0
      %v5807 = vadd.f32 %v5791, 1.0
      %v5808 = vrcp.pop %v5792
      %v5809 = vmul.f32 1.0, %v5808
      %v5810 = vrcp.pop %v5793
      %v5811 = vmul.f32 1.0, %v5810
      %v5812 = vrcp.pop %v5794
      %v5813 = vmul.f32 1.0, %v5812
      %v5814 = vrcp.pop %v5795
      %v5815 = vmul.f32 1.0, %v5814
      %v5816 = vrcp.pop %v5796
      %v5817 = vmul.f32 1.0, %v5816
      %v5818 = vrcp.pop %v5797
      %v5819 = vmul.f32 1.0, %v5818
      %v5820 = vrcp.pop %v5798
      %v5821 = vmul.f32 1.0, %v5820
      %v5822 = vrcp.pop %v5799
      %v5823 = vmul.f32 1.0, %v5822
      %v5824 = vrcp.pop %v5800
      %v5825 = vmul.f32 1.0, %v5824
      %v5826 = vrcp.pop %v5801
      %v5827 = vmul.f32 1.0, %v5826
      %v5828 = vrcp.pop %v5802
      %v5829 = vmul.f32 1.0, %v5828
      %v5830 = vrcp.pop %v5803
      %v5831 = vmul.f32 1.0, %v5830
      %v5832 = vrcp.pop %v5804
      %v5833 = vmul.f32 1.0, %v5832
      %v5834 = vrcp.pop %v5805
      %v5835 = vmul.f32 1.0, %v5834
      %v5836 = vrcp.pop %v5806
      %v5837 = vmul.f32 1.0, %v5836
      %v5838 = vrcp.pop %v5807
      %v5839 = vmul.f32 1.0, %v5838
      %v5840 = vmul.f32 %v5809, 1.0614054
      %v5841 = vmul.f32 %v5811, 1.0614054
      %v5842 = vmul.f32 %v5813, 1.0614054
      %v5843 = vmul.f32 %v5815, 1.0614054
      %v5844 = vmul.f32 %v5817, 1.0614054
      %v5845 = vmul.f32 %v5819, 1.0614054
      %v5846 = vmul.f32 %v5821, 1.0614054
      %v5847 = vmul.f32 %v5823, 1.0614054
      %v5848 = vmul.f32 %v5825, 1.0614054
      %v5849 = vmul.f32 %v5827, 1.0614054
      %v5850 = vmul.f32 %v5829, 1.0614054
      %v5851 = vmul.f32 %v5831, 1.0614054
      %v5852 = vmul.f32 %v5833, 1.0614054
      %v5853 = vmul.f32 %v5835, 1.0614054
      %v5854 = vmul.f32 %v5837, 1.0614054
      %v5855 = vmul.f32 %v5839, 1.0614054
      %v5856 = vadd.f32 %v5840, -1.4531521
      %v5857 = vadd.f32 %v5841, -1.4531521
      %v5858 = vadd.f32 %v5842, -1.4531521
      %v5859 = vadd.f32 %v5843, -1.4531521
      %v5860 = vadd.f32 %v5844, -1.4531521
      %v5861 = vadd.f32 %v5845, -1.4531521
      %v5862 = vadd.f32 %v5846, -1.4531521
      %v5863 = vadd.f32 %v5847, -1.4531521
      %v5864 = vadd.f32 %v5848, -1.4531521
      %v5865 = vadd.f32 %v5849, -1.4531521
      %v5866 = vadd.f32 %v5850, -1.4531521
      %v5867 = vadd.f32 %v5851, -1.4531521
      %v5868 = vadd.f32 %v5852, -1.4531521
      %v5869 = vadd.f32 %v5853, -1.4531521
      %v5870 = vadd.f32 %v5854, -1.4531521
      %v5871 = vadd.f32 %v5855, -1.4531521
      %v5872 = vmul.f32 %v5856, %v5809
      %v5873 = vmul.f32 %v5857, %v5811
      %v5874 = vmul.f32 %v5858, %v5813
      %v5875 = vmul.f32 %v5859, %v5815
      %v5876 = vmul.f32 %v5860, %v5817
      %v5877 = vmul.f32 %v5861, %v5819
      %v5878 = vmul.f32 %v5862, %v5821
      %v5879 = vmul.f32 %v5863, %v5823
      %v5880 = vmul.f32 %v5864, %v5825
      %v5881 = vmul.f32 %v5865, %v5827
      %v5882 = vmul.f32 %v5866, %v5829
      %v5883 = vmul.f32 %v5867, %v5831
      %v5884 = vmul.f32 %v5868, %v5833
      %v5885 = vmul.f32 %v5869, %v5835
      %v5886 = vmul.f32 %v5870, %v5837
      %v5887 = vmul.f32 %v5871, %v5839
      %v5888 = vadd.f32 %v5872, 1.4214138
      %v5889 = vadd.f32 %v5873, 1.4214138
      %v5890 = vadd.f32 %v5874, 1.4214138
      %v5891 = vadd.f32 %v5875, 1.4214138
      %v5892 = vadd.f32 %v5876, 1.4214138
      %v5893 = vadd.f32 %v5877, 1.4214138
      %v5894 = vadd.f32 %v5878, 1.4214138
      %v5895 = vadd.f32 %v5879, 1.4214138
      %v5896 = vadd.f32 %v5880, 1.4214138
      %v5897 = vadd.f32 %v5881, 1.4214138
      %v5898 = vadd.f32 %v5882, 1.4214138
      %v5899 = vadd.f32 %v5883, 1.4214138
      %v5900 = vadd.f32 %v5884, 1.4214138
      %v5901 = vadd.f32 %v5885, 1.4214138
      %v5902 = vadd.f32 %v5886, 1.4214138
      %v5903 = vadd.f32 %v5887, 1.4214138
      %v5904 = vmul.f32 %v5888, %v5809
      %v5905 = vmul.f32 %v5889, %v5811
      %v5906 = vmul.f32 %v5890, %v5813
      %v5907 = vmul.f32 %v5891, %v5815
      %v5908 = vmul.f32 %v5892, %v5817
      %v5909 = vmul.f32 %v5893, %v5819
      %v5910 = vmul.f32 %v5894, %v5821
      %v5911 = vmul.f32 %v5895, %v5823
      %v5912 = vmul.f32 %v5896, %v5825
      %v5913 = vmul.f32 %v5897, %v5827
      %v5914 = vmul.f32 %v5898, %v5829
      %v5915 = vmul.f32 %v5899, %v5831
      %v5916 = vmul.f32 %v5900, %v5833
      %v5917 = vmul.f32 %v5901, %v5835
      %v5918 = vmul.f32 %v5902, %v5837
      %v5919 = vmul.f32 %v5903, %v5839
      %v5920 = vadd.f32 %v5904, -0.28449672
      %v5921 = vadd.f32 %v5905, -0.28449672
      %v5922 = vadd.f32 %v5906, -0.28449672
      %v5923 = vadd.f32 %v5907, -0.28449672
      %v5924 = vadd.f32 %v5908, -0.28449672
      %v5925 = vadd.f32 %v5909, -0.28449672
      %v5926 = vadd.f32 %v5910, -0.28449672
      %v5927 = vadd.f32 %v5911, -0.28449672
      %v5928 = vadd.f32 %v5912, -0.28449672
      %v5929 = vadd.f32 %v5913, -0.28449672
      %v5930 = vadd.f32 %v5914, -0.28449672
      %v5931 = vadd.f32 %v5915, -0.28449672
      %v5932 = vadd.f32 %v5916, -0.28449672
      %v5933 = vadd.f32 %v5917, -0.28449672
      %v5934 = vadd.f32 %v5918, -0.28449672
      %v5935 = vadd.f32 %v5919, -0.28449672
      %v5936 = vmul.f32 %v5920, %v5809
      %v5937 = vmul.f32 %v5921, %v5811
      %v5938 = vmul.f32 %v5922, %v5813
      %v5939 = vmul.f32 %v5923, %v5815
      %v5940 = vmul.f32 %v5924, %v5817
      %v5941 = vmul.f32 %v5925, %v5819
      %v5942 = vmul.f32 %v5926, %v5821
      %v5943 = vmul.f32 %v5927, %v5823
      %v5944 = vmul.f32 %v5928, %v5825
      %v5945 = vmul.f32 %v5929, %v5827
      %v5946 = vmul.f32 %v5930, %v5829
      %v5947 = vmul.f32 %v5931, %v5831
      %v5948 = vmul.f32 %v5932, %v5833
      %v5949 = vmul.f32 %v5933, %v5835
      %v5950 = vmul.f32 %v5934, %v5837
      %v5951 = vmul.f32 %v5935, %v5839
      %v5952 = vadd.f32 %v5936, 0.2548296
      %v5953 = vadd.f32 %v5937, 0.2548296
      %v5954 = vadd.f32 %v5938, 0.2548296
      %v5955 = vadd.f32 %v5939, 0.2548296
      %v5956 = vadd.f32 %v5940, 0.2548296
      %v5957 = vadd.f32 %v5941, 0.2548296
      %v5958 = vadd.f32 %v5942, 0.2548296
      %v5959 = vadd.f32 %v5943, 0.2548296
      %v5960 = vadd.f32 %v5944, 0.2548296
      %v5961 = vadd.f32 %v5945, 0.2548296
      %v5962 = vadd.f32 %v5946, 0.2548296
      %v5963 = vadd.f32 %v5947, 0.2548296
      %v5964 = vadd.f32 %v5948, 0.2548296
      %v5965 = vadd.f32 %v5949, 0.2548296
      %v5966 = vadd.f32 %v5950, 0.2548296
      %v5967 = vadd.f32 %v5951, 0.2548296
      %v5968 = vmul.f32 %v5952, %v5809
      %v5969 = vmul.f32 %v5953, %v5811
      %v5970 = vmul.f32 %v5954, %v5813
      %v5971 = vmul.f32 %v5955, %v5815
      %v5972 = vmul.f32 %v5956, %v5817
      %v5973 = vmul.f32 %v5957, %v5819
      %v5974 = vmul.f32 %v5958, %v5821
      %v5975 = vmul.f32 %v5959, %v5823
      %v5976 = vmul.f32 %v5960, %v5825
      %v5977 = vmul.f32 %v5961, %v5827
      %v5978 = vmul.f32 %v5962, %v5829
      %v5979 = vmul.f32 %v5963, %v5831
      %v5980 = vmul.f32 %v5964, %v5833
      %v5981 = vmul.f32 %v5965, %v5835
      %v5982 = vmul.f32 %v5966, %v5837
      %v5983 = vmul.f32 %v5967, %v5839
      %v5984 = vmul.f32 %v5760, %v5760
      %v5985 = vmul.f32 %v5761, %v5761
      %v5986 = vmul.f32 %v5762, %v5762
      %v5987 = vmul.f32 %v5763, %v5763
      %v5988 = vmul.f32 %v5764, %v5764
      %v5989 = vmul.f32 %v5765, %v5765
      %v5990 = vmul.f32 %v5766, %v5766
      %v5991 = vmul.f32 %v5767, %v5767
      %v5992 = vmul.f32 %v5768, %v5768
      %v5993 = vmul.f32 %v5769, %v5769
      %v5994 = vmul.f32 %v5770, %v5770
      %v5995 = vmul.f32 %v5771, %v5771
      %v5996 = vmul.f32 %v5772, %v5772
      %v5997 = vmul.f32 %v5773, %v5773
      %v5998 = vmul.f32 %v5774, %v5774
      %v5999 = vmul.f32 %v5775, %v5775
      %v6000 = vsub.f32 0.0, %v5984
      %v6001 = vsub.f32 0.0, %v5985
      %v6002 = vsub.f32 0.0, %v5986
      %v6003 = vsub.f32 0.0, %v5987
      %v6004 = vsub.f32 0.0, %v5988
      %v6005 = vsub.f32 0.0, %v5989
      %v6006 = vsub.f32 0.0, %v5990
      %v6007 = vsub.f32 0.0, %v5991
      %v6008 = vsub.f32 0.0, %v5992
      %v6009 = vsub.f32 0.0, %v5993
      %v6010 = vsub.f32 0.0, %v5994
      %v6011 = vsub.f32 0.0, %v5995
      %v6012 = vsub.f32 0.0, %v5996
      %v6013 = vsub.f32 0.0, %v5997
      %v6014 = vsub.f32 0.0, %v5998
      %v6015 = vsub.f32 0.0, %v5999
      %v6016 = vmul.f32 %v6000, 1.442695
      %v6017 = vpow.pop %v6016
      %v6018 = vmul.f32 %v6001, 1.442695
      %v6019 = vpow.pop %v6018
      %v6020 = vmul.f32 %v6002, 1.442695
      %v6021 = vpow.pop %v6020
      %v6022 = vmul.f32 %v6003, 1.442695
      %v6023 = vpow.pop %v6022
      %v6024 = vmul.f32 %v6004, 1.442695
      %v6025 = vpow.pop %v6024
      %v6026 = vmul.f32 %v6005, 1.442695
      %v6027 = vpow.pop %v6026
      %v6028 = vmul.f32 %v6006, 1.442695
      %v6029 = vpow.pop %v6028
      %v6030 = vmul.f32 %v6007, 1.442695
      %v6031 = vpow.pop %v6030
      %v6032 = vmul.f32 %v6008, 1.442695
      %v6033 = vpow.pop %v6032
      %v6034 = vmul.f32 %v6009, 1.442695
      %v6035 = vpow.pop %v6034
      %v6036 = vmul.f32 %v6010, 1.442695
      %v6037 = vpow.pop %v6036
      %v6038 = vmul.f32 %v6011, 1.442695
      %v6039 = vpow.pop %v6038
      %v6040 = vmul.f32 %v6012, 1.442695
      %v6041 = vpow.pop %v6040
      %v6042 = vmul.f32 %v6013, 1.442695
      %v6043 = vpow.pop %v6042
      %v6044 = vmul.f32 %v6014, 1.442695
      %v6045 = vpow.pop %v6044
      %v6046 = vmul.f32 %v6015, 1.442695
      %v6047 = vpow.pop %v6046
      %v6048 = vmul.f32 %v5968, %v6017
      %v6049 = vmul.f32 %v5969, %v6019
      %v6050 = vmul.f32 %v5970, %v6021
      %v6051 = vmul.f32 %v5971, %v6023
      %v6052 = vmul.f32 %v5972, %v6025
      %v6053 = vmul.f32 %v5973, %v6027
      %v6054 = vmul.f32 %v5974, %v6029
      %v6055 = vmul.f32 %v5975, %v6031
      %v6056 = vmul.f32 %v5976, %v6033
      %v6057 = vmul.f32 %v5977, %v6035
      %v6058 = vmul.f32 %v5978, %v6037
      %v6059 = vmul.f32 %v5979, %v6039
      %v6060 = vmul.f32 %v5980, %v6041
      %v6061 = vmul.f32 %v5981, %v6043
      %v6062 = vmul.f32 %v5982, %v6045
      %v6063 = vmul.f32 %v5983, %v6047
      %v6064 = vsub.f32 1.0, %v6048
      %v6065 = vsub.f32 1.0, %v6049
      %v6066 = vsub.f32 1.0, %v6050
      %v6067 = vsub.f32 1.0, %v6051
      %v6068 = vsub.f32 1.0, %v6052
      %v6069 = vsub.f32 1.0, %v6053
      %v6070 = vsub.f32 1.0, %v6054
      %v6071 = vsub.f32 1.0, %v6055
      %v6072 = vsub.f32 1.0, %v6056
      %v6073 = vsub.f32 1.0, %v6057
      %v6074 = vsub.f32 1.0, %v6058
      %v6075 = vsub.f32 1.0, %v6059
      %v6076 = vsub.f32 1.0, %v6060
      %v6077 = vsub.f32 1.0, %v6061
      %v6078 = vsub.f32 1.0, %v6062
      %v6079 = vsub.f32 1.0, %v6063
      %vm6080 = vcmp.lt.f32.partialorder %v5744, 0.0
      %vm6081 = vcmp.lt.f32.partialorder %v5745, 0.0
      %vm6082 = vcmp.lt.f32.partialorder %v5746, 0.0
      %vm6083 = vcmp.lt.f32.partialorder %v5747, 0.0
      %vm6084 = vcmp.lt.f32.partialorder %v5748, 0.0
      %vm6085 = vcmp.lt.f32.partialorder %v5749, 0.0
      %vm6086 = vcmp.lt.f32.partialorder %v5750, 0.0
      %vm6087 = vcmp.lt.f32.partialorder %v5751, 0.0
      %vm6088 = vcmp.lt.f32.partialorder %v5752, 0.0
      %vm6089 = vcmp.lt.f32.partialorder %v5753, 0.0
      %vm6090 = vcmp.lt.f32.partialorder %v5754, 0.0
      %vm6091 = vcmp.lt.f32.partialorder %v5755, 0.0
      %vm6092 = vcmp.lt.f32.partialorder %v5756, 0.0
      %vm6093 = vcmp.lt.f32.partialorder %v5757, 0.0
      %vm6094 = vcmp.lt.f32.partialorder %v5758, 0.0
      %vm6095 = vcmp.lt.f32.partialorder %v5759, 0.0
      %v6096 = vsub.f32 0.0, %v6064
      %v6097 = vsub.f32 0.0, %v6065
      %v6098 = vsub.f32 0.0, %v6066
      %v6099 = vsub.f32 0.0, %v6067
      %v6100 = vsub.f32 0.0, %v6068
      %v6101 = vsub.f32 0.0, %v6069
      %v6102 = vsub.f32 0.0, %v6070
      %v6103 = vsub.f32 0.0, %v6071
      %v6104 = vsub.f32 0.0, %v6072
      %v6105 = vsub.f32 0.0, %v6073
      %v6106 = vsub.f32 0.0, %v6074
      %v6107 = vsub.f32 0.0, %v6075
      %v6108 = vsub.f32 0.0, %v6076
      %v6109 = vsub.f32 0.0, %v6077
      %v6110 = vsub.f32 0.0, %v6078
      %v6111 = vsub.f32 0.0, %v6079
      %v6112 = vsel %vm6080, %v6096, %v6064
      %v6113 = vsel %vm6081, %v6097, %v6065
      %v6114 = vsel %vm6082, %v6098, %v6066
      %v6115 = vsel %vm6083, %v6099, %v6067
      %v6116 = vsel %vm6084, %v6100, %v6068
      %v6117 = vsel %vm6085, %v6101, %v6069
      %v6118 = vsel %vm6086, %v6102, %v6070
      %v6119 = vsel %vm6087, %v6103, %v6071
      %v6120 = vsel %vm6088, %v6104, %v6072
      %v6121 = vsel %vm6089, %v6105, %v6073
      %v6122 = vsel %vm6090, %v6106, %v6074
      %v6123 = vsel %vm6091, %v6107, %v6075
      %v6124 = vsel %vm6092, %v6108, %v6076
      %v6125 = vsel %vm6093, %v6109, %v6077
      %v6126 = vsel %vm6094, %v6110, %v6078
      %v6127 = vsel %vm6095, %v6111, %v6079
      %v6128 = vadd.f32 %v6112, 1.0
      %v6129 = vadd.f32 %v6113, 1.0
      %v6130 = vadd.f32 %v6114, 1.0
      %v6131 = vadd.f32 %v6115, 1.0
      %v6132 = vadd.f32 %v6116, 1.0
      %v6133 = vadd.f32 %v6117, 1.0
      %v6134 = vadd.f32 %v6118, 1.0
      %v6135 = vadd.f32 %v6119, 1.0
      %v6136 = vadd.f32 %v6120, 1.0
      %v6137 = vadd.f32 %v6121, 1.0
      %v6138 = vadd.f32 %v6122, 1.0
      %v6139 = vadd.f32 %v6123, 1.0
      %v6140 = vadd.f32 %v6124, 1.0
      %v6141 = vadd.f32 %v6125, 1.0
      %v6142 = vadd.f32 %v6126, 1.0
      %v6143 = vadd.f32 %v6127, 1.0
      %v6144 = vmul.f32 %v5728, %v6128
      %v6145 = vmul.f32 %v5729, %v6129
      %v6146 = vmul.f32 %v5730, %v6130
      %v6147 = vmul.f32 %v5731, %v6131
      %v6148 = vmul.f32 %v5732, %v6132
      %v6149 = vmul.f32 %v5733, %v6133
      %v6150 = vmul.f32 %v5734, %v6134
      %v6151 = vmul.f32 %v5735, %v6135
      %v6152 = vmul.f32 %v5736, %v6136
      %v6153 = vmul.f32 %v5737, %v6137
      %v6154 = vmul.f32 %v5738, %v6138
      %v6155 = vmul.f32 %v5739, %v6139
      %v6156 = vmul.f32 %v5740, %v6140
      %v6157 = vmul.f32 %v5741, %v6141
      %v6158 = vmul.f32 %v5742, %v6142
      %v6159 = vmul.f32 %v5743, %v6143
      %v6160 = vld [vmem:[%s6] sm:$0xf]
      %v6161 = vld [vmem:[%s6 + $0x4] sm:$0xf]
      %v6162 = vld [vmem:[%s6 + $0x8] sm:$0xf]
      %v6163 = vld [vmem:[%s6 + $0xc] sm:$0xf]
      %v6164 = vpack.c.bf16 %v6146, %v6144
      %v6165 = vpack.c.bf16 %v6147, %v6145
      %v6166 = vpack.c.bf16 %v6150, %v6148
      %v6167 = vpack.c.bf16 %v6151, %v6149
      %v6168 = vpack.c.bf16 %v6154, %v6152
      %v6169 = vpack.c.bf16 %v6155, %v6153
      %v6170 = vpack.c.bf16 %v6158, %v6156
      %v6171 = vpack.c.bf16 %v6159, %v6157
      %v6172 = vld [vmem:[%s7] sm:$0xff]
      %v6173 = vld [vmem:[%s7 + $0x8] sm:$0xff]
      %v6174 = vld [vmem:[%s7 + $0x10] sm:$0xff]
      %v6175 = vld [vmem:[%s7 + $0x18] sm:$0xff]
      %6177 = vset.pattern.permute.xlu0 0
      %6178 = vperm.xlu0 %6177, %v6172
      %v6179 = vpop.permute.xlu0 %6178
      %6182 = vset.pattern.permute.xlu0 0
      %6183 = vperm.xlu0 %6182, %v6173
      %v6184 = vpop.permute.xlu0 %6183
      %6187 = vset.pattern.permute.xlu0 0
      %6188 = vperm.xlu0 %6187, %v6174
      %v6189 = vpop.permute.xlu0 %6188
      %6192 = vset.pattern.permute.xlu0 0
      %6193 = vperm.xlu0 %6192, %v6175
      %v6194 = vpop.permute.xlu0 %6193
      %v6200 = vunpack.c.l.b16 %v6160
      %v6201 = vunpack.c.l.b16 %v6161
      %v6202 = vunpack.c.l.b16 %v6162
      %v6203 = vunpack.c.l.b16 %v6163
      %v6204 = vpack.c.b16 %v6201, %v6200
      %v6205 = vpack.c.b16 %v6203, %v6202
      %v6207 = vsel %vm758, %v6204, 0
      %v6210 = vsel %vm758, %v6205, 0
      %6212 = vmatprep.subr.bf16.mxu0 %v6165
      %6213 = vmatpush1.bf16.msra.mxu0 %v6164
      %6214 = vmatprep.subr.bf16.mxu0 %v6167
      %6215 = vmatpush1.bf16.msra.mxu0 %v6166
      %6216 = vmatprep.subr.bf16.mxu0 %v6169
      %6217 = vmatpush1.bf16.msra.mxu0 %v6168
      %6218 = vmatprep.subr.bf16.mxu0 %v6171
      %6219 = vmatpush1.bf16.msra.mxu0 %v6170
      %6220 = vmatprep.subr.bf16.mxu0 0
      %6221 = vmatpush1.bf16.msra.mxu0 0
      %6222 = vmatprep.subr.bf16.mxu0 0
      %6223 = vmatpush1.bf16.msra.mxu0 0
      %6224 = vmatprep.subr.bf16.mxu0 0
      %6225 = vmatpush1.bf16.msra.mxu0 0
      %6226 = vmatprep.subr.bf16.mxu0 0
      %6227 = vmatpush1.bf16.msra.mxu0 0
      %6228 = vmatprep.subr.bf16.mxu0 0
      %6229 = vmatpush1.bf16.msra.mxu0 0
      %6230 = vmatprep.subr.bf16.mxu0 0
      %6231 = vmatpush1.bf16.msra.mxu0 0
      %6232 = vmatprep.subr.bf16.mxu0 0
      %6233 = vmatpush1.bf16.msra.mxu0 0
      %6234 = vmatprep.subr.bf16.mxu0 0
      %6235 = vmatpush1.bf16.msra.mxu0 0
      %6236 = vmatprep.subr.bf16.mxu0 0
      %6237 = vmatpush1.bf16.msra.mxu0 0
      %6238 = vmatprep.subr.bf16.mxu0 0
      %6239 = vmatpush1.bf16.msra.mxu0 0
      %6240 = vmatprep.subr.bf16.mxu0 0
      %6241 = vmatpush1.bf16.msra.mxu0 0
      %6242 = vmatprep.subr.bf16.mxu0 0
      %6243 = vmatpush1.bf16.msra.mxu0 0
      %6244 = vmatprep.mubr.bf16.mxu0 0
      %6245 = vmatmul.mubr.bf16.gmra.mrb[0].mxu0 %v6207
      %v6246 = vpop.f32.mrb[0].mxu0
      %v6247 = vadd.f32 %v6179, %v6246
      %v6248 = vpop.f32.mrb[0].mxu0
      %v6249 = vadd.f32 %v6179, %v6248
      %v6250 = vpop.f32.mrb[0].mxu0
      %v6251 = vadd.f32 %v6184, %v6250
      %v6252 = vpop.f32.mrb[0].mxu0
      %v6253 = vadd.f32 %v6184, %v6252
      %6254 = vmatprep.mubr.bf16.mxu0 0
      %6255 = vmatmul.mubr.bf16.gmra.mrb[0].mxu0 %v6210
      %v6256 = vpop.f32.mrb[0].mxu0
      %v6257 = vadd.f32 %v6189, %v6256
      %v6258 = vpop.f32.mrb[0].mxu0
      %v6259 = vadd.f32 %v6189, %v6258
      %v6260 = vpop.f32.mrb[0].mxu0
      %v6261 = vadd.f32 %v6194, %v6260
      %v6262 = vpop.f32.mrb[0].mxu0
      %v6263 = vadd.f32 %v6194, %v6262
      %6264 = vdwg.mxu0
      %v6265 = vld [vmem:[%s300] sm:$0xff]
      %v6266 = vld [vmem:[%s300 + $0x8] sm:$0xff]
      %v6267 = vld [vmem:[%s300 + $0x10] sm:$0xff]
      %v6268 = vld [vmem:[%s300 + $0x18] sm:$0xff]
      %v6269 = vld [vmem:[%s300 + $0x20] sm:$0xff]
      %v6270 = vld [vmem:[%s300 + $0x28] sm:$0xff]
      %v6271 = vld [vmem:[%s300 + $0x30] sm:$0xff]
      %v6272 = vld [vmem:[%s300 + $0x38] sm:$0xff]
      %v6273 = vadd.f32 %v6265, %v6247
      %v6274 = vadd.f32 %v6266, %v6249
      %v6275 = vadd.f32 %v6267, %v6251
      %v6276 = vadd.f32 %v6268, %v6253
      %v6277 = vadd.f32 %v6269, %v6257
      %v6278 = vadd.f32 %v6270, %v6259
      %v6279 = vadd.f32 %v6271, %v6261
      %v6280 = vadd.f32 %v6272, %v6263
      %6281 = vst [vmem:[%s305] sm:$0xff] %v6273
      %6282 = vst [vmem:[%s305 + $0x8] sm:$0xff] %v6274
      %6283 = vst [vmem:[%s305 + $0x10] sm:$0xff] %v6275
      %6284 = vst [vmem:[%s305 + $0x18] sm:$0xff] %v6276
      %6285 = vst [vmem:[%s305 + $0x20] sm:$0xff] %v6277
      %6286 = vst [vmem:[%s305 + $0x28] sm:$0xff] %v6278
      %6287 = vst [vmem:[%s305 + $0x30] sm:$0xff] %v6279
      %6288 = vst [vmem:[%s305 + $0x38] sm:$0xff] %v6280
      %p6289 = scmp.lt.s32.totalorder %s19, 1
      %s6290 = scalar_select %p6289, %s19, 1
      %s6291 = smul.addr %s6290, 8
      %s6292 = smul.addr %s6291, 8
      %s6293 = scalar_lea.vmem %s8, %s6292
      // Predicated region
      $region53: #{convnext_block.1} parent=51 // pred_check
        %p6294 = pneg %p210
      $region54: #{convnext_block.1} parent=51 // pred_check_branch
        %6296 = sbr.rel (%p6294) target = $region56
      $region55: #{convnext_block.1} parent=51 // pred_region
        _
      $region56: #{convnext_block.1} parent=51 // pred_fallthru
        _
    $region52: #{convnext_block.1} parent=5 // pred_fallthru
      _
    %p6297 = scmp.le.s32.totalorder 2, %s14
    // Predicated region
    $region57: #{convnext_block.1} parent=5 // pred_check
      %p6298 = pneg %p6297
    $region58: #{convnext_block.1} parent=5 // pred_check_branch
      %6300 = sbr.rel (%p6298) target = $region60
    $region59: #{convnext_block.1} parent=5 // pred_region
      %s6301 = ssub.s32 %s14, 2
      // Predicated region
      $region61: #{convnext_block.1} parent=59 // pred_check
        %p6302 = pneg %p216
      $region62: #{convnext_block.1} parent=59 // pred_check_branch
        %6304 = sbr.rel (%p6302) target = $region64
      $region63: #{convnext_block.1} parent=59 // pred_region
        %p6305 = scmp.lt.s32.totalorder %s20, 1
        %s6306 = scalar_select %p6305, %s20, 1
        %s6307 = smul.addr %s6306, 8
        %s6308 = smul.addr %s6307, 8
        %s6309 = scalar_lea.vmem %s8, %s6308
      $region64: #{convnext_block.1} parent=59 // pred_fallthru
        _
    $region60: #{convnext_block.1} parent=5 // pred_fallthru
      _
  $region6: #{convnext_block.1} parent=0 // loop_footer
    %s18 = sadd.s32 1, %s14
  $region7: #{convnext_block.1} parent=0 // loop_footer_branch
    %13 = sbr.rel target = $region3
  $region8: #{convnext_block.1} parent=0 // loop_exit
    _

</llo_original>
